<compile_context>
chip_gen: v7x
topology: tpu7x:2x2x1
jax: 0.10.0
libtpu: 0.0.40
codegen_flags: <defaults>
</compile_context>

<pallas_src>
import jax
import jax.numpy as jnp
import numpy as np
from jax.experimental import pallas as pl
from jax.experimental.pallas import tpu as pltpu

# ----------------------------- problem geometry ----------------------------- #
N, H, W = 2, 16, 16                  # batch, spatial (toy ACDC-style size)
HW = H * W                           # 256
NHW = N * HW                         # 512 lanes (multiple of 128)
C_IN, C_FEAT, C_LAT, C_OUT = 1, 8, 4, 4

# MXU operand dtype. float32 keeps the self-check tight at this toy size; set to
# jnp.bfloat16 on v6e/v7x at real image sizes (accumulation, bias/ReLU and the
# MSE stay float32 either way).
MXU_DTYPE = jnp.float32

_TAPS = tuple((dy, dx) for dy in range(3) for dx in range(3))   # t = dy*3 + dx


def _build_tap_masks():
    """(9, 1, NHW) float32 validity masks (1 = source pixel inside the image).

    Flat lane index j = n*HW + y*W + x. Tap (dy, dx) reads source (y+dy-1, x+dx-1);
    out-of-image sources are zeroed (zero padding), which also kills any value a
    lane roll may have wrapped in from a neighbouring batch element.
    """
    j = np.arange(NHW)
    y = (j % HW) // W
    x = j % W
    masks = np.zeros((9, 1, NHW), np.float32)
    for t, (dy, dx) in enumerate(_TAPS):
        ys, xs = y + dy - 1, x + dx - 1
        masks[t, 0, :] = ((ys >= 0) & (ys < H) & (xs >= 0) & (xs < W)).astype(np.float32)
    return masks


_TAP_MASKS = _build_tap_masks()


# ------------------------------ fused kernel -------------------------------- #

def _conv3x3_flat(act, w_ref, b, mask_ref, *, relu):
    """3x3, stride 1, zero-pad 1 conv on channel-major flattened activations.

    act      : (Cin, NHW) float32 value, flat lane index j = n*HW + y*W + x
    w_ref    : (9, Cout, Cin) VMEM ref, tap-major (t = dy*3 + dx)
    b        : (Cout, 1) float32 value
    mask_ref : (9, 1, NHW) VMEM ref of 0/1 tap-validity masks
    """
    cout, cin = w_ref.shape[1], w_ref.shape[2]
    acc = jnp.zeros((cout, NHW), jnp.float32)
    for t, (dy, dx) in enumerate(_TAPS):
        s = (dy - 1) * W + (dx - 1)          # out[j] reads in[j + s]
        src = act if s == 0 else pltpu.roll(act, shift=(-s) % NHW, axis=1)
        tap = src if (dy == 1 and dx == 1) else src * mask_ref[t]
        w_t = w_ref[t]                       # (Cout, Cin)
        if cin == 1:
            # Degenerate K=1 contraction: broadcast multiply on the VPU instead
            # of a near-empty MXU matmul.
            acc = acc + w_t * tap
        else:
            acc = acc + jnp.dot(w_t.astype(MXU_DTYPE), tap.astype(MXU_DTYPE),
                                preferred_element_type=jnp.float32)
    acc = acc + b
    if relu:
        acc = jnp.maximum(acc, 0.0)
    return acc


def _frankenstein_kernel(x_ref, mask_ref, w1_ref, b1_ref, we_ref, be_ref,
                         wd_ref, bd_ref, w2_ref, b2_ref,
                         logits_ref, mse_ref):
    x = x_ref[...].astype(jnp.float32)                               # (1, NHW)

    # seg_model stage 1: Conv(1->8) + ReLU
    feat = _conv3x3_flat(x, w1_ref, b1_ref[...], mask_ref, relu=True)

    # forward_pre_hook: denoising-AE transformation (enc + dec), VMEM-resident.
    h_lat = _conv3x3_flat(feat, we_ref, be_ref[...], mask_ref, relu=True)
    feat_dn = _conv3x3_flat(h_lat, wd_ref, bd_ref[...], mask_ref, relu=False)

    # training_data['mse'] = mse_loss(AE(x_in), x_in[:1], 'mean'), fused in-kernel.
    feat0 = feat[:, :HW]                                             # batch element 0
    sse = jnp.float32(0.0)
    for n in range(N):
        d = feat_dn[:, n * HW:(n + 1) * HW] - feat0
        sse = sse + jnp.sum(d * d)
    mse_ref[...] = jnp.full((1, 1), sse / jnp.float32(N * C_FEAT * HW), jnp.float32)

    # seg_model stage 2 consumes the denoised features: Conv(8->4).
    logits = _conv3x3_flat(feat_dn, w2_ref, b2_ref[...], mask_ref, relu=False)
    logits_ref[...] = logits.astype(logits_ref.dtype)                # lane-dense (4, 512)


# ------------------------------ JAX wrapper --------------------------------- #

def _prep_weight(wt):
    """(Cout, Cin, 3, 3) OIHW -> (9, Cout, Cin), tap-major (t = dy*3 + dx)."""
    cout, cin = wt.shape[0], wt.shape[1]
    return jnp.transpose(wt, (2, 3, 0, 1)).reshape(9, cout, cin)


def _prep_bias(bt):
    return bt.reshape(-1, 1).astype(jnp.float32)


def frankenstein_forward(params, x):
    """Frankenstein.forward(x) == seg_model(x) with the train-transformation
    forward_pre_hook attached before seg_conv2. Returns (seg_logits, mse)."""
    assert x.shape == (N, C_IN, H, W)
    w1, b1 = params["seg_conv1"]
    we, be = params["ae_enc"]
    wd, bd = params["ae_dec"]
    w2, b2 = params["seg_conv2"]

    # (N, 1, H, W) -> (1, N*H*W); flat lane index j = n*HW + y*W + x.
    x_flat = x.reshape(1, NHW)

    flops = sum(2 * co * ci * 9 * NHW for co, ci in
                ((C_FEAT, C_IN), (C_LAT, C_FEAT), (C_FEAT, C_LAT), (C_OUT, C_FEAT)))
    n_in_elems = (x_flat.size + _TAP_MASKS.size
                  + sum(int(a.size) for a in (w1, b1, we, be, wd, bd, w2, b2)))
    bytes_accessed = 4 * (n_in_elems + C_OUT * NHW + 1)

    logits_flat, mse = pl.pallas_call(
        _frankenstein_kernel,
        out_shape=(
            jax.ShapeDtypeStruct((C_OUT, NHW), jnp.float32),   # lane-dense logits
            jax.ShapeDtypeStruct((1, 1), jnp.float32),         # fused mse scalar
        ),
        in_specs=[pl.BlockSpec(memory_space=pltpu.MemorySpace.VMEM)] * 10,
        out_specs=(
            pl.BlockSpec(memory_space=pltpu.MemorySpace.VMEM),
            pl.BlockSpec(memory_space=pltpu.MemorySpace.VMEM),
        ),
        cost_estimate=pl.CostEstimate(flops=int(flops), transcendentals=0,
                                      bytes_accessed=int(bytes_accessed)),
    )(x_flat, _TAP_MASKS,
      _prep_weight(w1), _prep_bias(b1),
      _prep_weight(we), _prep_bias(be),
      _prep_weight(wd), _prep_bias(bd),
      _prep_weight(w2), _prep_bias(b2))

    # (Cout, N*HW) -> (N, Cout, H, W): layout plumbing only (cheap XLA reshape).
    logits = logits_flat.reshape(C_OUT, N, H, W).transpose(1, 0, 2, 3)
    return logits, mse[0, 0]


def init_params(key):
    ks = jax.random.split(key, 4)

    def conv_init(k, cout, cin):
        fan_in = cin * 9
        w = jax.random.normal(k, (cout, cin, 3, 3), jnp.float32) * (2.0 / fan_in) ** 0.5
        b = jnp.zeros((cout,), jnp.float32)
        return w, b

    return {
        "seg_conv1": conv_init(ks[0], C_FEAT, C_IN),   # seg_model layer 1
        "seg_conv2": conv_init(ks[1], C_OUT, C_FEAT),  # seg_model layer 2 (hooked)
        "ae_enc": conv_init(ks[2], C_LAT, C_FEAT),     # transformation (AE) encoder
        "ae_dec": conv_init(ks[3], C_FEAT, C_LAT),     # transformation (AE) decoder
    }


# ------------------------------- reference ---------------------------------- #

def _conv_ref(x, w, b, relu):
    y = jax.lax.conv_general_dilated(
        x, w, window_strides=(1, 1), padding=((1, 1), (1, 1)),
        dimension_numbers=("NCHW", "OIHW", "NCHW"))
    y = y + b.reshape(1, -1, 1, 1)
    return jnp.maximum(y, 0.0) if relu else y


def _forward_ref(params, x):
    w1, b1 = params["seg_conv1"]
    feat = _conv_ref(x, w1, b1, True)
    we, be = params["ae_enc"]
    wd, bd = params["ae_dec"]
    h = _conv_ref(feat, we, be, True)
    feat_d = _conv_ref(h, wd, bd, False)
    mse = jnp.mean((feat_d - feat[:1]) ** 2)
    w2, b2 = params["seg_conv2"]
    return _conv_ref(feat_d, w2, b2, False), mse


# ---------------------------------- main ------------------------------------ #

if __name__ == "__main__":
    key = jax.random.PRNGKey(0)
    pkey, xkey = jax.random.split(key)
    params = init_params(pkey)

    # ACDC-style input: batch=2, channels=1, spatial=16x16 (small synthetic size)
    x = jax.random.normal(xkey, (N, C_IN, H, W), jnp.float32)

    logits, mse = jax.jit(frankenstein_forward)(params, x)
    jax.block_until_ready((logits, mse))

    ref_logits, ref_mse = _forward_ref(params, x)
    tol = 1e-1 if MXU_DTYPE == jnp.bfloat16 else 2e-3
    assert logits.shape == (N, C_OUT, H, W), logits.shape
    assert float(jnp.max(jnp.abs(logits - ref_logits))) < tol
    assert abs(float(mse) - float(ref_mse)) < tol

    print("KERNEL_OK")
</pallas_src>

<mosaic_0001>
module attributes {stable_mosaic.version = 11 : i64} {
  func.func @_frankenstein_kernel(%arg0: memref<1x512xf32, #tpu.memory_space<vmem>>, %arg1: memref<9x1x512xf32, #tpu.memory_space<vmem>>, %arg2: memref<9x8x1xf32, #tpu.memory_space<vmem>>, %arg3: memref<8x1xf32, #tpu.memory_space<vmem>>, %arg4: memref<9x4x8xf32, #tpu.memory_space<vmem>>, %arg5: memref<4x1xf32, #tpu.memory_space<vmem>>, %arg6: memref<9x8x4xf32, #tpu.memory_space<vmem>>, %arg7: memref<8x1xf32, #tpu.memory_space<vmem>>, %arg8: memref<9x4x8xf32, #tpu.memory_space<vmem>>, %arg9: memref<4x1xf32, #tpu.memory_space<vmem>>, %arg10: memref<4x512xf32, #tpu.memory_space<vmem>>, %arg11: memref<1x1xf32, #tpu.memory_space<vmem>>) attributes {dimension_semantics = [], scalar_prefetch = 0 : i64, scratch_operands = 0 : i64, tpu.core_type = #tpu.core_type<tc>} {
    %c0 = arith.constant 0 : index
    %c0_0 = arith.constant 0 : index
    %0 = vector.load %arg0[%c0, %c0_0] : memref<1x512xf32, #tpu.memory_space<vmem>>, vector<1x512xf32>
    %c0_1 = arith.constant 0 : index
    %c0_2 = arith.constant 0 : index
    %1 = vector.load %arg3[%c0_1, %c0_2] : memref<8x1xf32, #tpu.memory_space<vmem>>, vector<8x1xf32>
    %cst = arith.constant 0.000000e+00 : f32
    %2 = vector.broadcast %cst : f32 to vector<8x512xf32>
    %c17_i32 = arith.constant 17 : i32
    %3 = tpu.dynamic_rotate %0 by %c17_i32 dim 1 : vector<1x512xf32>, i32 -> vector<1x512xf32>
    %c0_3 = arith.constant 0 : index
    %c0_4 = arith.constant 0 : index
    %c0_5 = arith.constant 0 : index
    %4 = vector.load %arg1[%c0_3, %c0_4, %c0_5] : memref<9x1x512xf32, #tpu.memory_space<vmem>>, vector<1x1x512xf32>
    %5 = vector.shape_cast %4 : vector<1x1x512xf32> to vector<1x512xf32>
    %6 = arith.mulf %3, %5 : vector<1x512xf32>
    %c0_6 = arith.constant 0 : index
    %c0_7 = arith.constant 0 : index
    %c0_8 = arith.constant 0 : index
    %7 = vector.load %arg2[%c0_6, %c0_7, %c0_8] : memref<9x8x1xf32, #tpu.memory_space<vmem>>, vector<1x8x1xf32>
    %8 = vector.shape_cast %7 : vector<1x8x1xf32> to vector<8x1xf32>
    %9 = vector.broadcast %8 : vector<8x1xf32> to vector<8x512xf32>
    %10 = vector.broadcast %6 : vector<1x512xf32> to vector<8x512xf32>
    %11 = arith.mulf %9, %10 : vector<8x512xf32>
    %12 = arith.addf %2, %11 : vector<8x512xf32>
    %c16_i32 = arith.constant 16 : i32
    %13 = tpu.dynamic_rotate %0 by %c16_i32 dim 1 : vector<1x512xf32>, i32 -> vector<1x512xf32>
    %c1 = arith.constant 1 : index
    %c0_9 = arith.constant 0 : index
    %c0_10 = arith.constant 0 : index
    %14 = vector.load %arg1[%c1, %c0_9, %c0_10] : memref<9x1x512xf32, #tpu.memory_space<vmem>>, vector<1x1x512xf32>
    %15 = vector.shape_cast %14 : vector<1x1x512xf32> to vector<1x512xf32>
    %16 = arith.mulf %13, %15 : vector<1x512xf32>
    %c1_11 = arith.constant 1 : index
    %c0_12 = arith.constant 0 : index
    %c0_13 = arith.constant 0 : index
    %17 = vector.load %arg2[%c1_11, %c0_12, %c0_13] : memref<9x8x1xf32, #tpu.memory_space<vmem>>, vector<1x8x1xf32>
    %18 = vector.shape_cast %17 : vector<1x8x1xf32> to vector<8x1xf32>
    %19 = vector.broadcast %18 : vector<8x1xf32> to vector<8x512xf32>
    %20 = vector.broadcast %16 : vector<1x512xf32> to vector<8x512xf32>
    %21 = arith.mulf %19, %20 : vector<8x512xf32>
    %22 = arith.addf %12, %21 : vector<8x512xf32>
    %c15_i32 = arith.constant 15 : i32
    %23 = tpu.dynamic_rotate %0 by %c15_i32 dim 1 : vector<1x512xf32>, i32 -> vector<1x512xf32>
    %c2 = arith.constant 2 : index
    %c0_14 = arith.constant 0 : index
    %c0_15 = arith.constant 0 : index
    %24 = vector.load %arg1[%c2, %c0_14, %c0_15] : memref<9x1x512xf32, #tpu.memory_space<vmem>>, vector<1x1x512xf32>
    %25 = vector.shape_cast %24 : vector<1x1x512xf32> to vector<1x512xf32>
    %26 = arith.mulf %23, %25 : vector<1x512xf32>
    %c2_16 = arith.constant 2 : index
    %c0_17 = arith.constant 0 : index
    %c0_18 = arith.constant 0 : index
    %27 = vector.load %arg2[%c2_16, %c0_17, %c0_18] : memref<9x8x1xf32, #tpu.memory_space<vmem>>, vector<1x8x1xf32>
    %28 = vector.shape_cast %27 : vector<1x8x1xf32> to vector<8x1xf32>
    %29 = vector.broadcast %28 : vector<8x1xf32> to vector<8x512xf32>
    %30 = vector.broadcast %26 : vector<1x512xf32> to vector<8x512xf32>
    %31 = arith.mulf %29, %30 : vector<8x512xf32>
    %32 = arith.addf %22, %31 : vector<8x512xf32>
    %c1_i32 = arith.constant 1 : i32
    %33 = tpu.dynamic_rotate %0 by %c1_i32 dim 1 : vector<1x512xf32>, i32 -> vector<1x512xf32>
    %c3 = arith.constant 3 : index
    %c0_19 = arith.constant 0 : index
    %c0_20 = arith.constant 0 : index
    %34 = vector.load %arg1[%c3, %c0_19, %c0_20] : memref<9x1x512xf32, #tpu.memory_space<vmem>>, vector<1x1x512xf32>
    %35 = vector.shape_cast %34 : vector<1x1x512xf32> to vector<1x512xf32>
    %36 = arith.mulf %33, %35 : vector<1x512xf32>
    %c3_21 = arith.constant 3 : index
    %c0_22 = arith.constant 0 : index
    %c0_23 = arith.constant 0 : index
    %37 = vector.load %arg2[%c3_21, %c0_22, %c0_23] : memref<9x8x1xf32, #tpu.memory_space<vmem>>, vector<1x8x1xf32>
    %38 = vector.shape_cast %37 : vector<1x8x1xf32> to vector<8x1xf32>
    %39 = vector.broadcast %38 : vector<8x1xf32> to vector<8x512xf32>
    %40 = vector.broadcast %36 : vector<1x512xf32> to vector<8x512xf32>
    %41 = arith.mulf %39, %40 : vector<8x512xf32>
    %42 = arith.addf %32, %41 : vector<8x512xf32>
    %c4 = arith.constant 4 : index
    %c0_24 = arith.constant 0 : index
    %c0_25 = arith.constant 0 : index
    %43 = vector.load %arg2[%c4, %c0_24, %c0_25] : memref<9x8x1xf32, #tpu.memory_space<vmem>>, vector<1x8x1xf32>
    %44 = vector.shape_cast %43 : vector<1x8x1xf32> to vector<8x1xf32>
    %45 = vector.broadcast %44 : vector<8x1xf32> to vector<8x512xf32>
    %46 = vector.broadcast %0 : vector<1x512xf32> to vector<8x512xf32>
    %47 = arith.mulf %45, %46 : vector<8x512xf32>
    %48 = arith.addf %42, %47 : vector<8x512xf32>
    %c511_i32 = arith.constant 511 : i32
    %49 = tpu.dynamic_rotate %0 by %c511_i32 dim 1 : vector<1x512xf32>, i32 -> vector<1x512xf32>
    %c5 = arith.constant 5 : index
    %c0_26 = arith.constant 0 : index
    %c0_27 = arith.constant 0 : index
    %50 = vector.load %arg1[%c5, %c0_26, %c0_27] : memref<9x1x512xf32, #tpu.memory_space<vmem>>, vector<1x1x512xf32>
    %51 = vector.shape_cast %50 : vector<1x1x512xf32> to vector<1x512xf32>
    %52 = arith.mulf %49, %51 : vector<1x512xf32>
    %c5_28 = arith.constant 5 : index
    %c0_29 = arith.constant 0 : index
    %c0_30 = arith.constant 0 : index
    %53 = vector.load %arg2[%c5_28, %c0_29, %c0_30] : memref<9x8x1xf32, #tpu.memory_space<vmem>>, vector<1x8x1xf32>
    %54 = vector.shape_cast %53 : vector<1x8x1xf32> to vector<8x1xf32>
    %55 = vector.broadcast %54 : vector<8x1xf32> to vector<8x512xf32>
    %56 = vector.broadcast %52 : vector<1x512xf32> to vector<8x512xf32>
    %57 = arith.mulf %55, %56 : vector<8x512xf32>
    %58 = arith.addf %48, %57 : vector<8x512xf32>
    %c497_i32 = arith.constant 497 : i32
    %59 = tpu.dynamic_rotate %0 by %c497_i32 dim 1 : vector<1x512xf32>, i32 -> vector<1x512xf32>
    %c6 = arith.constant 6 : index
    %c0_31 = arith.constant 0 : index
    %c0_32 = arith.constant 0 : index
    %60 = vector.load %arg1[%c6, %c0_31, %c0_32] : memref<9x1x512xf32, #tpu.memory_space<vmem>>, vector<1x1x512xf32>
    %61 = vector.shape_cast %60 : vector<1x1x512xf32> to vector<1x512xf32>
    %62 = arith.mulf %59, %61 : vector<1x512xf32>
    %c6_33 = arith.constant 6 : index
    %c0_34 = arith.constant 0 : index
    %c0_35 = arith.constant 0 : index
    %63 = vector.load %arg2[%c6_33, %c0_34, %c0_35] : memref<9x8x1xf32, #tpu.memory_space<vmem>>, vector<1x8x1xf32>
    %64 = vector.shape_cast %63 : vector<1x8x1xf32> to vector<8x1xf32>
    %65 = vector.broadcast %64 : vector<8x1xf32> to vector<8x512xf32>
    %66 = vector.broadcast %62 : vector<1x512xf32> to vector<8x512xf32>
    %67 = arith.mulf %65, %66 : vector<8x512xf32>
    %68 = arith.addf %58, %67 : vector<8x512xf32>
    %c496_i32 = arith.constant 496 : i32
    %69 = tpu.dynamic_rotate %0 by %c496_i32 dim 1 : vector<1x512xf32>, i32 -> vector<1x512xf32>
    %c7 = arith.constant 7 : index
    %c0_36 = arith.constant 0 : index
    %c0_37 = arith.constant 0 : index
    %70 = vector.load %arg1[%c7, %c0_36, %c0_37] : memref<9x1x512xf32, #tpu.memory_space<vmem>>, vector<1x1x512xf32>
    %71 = vector.shape_cast %70 : vector<1x1x512xf32> to vector<1x512xf32>
    %72 = arith.mulf %69, %71 : vector<1x512xf32>
    %c7_38 = arith.constant 7 : index
    %c0_39 = arith.constant 0 : index
    %c0_40 = arith.constant 0 : index
    %73 = vector.load %arg2[%c7_38, %c0_39, %c0_40] : memref<9x8x1xf32, #tpu.memory_space<vmem>>, vector<1x8x1xf32>
    %74 = vector.shape_cast %73 : vector<1x8x1xf32> to vector<8x1xf32>
    %75 = vector.broadcast %74 : vector<8x1xf32> to vector<8x512xf32>
    %76 = vector.broadcast %72 : vector<1x512xf32> to vector<8x512xf32>
    %77 = arith.mulf %75, %76 : vector<8x512xf32>
    %78 = arith.addf %68, %77 : vector<8x512xf32>
    %c495_i32 = arith.constant 495 : i32
    %79 = tpu.dynamic_rotate %0 by %c495_i32 dim 1 : vector<1x512xf32>, i32 -> vector<1x512xf32>
    %c8 = arith.constant 8 : index
    %c0_41 = arith.constant 0 : index
    %c0_42 = arith.constant 0 : index
    %80 = vector.load %arg1[%c8, %c0_41, %c0_42] : memref<9x1x512xf32, #tpu.memory_space<vmem>>, vector<1x1x512xf32>
    %81 = vector.shape_cast %80 : vector<1x1x512xf32> to vector<1x512xf32>
    %82 = arith.mulf %79, %81 : vector<1x512xf32>
    %c8_43 = arith.constant 8 : index
    %c0_44 = arith.constant 0 : index
    %c0_45 = arith.constant 0 : index
    %83 = vector.load %arg2[%c8_43, %c0_44, %c0_45] : memref<9x8x1xf32, #tpu.memory_space<vmem>>, vector<1x8x1xf32>
    %84 = vector.shape_cast %83 : vector<1x8x1xf32> to vector<8x1xf32>
    %85 = vector.broadcast %84 : vector<8x1xf32> to vector<8x512xf32>
    %86 = vector.broadcast %82 : vector<1x512xf32> to vector<8x512xf32>
    %87 = arith.mulf %85, %86 : vector<8x512xf32>
    %88 = arith.addf %78, %87 : vector<8x512xf32>
    %89 = vector.broadcast %1 : vector<8x1xf32> to vector<8x512xf32>
    %90 = arith.addf %88, %89 : vector<8x512xf32>
    %cst_46 = arith.constant 0.000000e+00 : f32
    %91 = vector.broadcast %cst_46 : f32 to vector<8x512xf32>
    %92 = arith.maximumf %90, %91 : vector<8x512xf32>
    %c0_47 = arith.constant 0 : index
    %c0_48 = arith.constant 0 : index
    %93 = vector.load %arg5[%c0_47, %c0_48] : memref<4x1xf32, #tpu.memory_space<vmem>>, vector<4x1xf32>
    %cst_49 = arith.constant 0.000000e+00 : f32
    %94 = vector.broadcast %cst_49 : f32 to vector<4x512xf32>
    %c17_i32_50 = arith.constant 17 : i32
    %95 = tpu.dynamic_rotate %92 by %c17_i32_50 dim 1 : vector<8x512xf32>, i32 -> vector<8x512xf32>
    %c0_51 = arith.constant 0 : index
    %c0_52 = arith.constant 0 : index
    %c0_53 = arith.constant 0 : index
    %96 = vector.load %arg1[%c0_51, %c0_52, %c0_53] : memref<9x1x512xf32, #tpu.memory_space<vmem>>, vector<1x1x512xf32>
    %97 = vector.shape_cast %96 : vector<1x1x512xf32> to vector<1x512xf32>
    %98 = vector.broadcast %97 : vector<1x512xf32> to vector<8x512xf32>
    %99 = arith.mulf %95, %98 : vector<8x512xf32>
    %c0_54 = arith.constant 0 : index
    %c0_55 = arith.constant 0 : index
    %c0_56 = arith.constant 0 : index
    %100 = vector.load %arg4[%c0_54, %c0_55, %c0_56] : memref<9x4x8xf32, #tpu.memory_space<vmem>>, vector<1x4x8xf32>
    %101 = vector.shape_cast %100 : vector<1x4x8xf32> to vector<4x8xf32>
    %cst_57 = arith.constant dense<0.000000e+00> : vector<4x512xf32>
    %102 = tpu.matmul %101, %99, %cst_57 {dimension_numbers = #tpu.dot_dimension_numbers<[1], [0], [0], [1], [0, 0, 1, 1], [], []>} : vector<4x8xf32>, vector<8x512xf32>, vector<4x512xf32> -> vector<4x512xf32>
    %103 = arith.addf %94, %102 : vector<4x512xf32>
    %c16_i32_58 = arith.constant 16 : i32
    %104 = tpu.dynamic_rotate %92 by %c16_i32_58 dim 1 : vector<8x512xf32>, i32 -> vector<8x512xf32>
    %c1_59 = arith.constant 1 : index
    %c0_60 = arith.constant 0 : index
    %c0_61 = arith.constant 0 : index
    %105 = vector.load %arg1[%c1_59, %c0_60, %c0_61] : memref<9x1x512xf32, #tpu.memory_space<vmem>>, vector<1x1x512xf32>
    %106 = vector.shape_cast %105 : vector<1x1x512xf32> to vector<1x512xf32>
    %107 = vector.broadcast %106 : vector<1x512xf32> to vector<8x512xf32>
    %108 = arith.mulf %104, %107 : vector<8x512xf32>
    %c1_62 = arith.constant 1 : index
    %c0_63 = arith.constant 0 : index
    %c0_64 = arith.constant 0 : index
    %109 = vector.load %arg4[%c1_62, %c0_63, %c0_64] : memref<9x4x8xf32, #tpu.memory_space<vmem>>, vector<1x4x8xf32>
    %110 = vector.shape_cast %109 : vector<1x4x8xf32> to vector<4x8xf32>
    %cst_65 = arith.constant dense<0.000000e+00> : vector<4x512xf32>
    %111 = tpu.matmul %110, %108, %cst_65 {dimension_numbers = #tpu.dot_dimension_numbers<[1], [0], [0], [1], [0, 0, 1, 1], [], []>} : vector<4x8xf32>, vector<8x512xf32>, vector<4x512xf32> -> vector<4x512xf32>
    %112 = arith.addf %103, %111 : vector<4x512xf32>
    %c15_i32_66 = arith.constant 15 : i32
    %113 = tpu.dynamic_rotate %92 by %c15_i32_66 dim 1 : vector<8x512xf32>, i32 -> vector<8x512xf32>
    %c2_67 = arith.constant 2 : index
    %c0_68 = arith.constant 0 : index
    %c0_69 = arith.constant 0 : index
    %114 = vector.load %arg1[%c2_67, %c0_68, %c0_69] : memref<9x1x512xf32, #tpu.memory_space<vmem>>, vector<1x1x512xf32>
    %115 = vector.shape_cast %114 : vector<1x1x512xf32> to vector<1x512xf32>
    %116 = vector.broadcast %115 : vector<1x512xf32> to vector<8x512xf32>
    %117 = arith.mulf %113, %116 : vector<8x512xf32>
    %c2_70 = arith.constant 2 : index
    %c0_71 = arith.constant 0 : index
    %c0_72 = arith.constant 0 : index
    %118 = vector.load %arg4[%c2_70, %c0_71, %c0_72] : memref<9x4x8xf32, #tpu.memory_space<vmem>>, vector<1x4x8xf32>
    %119 = vector.shape_cast %118 : vector<1x4x8xf32> to vector<4x8xf32>
    %cst_73 = arith.constant dense<0.000000e+00> : vector<4x512xf32>
    %120 = tpu.matmul %119, %117, %cst_73 {dimension_numbers = #tpu.dot_dimension_numbers<[1], [0], [0], [1], [0, 0, 1, 1], [], []>} : vector<4x8xf32>, vector<8x512xf32>, vector<4x512xf32> -> vector<4x512xf32>
    %121 = arith.addf %112, %120 : vector<4x512xf32>
    %c1_i32_74 = arith.constant 1 : i32
    %122 = tpu.dynamic_rotate %92 by %c1_i32_74 dim 1 : vector<8x512xf32>, i32 -> vector<8x512xf32>
    %c3_75 = arith.constant 3 : index
    %c0_76 = arith.constant 0 : index
    %c0_77 = arith.constant 0 : index
    %123 = vector.load %arg1[%c3_75, %c0_76, %c0_77] : memref<9x1x512xf32, #tpu.memory_space<vmem>>, vector<1x1x512xf32>
    %124 = vector.shape_cast %123 : vector<1x1x512xf32> to vector<1x512xf32>
    %125 = vector.broadcast %124 : vector<1x512xf32> to vector<8x512xf32>
    %126 = arith.mulf %122, %125 : vector<8x512xf32>
    %c3_78 = arith.constant 3 : index
    %c0_79 = arith.constant 0 : index
    %c0_80 = arith.constant 0 : index
    %127 = vector.load %arg4[%c3_78, %c0_79, %c0_80] : memref<9x4x8xf32, #tpu.memory_space<vmem>>, vector<1x4x8xf32>
    %128 = vector.shape_cast %127 : vector<1x4x8xf32> to vector<4x8xf32>
    %cst_81 = arith.constant dense<0.000000e+00> : vector<4x512xf32>
    %129 = tpu.matmul %128, %126, %cst_81 {dimension_numbers = #tpu.dot_dimension_numbers<[1], [0], [0], [1], [0, 0, 1, 1], [], []>} : vector<4x8xf32>, vector<8x512xf32>, vector<4x512xf32> -> vector<4x512xf32>
    %130 = arith.addf %121, %129 : vector<4x512xf32>
    %c4_82 = arith.constant 4 : index
    %c0_83 = arith.constant 0 : index
    %c0_84 = arith.constant 0 : index
    %131 = vector.load %arg4[%c4_82, %c0_83, %c0_84] : memref<9x4x8xf32, #tpu.memory_space<vmem>>, vector<1x4x8xf32>
    %132 = vector.shape_cast %131 : vector<1x4x8xf32> to vector<4x8xf32>
    %cst_85 = arith.constant dense<0.000000e+00> : vector<4x512xf32>
    %133 = tpu.matmul %132, %92, %cst_85 {dimension_numbers = #tpu.dot_dimension_numbers<[1], [0], [0], [1], [0, 0, 1, 1], [], []>} : vector<4x8xf32>, vector<8x512xf32>, vector<4x512xf32> -> vector<4x512xf32>
    %134 = arith.addf %130, %133 : vector<4x512xf32>
    %c511_i32_86 = arith.constant 511 : i32
    %135 = tpu.dynamic_rotate %92 by %c511_i32_86 dim 1 : vector<8x512xf32>, i32 -> vector<8x512xf32>
    %c5_87 = arith.constant 5 : index
    %c0_88 = arith.constant 0 : index
    %c0_89 = arith.constant 0 : index
    %136 = vector.load %arg1[%c5_87, %c0_88, %c0_89] : memref<9x1x512xf32, #tpu.memory_space<vmem>>, vector<1x1x512xf32>
    %137 = vector.shape_cast %136 : vector<1x1x512xf32> to vector<1x512xf32>
    %138 = vector.broadcast %137 : vector<1x512xf32> to vector<8x512xf32>
    %139 = arith.mulf %135, %138 : vector<8x512xf32>
    %c5_90 = arith.constant 5 : index
    %c0_91 = arith.constant 0 : index
    %c0_92 = arith.constant 0 : index
    %140 = vector.load %arg4[%c5_90, %c0_91, %c0_92] : memref<9x4x8xf32, #tpu.memory_space<vmem>>, vector<1x4x8xf32>
    %141 = vector.shape_cast %140 : vector<1x4x8xf32> to vector<4x8xf32>
    %cst_93 = arith.constant dense<0.000000e+00> : vector<4x512xf32>
    %142 = tpu.matmul %141, %139, %cst_93 {dimension_numbers = #tpu.dot_dimension_numbers<[1], [0], [0], [1], [0, 0, 1, 1], [], []>} : vector<4x8xf32>, vector<8x512xf32>, vector<4x512xf32> -> vector<4x512xf32>
    %143 = arith.addf %134, %142 : vector<4x512xf32>
    %c497_i32_94 = arith.constant 497 : i32
    %144 = tpu.dynamic_rotate %92 by %c497_i32_94 dim 1 : vector<8x512xf32>, i32 -> vector<8x512xf32>
    %c6_95 = arith.constant 6 : index
    %c0_96 = arith.constant 0 : index
    %c0_97 = arith.constant 0 : index
    %145 = vector.load %arg1[%c6_95, %c0_96, %c0_97] : memref<9x1x512xf32, #tpu.memory_space<vmem>>, vector<1x1x512xf32>
    %146 = vector.shape_cast %145 : vector<1x1x512xf32> to vector<1x512xf32>
    %147 = vector.broadcast %146 : vector<1x512xf32> to vector<8x512xf32>
    %148 = arith.mulf %144, %147 : vector<8x512xf32>
    %c6_98 = arith.constant 6 : index
    %c0_99 = arith.constant 0 : index
    %c0_100 = arith.constant 0 : index
    %149 = vector.load %arg4[%c6_98, %c0_99, %c0_100] : memref<9x4x8xf32, #tpu.memory_space<vmem>>, vector<1x4x8xf32>
    %150 = vector.shape_cast %149 : vector<1x4x8xf32> to vector<4x8xf32>
    %cst_101 = arith.constant dense<0.000000e+00> : vector<4x512xf32>
    %151 = tpu.matmul %150, %148, %cst_101 {dimension_numbers = #tpu.dot_dimension_numbers<[1], [0], [0], [1], [0, 0, 1, 1], [], []>} : vector<4x8xf32>, vector<8x512xf32>, vector<4x512xf32> -> vector<4x512xf32>
    %152 = arith.addf %143, %151 : vector<4x512xf32>
    %c496_i32_102 = arith.constant 496 : i32
    %153 = tpu.dynamic_rotate %92 by %c496_i32_102 dim 1 : vector<8x512xf32>, i32 -> vector<8x512xf32>
    %c7_103 = arith.constant 7 : index
    %c0_104 = arith.constant 0 : index
    %c0_105 = arith.constant 0 : index
    %154 = vector.load %arg1[%c7_103, %c0_104, %c0_105] : memref<9x1x512xf32, #tpu.memory_space<vmem>>, vector<1x1x512xf32>
    %155 = vector.shape_cast %154 : vector<1x1x512xf32> to vector<1x512xf32>
    %156 = vector.broadcast %155 : vector<1x512xf32> to vector<8x512xf32>
    %157 = arith.mulf %153, %156 : vector<8x512xf32>
    %c7_106 = arith.constant 7 : index
    %c0_107 = arith.constant 0 : index
    %c0_108 = arith.constant 0 : index
    %158 = vector.load %arg4[%c7_106, %c0_107, %c0_108] : memref<9x4x8xf32, #tpu.memory_space<vmem>>, vector<1x4x8xf32>
    %159 = vector.shape_cast %158 : vector<1x4x8xf32> to vector<4x8xf32>
    %cst_109 = arith.constant dense<0.000000e+00> : vector<4x512xf32>
    %160 = tpu.matmul %159, %157, %cst_109 {dimension_numbers = #tpu.dot_dimension_numbers<[1], [0], [0], [1], [0, 0, 1, 1], [], []>} : vector<4x8xf32>, vector<8x512xf32>, vector<4x512xf32> -> vector<4x512xf32>
    %161 = arith.addf %152, %160 : vector<4x512xf32>
    %c495_i32_110 = arith.constant 495 : i32
    %162 = tpu.dynamic_rotate %92 by %c495_i32_110 dim 1 : vector<8x512xf32>, i32 -> vector<8x512xf32>
    %c8_111 = arith.constant 8 : index
    %c0_112 = arith.constant 0 : index
    %c0_113 = arith.constant 0 : index
    %163 = vector.load %arg1[%c8_111, %c0_112, %c0_113] : memref<9x1x512xf32, #tpu.memory_space<vmem>>, vector<1x1x512xf32>
    %164 = vector.shape_cast %163 : vector<1x1x512xf32> to vector<1x512xf32>
    %165 = vector.broadcast %164 : vector<1x512xf32> to vector<8x512xf32>
    %166 = arith.mulf %162, %165 : vector<8x512xf32>
    %c8_114 = arith.constant 8 : index
    %c0_115 = arith.constant 0 : index
    %c0_116 = arith.constant 0 : index
    %167 = vector.load %arg4[%c8_114, %c0_115, %c0_116] : memref<9x4x8xf32, #tpu.memory_space<vmem>>, vector<1x4x8xf32>
    %168 = vector.shape_cast %167 : vector<1x4x8xf32> to vector<4x8xf32>
    %cst_117 = arith.constant dense<0.000000e+00> : vector<4x512xf32>
    %169 = tpu.matmul %168, %166, %cst_117 {dimension_numbers = #tpu.dot_dimension_numbers<[1], [0], [0], [1], [0, 0, 1, 1], [], []>} : vector<4x8xf32>, vector<8x512xf32>, vector<4x512xf32> -> vector<4x512xf32>
    %170 = arith.addf %161, %169 : vector<4x512xf32>
    %171 = vector.broadcast %93 : vector<4x1xf32> to vector<4x512xf32>
    %172 = arith.addf %170, %171 : vector<4x512xf32>
    %cst_118 = arith.constant 0.000000e+00 : f32
    %173 = vector.broadcast %cst_118 : f32 to vector<4x512xf32>
    %174 = arith.maximumf %172, %173 : vector<4x512xf32>
    %c0_119 = arith.constant 0 : index
    %c0_120 = arith.constant 0 : index
    %175 = vector.load %arg7[%c0_119, %c0_120] : memref<8x1xf32, #tpu.memory_space<vmem>>, vector<8x1xf32>
    %cst_121 = arith.constant 0.000000e+00 : f32
    %176 = vector.broadcast %cst_121 : f32 to vector<8x512xf32>
    %c17_i32_122 = arith.constant 17 : i32
    %177 = tpu.dynamic_rotate %174 by %c17_i32_122 dim 1 : vector<4x512xf32>, i32 -> vector<4x512xf32>
    %c0_123 = arith.constant 0 : index
    %c0_124 = arith.constant 0 : index
    %c0_125 = arith.constant 0 : index
    %178 = vector.load %arg1[%c0_123, %c0_124, %c0_125] : memref<9x1x512xf32, #tpu.memory_space<vmem>>, vector<1x1x512xf32>
    %179 = vector.shape_cast %178 : vector<1x1x512xf32> to vector<1x512xf32>
    %180 = vector.broadcast %179 : vector<1x512xf32> to vector<4x512xf32>
    %181 = arith.mulf %177, %180 : vector<4x512xf32>
    %c0_126 = arith.constant 0 : index
    %c0_127 = arith.constant 0 : index
    %c0_128 = arith.constant 0 : index
    %182 = vector.load %arg6[%c0_126, %c0_127, %c0_128] : memref<9x8x4xf32, #tpu.memory_space<vmem>>, vector<1x8x4xf32>
    %183 = vector.shape_cast %182 : vector<1x8x4xf32> to vector<8x4xf32>
    %cst_129 = arith.constant dense<0.000000e+00> : vector<8x512xf32>
    %184 = tpu.matmul %183, %181, %cst_129 {dimension_numbers = #tpu.dot_dimension_numbers<[1], [0], [0], [1], [0, 0, 1, 1], [], []>} : vector<8x4xf32>, vector<4x512xf32>, vector<8x512xf32> -> vector<8x512xf32>
    %185 = arith.addf %176, %184 : vector<8x512xf32>
    %c16_i32_130 = arith.constant 16 : i32
    %186 = tpu.dynamic_rotate %174 by %c16_i32_130 dim 1 : vector<4x512xf32>, i32 -> vector<4x512xf32>
    %c1_131 = arith.constant 1 : index
    %c0_132 = arith.constant 0 : index
    %c0_133 = arith.constant 0 : index
    %187 = vector.load %arg1[%c1_131, %c0_132, %c0_133] : memref<9x1x512xf32, #tpu.memory_space<vmem>>, vector<1x1x512xf32>
    %188 = vector.shape_cast %187 : vector<1x1x512xf32> to vector<1x512xf32>
    %189 = vector.broadcast %188 : vector<1x512xf32> to vector<4x512xf32>
    %190 = arith.mulf %186, %189 : vector<4x512xf32>
    %c1_134 = arith.constant 1 : index
    %c0_135 = arith.constant 0 : index
    %c0_136 = arith.constant 0 : index
    %191 = vector.load %arg6[%c1_134, %c0_135, %c0_136] : memref<9x8x4xf32, #tpu.memory_space<vmem>>, vector<1x8x4xf32>
    %192 = vector.shape_cast %191 : vector<1x8x4xf32> to vector<8x4xf32>
    %cst_137 = arith.constant dense<0.000000e+00> : vector<8x512xf32>
    %193 = tpu.matmul %192, %190, %cst_137 {dimension_numbers = #tpu.dot_dimension_numbers<[1], [0], [0], [1], [0, 0, 1, 1], [], []>} : vector<8x4xf32>, vector<4x512xf32>, vector<8x512xf32> -> vector<8x512xf32>
    %194 = arith.addf %185, %193 : vector<8x512xf32>
    %c15_i32_138 = arith.constant 15 : i32
    %195 = tpu.dynamic_rotate %174 by %c15_i32_138 dim 1 : vector<4x512xf32>, i32 -> vector<4x512xf32>
    %c2_139 = arith.constant 2 : index
    %c0_140 = arith.constant 0 : index
    %c0_141 = arith.constant 0 : index
    %196 = vector.load %arg1[%c2_139, %c0_140, %c0_141] : memref<9x1x512xf32, #tpu.memory_space<vmem>>, vector<1x1x512xf32>
    %197 = vector.shape_cast %196 : vector<1x1x512xf32> to vector<1x512xf32>
    %198 = vector.broadcast %197 : vector<1x512xf32> to vector<4x512xf32>
    %199 = arith.mulf %195, %198 : vector<4x512xf32>
    %c2_142 = arith.constant 2 : index
    %c0_143 = arith.constant 0 : index
    %c0_144 = arith.constant 0 : index
    %200 = vector.load %arg6[%c2_142, %c0_143, %c0_144] : memref<9x8x4xf32, #tpu.memory_space<vmem>>, vector<1x8x4xf32>
    %201 = vector.shape_cast %200 : vector<1x8x4xf32> to vector<8x4xf32>
    %cst_145 = arith.constant dense<0.000000e+00> : vector<8x512xf32>
    %202 = tpu.matmul %201, %199, %cst_145 {dimension_numbers = #tpu.dot_dimension_numbers<[1], [0], [0], [1], [0, 0, 1, 1], [], []>} : vector<8x4xf32>, vector<4x512xf32>, vector<8x512xf32> -> vector<8x512xf32>
    %203 = arith.addf %194, %202 : vector<8x512xf32>
    %c1_i32_146 = arith.constant 1 : i32
    %204 = tpu.dynamic_rotate %174 by %c1_i32_146 dim 1 : vector<4x512xf32>, i32 -> vector<4x512xf32>
    %c3_147 = arith.constant 3 : index
    %c0_148 = arith.constant 0 : index
    %c0_149 = arith.constant 0 : index
    %205 = vector.load %arg1[%c3_147, %c0_148, %c0_149] : memref<9x1x512xf32, #tpu.memory_space<vmem>>, vector<1x1x512xf32>
    %206 = vector.shape_cast %205 : vector<1x1x512xf32> to vector<1x512xf32>
    %207 = vector.broadcast %206 : vector<1x512xf32> to vector<4x512xf32>
    %208 = arith.mulf %204, %207 : vector<4x512xf32>
    %c3_150 = arith.constant 3 : index
    %c0_151 = arith.constant 0 : index
    %c0_152 = arith.constant 0 : index
    %209 = vector.load %arg6[%c3_150, %c0_151, %c0_152] : memref<9x8x4xf32, #tpu.memory_space<vmem>>, vector<1x8x4xf32>
    %210 = vector.shape_cast %209 : vector<1x8x4xf32> to vector<8x4xf32>
    %cst_153 = arith.constant dense<0.000000e+00> : vector<8x512xf32>
    %211 = tpu.matmul %210, %208, %cst_153 {dimension_numbers = #tpu.dot_dimension_numbers<[1], [0], [0], [1], [0, 0, 1, 1], [], []>} : vector<8x4xf32>, vector<4x512xf32>, vector<8x512xf32> -> vector<8x512xf32>
    %212 = arith.addf %203, %211 : vector<8x512xf32>
    %c4_154 = arith.constant 4 : index
    %c0_155 = arith.constant 0 : index
    %c0_156 = arith.constant 0 : index
    %213 = vector.load %arg6[%c4_154, %c0_155, %c0_156] : memref<9x8x4xf32, #tpu.memory_space<vmem>>, vector<1x8x4xf32>
    %214 = vector.shape_cast %213 : vector<1x8x4xf32> to vector<8x4xf32>
    %cst_157 = arith.constant dense<0.000000e+00> : vector<8x512xf32>
    %215 = tpu.matmul %214, %174, %cst_157 {dimension_numbers = #tpu.dot_dimension_numbers<[1], [0], [0], [1], [0, 0, 1, 1], [], []>} : vector<8x4xf32>, vector<4x512xf32>, vector<8x512xf32> -> vector<8x512xf32>
    %216 = arith.addf %212, %215 : vector<8x512xf32>
    %c511_i32_158 = arith.constant 511 : i32
    %217 = tpu.dynamic_rotate %174 by %c511_i32_158 dim 1 : vector<4x512xf32>, i32 -> vector<4x512xf32>
    %c5_159 = arith.constant 5 : index
    %c0_160 = arith.constant 0 : index
    %c0_161 = arith.constant 0 : index
    %218 = vector.load %arg1[%c5_159, %c0_160, %c0_161] : memref<9x1x512xf32, #tpu.memory_space<vmem>>, vector<1x1x512xf32>
    %219 = vector.shape_cast %218 : vector<1x1x512xf32> to vector<1x512xf32>
    %220 = vector.broadcast %219 : vector<1x512xf32> to vector<4x512xf32>
    %221 = arith.mulf %217, %220 : vector<4x512xf32>
    %c5_162 = arith.constant 5 : index
    %c0_163 = arith.constant 0 : index
    %c0_164 = arith.constant 0 : index
    %222 = vector.load %arg6[%c5_162, %c0_163, %c0_164] : memref<9x8x4xf32, #tpu.memory_space<vmem>>, vector<1x8x4xf32>
    %223 = vector.shape_cast %222 : vector<1x8x4xf32> to vector<8x4xf32>
    %cst_165 = arith.constant dense<0.000000e+00> : vector<8x512xf32>
    %224 = tpu.matmul %223, %221, %cst_165 {dimension_numbers = #tpu.dot_dimension_numbers<[1], [0], [0], [1], [0, 0, 1, 1], [], []>} : vector<8x4xf32>, vector<4x512xf32>, vector<8x512xf32> -> vector<8x512xf32>
    %225 = arith.addf %216, %224 : vector<8x512xf32>
    %c497_i32_166 = arith.constant 497 : i32
    %226 = tpu.dynamic_rotate %174 by %c497_i32_166 dim 1 : vector<4x512xf32>, i32 -> vector<4x512xf32>
    %c6_167 = arith.constant 6 : index
    %c0_168 = arith.constant 0 : index
    %c0_169 = arith.constant 0 : index
    %227 = vector.load %arg1[%c6_167, %c0_168, %c0_169] : memref<9x1x512xf32, #tpu.memory_space<vmem>>, vector<1x1x512xf32>
    %228 = vector.shape_cast %227 : vector<1x1x512xf32> to vector<1x512xf32>
    %229 = vector.broadcast %228 : vector<1x512xf32> to vector<4x512xf32>
    %230 = arith.mulf %226, %229 : vector<4x512xf32>
    %c6_170 = arith.constant 6 : index
    %c0_171 = arith.constant 0 : index
    %c0_172 = arith.constant 0 : index
    %231 = vector.load %arg6[%c6_170, %c0_171, %c0_172] : memref<9x8x4xf32, #tpu.memory_space<vmem>>, vector<1x8x4xf32>
    %232 = vector.shape_cast %231 : vector<1x8x4xf32> to vector<8x4xf32>
    %cst_173 = arith.constant dense<0.000000e+00> : vector<8x512xf32>
    %233 = tpu.matmul %232, %230, %cst_173 {dimension_numbers = #tpu.dot_dimension_numbers<[1], [0], [0], [1], [0, 0, 1, 1], [], []>} : vector<8x4xf32>, vector<4x512xf32>, vector<8x512xf32> -> vector<8x512xf32>
    %234 = arith.addf %225, %233 : vector<8x512xf32>
    %c496_i32_174 = arith.constant 496 : i32
    %235 = tpu.dynamic_rotate %174 by %c496_i32_174 dim 1 : vector<4x512xf32>, i32 -> vector<4x512xf32>
    %c7_175 = arith.constant 7 : index
    %c0_176 = arith.constant 0 : index
    %c0_177 = arith.constant 0 : index
    %236 = vector.load %arg1[%c7_175, %c0_176, %c0_177] : memref<9x1x512xf32, #tpu.memory_space<vmem>>, vector<1x1x512xf32>
    %237 = vector.shape_cast %236 : vector<1x1x512xf32> to vector<1x512xf32>
    %238 = vector.broadcast %237 : vector<1x512xf32> to vector<4x512xf32>
    %239 = arith.mulf %235, %238 : vector<4x512xf32>
    %c7_178 = arith.constant 7 : index
    %c0_179 = arith.constant 0 : index
    %c0_180 = arith.constant 0 : index
    %240 = vector.load %arg6[%c7_178, %c0_179, %c0_180] : memref<9x8x4xf32, #tpu.memory_space<vmem>>, vector<1x8x4xf32>
    %241 = vector.shape_cast %240 : vector<1x8x4xf32> to vector<8x4xf32>
    %cst_181 = arith.constant dense<0.000000e+00> : vector<8x512xf32>
    %242 = tpu.matmul %241, %239, %cst_181 {dimension_numbers = #tpu.dot_dimension_numbers<[1], [0], [0], [1], [0, 0, 1, 1], [], []>} : vector<8x4xf32>, vector<4x512xf32>, vector<8x512xf32> -> vector<8x512xf32>
    %243 = arith.addf %234, %242 : vector<8x512xf32>
    %c495_i32_182 = arith.constant 495 : i32
    %244 = tpu.dynamic_rotate %174 by %c495_i32_182 dim 1 : vector<4x512xf32>, i32 -> vector<4x512xf32>
    %c8_183 = arith.constant 8 : index
    %c0_184 = arith.constant 0 : index
    %c0_185 = arith.constant 0 : index
    %245 = vector.load %arg1[%c8_183, %c0_184, %c0_185] : memref<9x1x512xf32, #tpu.memory_space<vmem>>, vector<1x1x512xf32>
    %246 = vector.shape_cast %245 : vector<1x1x512xf32> to vector<1x512xf32>
    %247 = vector.broadcast %246 : vector<1x512xf32> to vector<4x512xf32>
    %248 = arith.mulf %244, %247 : vector<4x512xf32>
    %c8_186 = arith.constant 8 : index
    %c0_187 = arith.constant 0 : index
    %c0_188 = arith.constant 0 : index
    %249 = vector.load %arg6[%c8_186, %c0_187, %c0_188] : memref<9x8x4xf32, #tpu.memory_space<vmem>>, vector<1x8x4xf32>
    %250 = vector.shape_cast %249 : vector<1x8x4xf32> to vector<8x4xf32>
    %cst_189 = arith.constant dense<0.000000e+00> : vector<8x512xf32>
    %251 = tpu.matmul %250, %248, %cst_189 {dimension_numbers = #tpu.dot_dimension_numbers<[1], [0], [0], [1], [0, 0, 1, 1], [], []>} : vector<8x4xf32>, vector<4x512xf32>, vector<8x512xf32> -> vector<8x512xf32>
    %252 = arith.addf %243, %251 : vector<8x512xf32>
    %253 = vector.broadcast %175 : vector<8x1xf32> to vector<8x512xf32>
    %254 = arith.addf %252, %253 : vector<8x512xf32>
    %255 = vector.extract_strided_slice %92 {offsets = [0, 0], sizes = [8, 256], strides = [1, 1]} : vector<8x512xf32> to vector<8x256xf32>
    %256 = vector.extract_strided_slice %254 {offsets = [0, 0], sizes = [8, 256], strides = [1, 1]} : vector<8x512xf32> to vector<8x256xf32>
    %257 = arith.subf %256, %255 : vector<8x256xf32>
    %258 = arith.mulf %257, %257 : vector<8x256xf32>
    %259 = vector.shape_cast %258 : vector<8x256xf32> to vector<1x8x256xf32>
    %cst_190 = arith.constant dense<0.000000e+00> : vector<1xf32>
    %260 = vector.multi_reduction <add>, %259, %cst_190 [1, 2] : vector<1x8x256xf32> to vector<1xf32>
    %261 = vector.shape_cast %260 : vector<1xf32> to vector<1x1x1xf32>
    %262 = vector.extract %261[0, 0, 0] : f32 from vector<1x1x1xf32>
    %cst_191 = arith.constant 0.000000e+00 : f32
    %263 = arith.addf %cst_191, %262 : f32
    %264 = vector.extract_strided_slice %254 {offsets = [0, 256], sizes = [8, 256], strides = [1, 1]} : vector<8x512xf32> to vector<8x256xf32>
    %265 = arith.subf %264, %255 : vector<8x256xf32>
    %266 = arith.mulf %265, %265 : vector<8x256xf32>
    %267 = vector.shape_cast %266 : vector<8x256xf32> to vector<1x8x256xf32>
    %cst_192 = arith.constant dense<0.000000e+00> : vector<1xf32>
    %268 = vector.multi_reduction <add>, %267, %cst_192 [1, 2] : vector<1x8x256xf32> to vector<1xf32>
    %269 = vector.shape_cast %268 : vector<1xf32> to vector<1x1x1xf32>
    %270 = vector.extract %269[0, 0, 0] : f32 from vector<1x1x1xf32>
    %271 = arith.addf %263, %270 : f32
    %cst_193 = arith.constant 4.096000e+03 : f32
    %272 = arith.divf %271, %cst_193 : f32
    %273 = vector.broadcast %272 : f32 to vector<1x1xf32>
    %c0_194 = arith.constant 0 : index
    %c0_195 = arith.constant 0 : index
    %274 = vector.load %arg11[%c0_194, %c0_195] : memref<1x1xf32, #tpu.memory_space<vmem>>, vector<1x1xf32>
    tpu.vector_store %arg11[%c0_194, %c0_195], %273 {strides = array<i32>} : memref<1x1xf32, #tpu.memory_space<vmem>>, vector<1x1xf32>,
    %c0_196 = arith.constant 0 : index
    %c0_197 = arith.constant 0 : index
    %275 = vector.load %arg9[%c0_196, %c0_197] : memref<4x1xf32, #tpu.memory_space<vmem>>, vector<4x1xf32>
    %cst_198 = arith.constant 0.000000e+00 : f32
    %276 = vector.broadcast %cst_198 : f32 to vector<4x512xf32>
    %c17_i32_199 = arith.constant 17 : i32
    %277 = tpu.dynamic_rotate %254 by %c17_i32_199 dim 1 : vector<8x512xf32>, i32 -> vector<8x512xf32>
    %c0_200 = arith.constant 0 : index
    %c0_201 = arith.constant 0 : index
    %c0_202 = arith.constant 0 : index
    %278 = vector.load %arg1[%c0_200, %c0_201, %c0_202] : memref<9x1x512xf32, #tpu.memory_space<vmem>>, vector<1x1x512xf32>
    %279 = vector.shape_cast %278 : vector<1x1x512xf32> to vector<1x512xf32>
    %280 = vector.broadcast %279 : vector<1x512xf32> to vector<8x512xf32>
    %281 = arith.mulf %277, %280 : vector<8x512xf32>
    %c0_203 = arith.constant 0 : index
    %c0_204 = arith.constant 0 : index
    %c0_205 = arith.constant 0 : index
    %282 = vector.load %arg8[%c0_203, %c0_204, %c0_205] : memref<9x4x8xf32, #tpu.memory_space<vmem>>, vector<1x4x8xf32>
    %283 = vector.shape_cast %282 : vector<1x4x8xf32> to vector<4x8xf32>
    %cst_206 = arith.constant dense<0.000000e+00> : vector<4x512xf32>
    %284 = tpu.matmul %283, %281, %cst_206 {dimension_numbers = #tpu.dot_dimension_numbers<[1], [0], [0], [1], [0, 0, 1, 1], [], []>} : vector<4x8xf32>, vector<8x512xf32>, vector<4x512xf32> -> vector<4x512xf32>
    %285 = arith.addf %276, %284 : vector<4x512xf32>
    %c16_i32_207 = arith.constant 16 : i32
    %286 = tpu.dynamic_rotate %254 by %c16_i32_207 dim 1 : vector<8x512xf32>, i32 -> vector<8x512xf32>
    %c1_208 = arith.constant 1 : index
    %c0_209 = arith.constant 0 : index
    %c0_210 = arith.constant 0 : index
    %287 = vector.load %arg1[%c1_208, %c0_209, %c0_210] : memref<9x1x512xf32, #tpu.memory_space<vmem>>, vector<1x1x512xf32>
    %288 = vector.shape_cast %287 : vector<1x1x512xf32> to vector<1x512xf32>
    %289 = vector.broadcast %288 : vector<1x512xf32> to vector<8x512xf32>
    %290 = arith.mulf %286, %289 : vector<8x512xf32>
    %c1_211 = arith.constant 1 : index
    %c0_212 = arith.constant 0 : index
    %c0_213 = arith.constant 0 : index
    %291 = vector.load %arg8[%c1_211, %c0_212, %c0_213] : memref<9x4x8xf32, #tpu.memory_space<vmem>>, vector<1x4x8xf32>
    %292 = vector.shape_cast %291 : vector<1x4x8xf32> to vector<4x8xf32>
    %cst_214 = arith.constant dense<0.000000e+00> : vector<4x512xf32>
    %293 = tpu.matmul %292, %290, %cst_214 {dimension_numbers = #tpu.dot_dimension_numbers<[1], [0], [0], [1], [0, 0, 1, 1], [], []>} : vector<4x8xf32>, vector<8x512xf32>, vector<4x512xf32> -> vector<4x512xf32>
    %294 = arith.addf %285, %293 : vector<4x512xf32>
    %c15_i32_215 = arith.constant 15 : i32
    %295 = tpu.dynamic_rotate %254 by %c15_i32_215 dim 1 : vector<8x512xf32>, i32 -> vector<8x512xf32>
    %c2_216 = arith.constant 2 : index
    %c0_217 = arith.constant 0 : index
    %c0_218 = arith.constant 0 : index
    %296 = vector.load %arg1[%c2_216, %c0_217, %c0_218] : memref<9x1x512xf32, #tpu.memory_space<vmem>>, vector<1x1x512xf32>
    %297 = vector.shape_cast %296 : vector<1x1x512xf32> to vector<1x512xf32>
    %298 = vector.broadcast %297 : vector<1x512xf32> to vector<8x512xf32>
    %299 = arith.mulf %295, %298 : vector<8x512xf32>
    %c2_219 = arith.constant 2 : index
    %c0_220 = arith.constant 0 : index
    %c0_221 = arith.constant 0 : index
    %300 = vector.load %arg8[%c2_219, %c0_220, %c0_221] : memref<9x4x8xf32, #tpu.memory_space<vmem>>, vector<1x4x8xf32>
    %301 = vector.shape_cast %300 : vector<1x4x8xf32> to vector<4x8xf32>
    %cst_222 = arith.constant dense<0.000000e+00> : vector<4x512xf32>
    %302 = tpu.matmul %301, %299, %cst_222 {dimension_numbers = #tpu.dot_dimension_numbers<[1], [0], [0], [1], [0, 0, 1, 1], [], []>} : vector<4x8xf32>, vector<8x512xf32>, vector<4x512xf32> -> vector<4x512xf32>
    %303 = arith.addf %294, %302 : vector<4x512xf32>
    %c1_i32_223 = arith.constant 1 : i32
    %304 = tpu.dynamic_rotate %254 by %c1_i32_223 dim 1 : vector<8x512xf32>, i32 -> vector<8x512xf32>
    %c3_224 = arith.constant 3 : index
    %c0_225 = arith.constant 0 : index
    %c0_226 = arith.constant 0 : index
    %305 = vector.load %arg1[%c3_224, %c0_225, %c0_226] : memref<9x1x512xf32, #tpu.memory_space<vmem>>, vector<1x1x512xf32>
    %306 = vector.shape_cast %305 : vector<1x1x512xf32> to vector<1x512xf32>
    %307 = vector.broadcast %306 : vector<1x512xf32> to vector<8x512xf32>
    %308 = arith.mulf %304, %307 : vector<8x512xf32>
    %c3_227 = arith.constant 3 : index
    %c0_228 = arith.constant 0 : index
    %c0_229 = arith.constant 0 : index
    %309 = vector.load %arg8[%c3_227, %c0_228, %c0_229] : memref<9x4x8xf32, #tpu.memory_space<vmem>>, vector<1x4x8xf32>
    %310 = vector.shape_cast %309 : vector<1x4x8xf32> to vector<4x8xf32>
    %cst_230 = arith.constant dense<0.000000e+00> : vector<4x512xf32>
    %311 = tpu.matmul %310, %308, %cst_230 {dimension_numbers = #tpu.dot_dimension_numbers<[1], [0], [0], [1], [0, 0, 1, 1], [], []>} : vector<4x8xf32>, vector<8x512xf32>, vector<4x512xf32> -> vector<4x512xf32>
    %312 = arith.addf %303, %311 : vector<4x512xf32>
    %c4_231 = arith.constant 4 : index
    %c0_232 = arith.constant 0 : index
    %c0_233 = arith.constant 0 : index
    %313 = vector.load %arg8[%c4_231, %c0_232, %c0_233] : memref<9x4x8xf32, #tpu.memory_space<vmem>>, vector<1x4x8xf32>
    %314 = vector.shape_cast %313 : vector<1x4x8xf32> to vector<4x8xf32>
    %cst_234 = arith.constant dense<0.000000e+00> : vector<4x512xf32>
    %315 = tpu.matmul %314, %254, %cst_234 {dimension_numbers = #tpu.dot_dimension_numbers<[1], [0], [0], [1], [0, 0, 1, 1], [], []>} : vector<4x8xf32>, vector<8x512xf32>, vector<4x512xf32> -> vector<4x512xf32>
    %316 = arith.addf %312, %315 : vector<4x512xf32>
    %c511_i32_235 = arith.constant 511 : i32
    %317 = tpu.dynamic_rotate %254 by %c511_i32_235 dim 1 : vector<8x512xf32>, i32 -> vector<8x512xf32>
    %c5_236 = arith.constant 5 : index
    %c0_237 = arith.constant 0 : index
    %c0_238 = arith.constant 0 : index
    %318 = vector.load %arg1[%c5_236, %c0_237, %c0_238] : memref<9x1x512xf32, #tpu.memory_space<vmem>>, vector<1x1x512xf32>
    %319 = vector.shape_cast %318 : vector<1x1x512xf32> to vector<1x512xf32>
    %320 = vector.broadcast %319 : vector<1x512xf32> to vector<8x512xf32>
    %321 = arith.mulf %317, %320 : vector<8x512xf32>
    %c5_239 = arith.constant 5 : index
    %c0_240 = arith.constant 0 : index
    %c0_241 = arith.constant 0 : index
    %322 = vector.load %arg8[%c5_239, %c0_240, %c0_241] : memref<9x4x8xf32, #tpu.memory_space<vmem>>, vector<1x4x8xf32>
    %323 = vector.shape_cast %322 : vector<1x4x8xf32> to vector<4x8xf32>
    %cst_242 = arith.constant dense<0.000000e+00> : vector<4x512xf32>
    %324 = tpu.matmul %323, %321, %cst_242 {dimension_numbers = #tpu.dot_dimension_numbers<[1], [0], [0], [1], [0, 0, 1, 1], [], []>} : vector<4x8xf32>, vector<8x512xf32>, vector<4x512xf32> -> vector<4x512xf32>
    %325 = arith.addf %316, %324 : vector<4x512xf32>
    %c497_i32_243 = arith.constant 497 : i32
    %326 = tpu.dynamic_rotate %254 by %c497_i32_243 dim 1 : vector<8x512xf32>, i32 -> vector<8x512xf32>
    %c6_244 = arith.constant 6 : index
    %c0_245 = arith.constant 0 : index
    %c0_246 = arith.constant 0 : index
    %327 = vector.load %arg1[%c6_244, %c0_245, %c0_246] : memref<9x1x512xf32, #tpu.memory_space<vmem>>, vector<1x1x512xf32>
    %328 = vector.shape_cast %327 : vector<1x1x512xf32> to vector<1x512xf32>
    %329 = vector.broadcast %328 : vector<1x512xf32> to vector<8x512xf32>
    %330 = arith.mulf %326, %329 : vector<8x512xf32>
    %c6_247 = arith.constant 6 : index
    %c0_248 = arith.constant 0 : index
    %c0_249 = arith.constant 0 : index
    %331 = vector.load %arg8[%c6_247, %c0_248, %c0_249] : memref<9x4x8xf32, #tpu.memory_space<vmem>>, vector<1x4x8xf32>
    %332 = vector.shape_cast %331 : vector<1x4x8xf32> to vector<4x8xf32>
    %cst_250 = arith.constant dense<0.000000e+00> : vector<4x512xf32>
    %333 = tpu.matmul %332, %330, %cst_250 {dimension_numbers = #tpu.dot_dimension_numbers<[1], [0], [0], [1], [0, 0, 1, 1], [], []>} : vector<4x8xf32>, vector<8x512xf32>, vector<4x512xf32> -> vector<4x512xf32>
    %334 = arith.addf %325, %333 : vector<4x512xf32>
    %c496_i32_251 = arith.constant 496 : i32
    %335 = tpu.dynamic_rotate %254 by %c496_i32_251 dim 1 : vector<8x512xf32>, i32 -> vector<8x512xf32>
    %c7_252 = arith.constant 7 : index
    %c0_253 = arith.constant 0 : index
    %c0_254 = arith.constant 0 : index
    %336 = vector.load %arg1[%c7_252, %c0_253, %c0_254] : memref<9x1x512xf32, #tpu.memory_space<vmem>>, vector<1x1x512xf32>
    %337 = vector.shape_cast %336 : vector<1x1x512xf32> to vector<1x512xf32>
    %338 = vector.broadcast %337 : vector<1x512xf32> to vector<8x512xf32>
    %339 = arith.mulf %335, %338 : vector<8x512xf32>
    %c7_255 = arith.constant 7 : index
    %c0_256 = arith.constant 0 : index
    %c0_257 = arith.constant 0 : index
    %340 = vector.load %arg8[%c7_255, %c0_256, %c0_257] : memref<9x4x8xf32, #tpu.memory_space<vmem>>, vector<1x4x8xf32>
    %341 = vector.shape_cast %340 : vector<1x4x8xf32> to vector<4x8xf32>
    %cst_258 = arith.constant dense<0.000000e+00> : vector<4x512xf32>
    %342 = tpu.matmul %341, %339, %cst_258 {dimension_numbers = #tpu.dot_dimension_numbers<[1], [0], [0], [1], [0, 0, 1, 1], [], []>} : vector<4x8xf32>, vector<8x512xf32>, vector<4x512xf32> -> vector<4x512xf32>
    %343 = arith.addf %334, %342 : vector<4x512xf32>
    %c495_i32_259 = arith.constant 495 : i32
    %344 = tpu.dynamic_rotate %254 by %c495_i32_259 dim 1 : vector<8x512xf32>, i32 -> vector<8x512xf32>
    %c8_260 = arith.constant 8 : index
    %c0_261 = arith.constant 0 : index
    %c0_262 = arith.constant 0 : index
    %345 = vector.load %arg1[%c8_260, %c0_261, %c0_262] : memref<9x1x512xf32, #tpu.memory_space<vmem>>, vector<1x1x512xf32>
    %346 = vector.shape_cast %345 : vector<1x1x512xf32> to vector<1x512xf32>
    %347 = vector.broadcast %346 : vector<1x512xf32> to vector<8x512xf32>
    %348 = arith.mulf %344, %347 : vector<8x512xf32>
    %c8_263 = arith.constant 8 : index
    %c0_264 = arith.constant 0 : index
    %c0_265 = arith.constant 0 : index
    %349 = vector.load %arg8[%c8_263, %c0_264, %c0_265] : memref<9x4x8xf32, #tpu.memory_space<vmem>>, vector<1x4x8xf32>
    %350 = vector.shape_cast %349 : vector<1x4x8xf32> to vector<4x8xf32>
    %cst_266 = arith.constant dense<0.000000e+00> : vector<4x512xf32>
    %351 = tpu.matmul %350, %348, %cst_266 {dimension_numbers = #tpu.dot_dimension_numbers<[1], [0], [0], [1], [0, 0, 1, 1], [], []>} : vector<4x8xf32>, vector<8x512xf32>, vector<4x512xf32> -> vector<4x512xf32>
    %352 = arith.addf %343, %351 : vector<4x512xf32>
    %353 = vector.broadcast %275 : vector<4x1xf32> to vector<4x512xf32>
    %354 = arith.addf %352, %353 : vector<4x512xf32>
    %c0_267 = arith.constant 0 : index
    %c0_268 = arith.constant 0 : index
    %355 = vector.load %arg10[%c0_267, %c0_268] : memref<4x512xf32, #tpu.memory_space<vmem>>, vector<4x512xf32>
    tpu.vector_store %arg10[%c0_267, %c0_268], %354 {strides = array<i32>} : memref<4x512xf32, #tpu.memory_space<vmem>>, vector<4x512xf32>,
    return
  }
}

</mosaic_0001>

<llo_original>
// kernel: frankenstein_forward.1
$region0: #{frankenstein_forward.1}
  #allocation0 [shape = 'u32[]', space=smem, size = 0x4, offset = 0x4, fixed_abs, tag = 'smem constant byte address 0x4 - core index']
  #allocation1 [shape = 'u32[144,128]{1,0:T(1,128)}', space=vmem, size = 0x12000, scoped, tag = 'internal scratch']
  %s0 = inlined_call_operand.vmem [shape: f32[1,512], index: 0, kind: input, shape index: {}]
  %s1 = inlined_call_operand.vmem [shape: f32[9,1,512], index: 1, kind: input, shape index: {}]
  %s2 = inlined_call_operand.vmem [shape: f32[9,8,1], index: 2, kind: input, shape index: {}]
  %s3 = inlined_call_operand.vmem [shape: f32[8,1], index: 3, kind: input, shape index: {}]
  %s4 = inlined_call_operand.vmem [shape: f32[9,4,8], index: 4, kind: input, shape index: {}]
  %s5 = inlined_call_operand.vmem [shape: f32[4,1], index: 5, kind: input, shape index: {}]
  %s6 = inlined_call_operand.vmem [shape: f32[9,8,4], index: 6, kind: input, shape index: {}]
  %s7 = inlined_call_operand.vmem [shape: f32[8,1], index: 7, kind: input, shape index: {}]
  %s8 = inlined_call_operand.vmem [shape: f32[9,4,8], index: 8, kind: input, shape index: {}]
  %s9 = inlined_call_operand.vmem [shape: f32[4,1], index: 9, kind: input, shape index: {}]
  %s10 = inlined_call_operand.vmem [shape: f32[4,512], index: 10, kind: output, shape index: {0}]
  %s11 = inlined_call_operand.hbm [shape: f32[1,1], index: 11, kind: output, shape index: {1}]
  %12 = xla_tuple %s10, %s11
  %s13 = sld [smem:[#allocation0]]
  $region58: #{frankenstein_forward.1} parent=0
    _
  %s15 = ssub.s32 1, %s13
  %s16 = scalar_select 0, %s15, %s13
  $region1: #{frankenstein_forward.1} parent=0
    #allocation2 [shape = 'u8[512]{0}', space=vmem, size = 0x400, scoped, tag = 'output window, operand 1, single buffered']
    #allocation3 [shape = 's32[1]{0}', space=sflag, size = 0x4, scoped, tag = 'scoped memory for frankenstein_forward.1']
    %17 = vsyncpa [#allocation3], 0
    // Predicated region
    $region2: #{frankenstein_forward.1} parent=1 // pred_check
      _
    $region3: #{frankenstein_forward.1} parent=1 // pred_check_branch
      %19 = sbr.rel (0) target = $region5
    $region4: #{frankenstein_forward.1} parent=1 // pred_region
      _
    $region5: #{frankenstein_forward.1} parent=1 // pred_fallthru
      _
    // Predicated region
    $region6: #{frankenstein_forward.1} parent=1 // pred_check
      _
    $region7: #{frankenstein_forward.1} parent=1 // pred_check_branch
      %21 = sbr.rel (0) target = $region9
    $region8: #{frankenstein_forward.1} parent=1 // pred_region
      _
    $region9: #{frankenstein_forward.1} parent=1 // pred_fallthru
      _
    // Predicated region
    $region10: #{frankenstein_forward.1} parent=1 // pred_check
      _
    $region11: #{frankenstein_forward.1} parent=1 // pred_check_branch
      %23 = sbr.rel (0) target = $region13
    $region12: #{frankenstein_forward.1} parent=1 // pred_region
      _
    $region13: #{frankenstein_forward.1} parent=1 // pred_fallthru
      _
    // Predicated region
    $region14: #{frankenstein_forward.1} parent=1 // pred_check
      _
    $region15: #{frankenstein_forward.1} parent=1 // pred_check_branch
      %25 = sbr.rel (0) target = $region17
    $region16: #{frankenstein_forward.1} parent=1 // pred_region
      _
    $region17: #{frankenstein_forward.1} parent=1 // pred_fallthru
      _
    // Predicated region
    $region18: #{frankenstein_forward.1} parent=1 // pred_check
      _
    $region19: #{frankenstein_forward.1} parent=1 // pred_check_branch
      %27 = sbr.rel (0) target = $region21
    $region20: #{frankenstein_forward.1} parent=1 // pred_region
      _
    $region21: #{frankenstein_forward.1} parent=1 // pred_fallthru
      _
    // Predicated region
    $region22: #{frankenstein_forward.1} parent=1 // pred_check
      _
    $region23: #{frankenstein_forward.1} parent=1 // pred_check_branch
      %29 = sbr.rel (0) target = $region25
    $region24: #{frankenstein_forward.1} parent=1 // pred_region
      _
    $region25: #{frankenstein_forward.1} parent=1 // pred_fallthru
      _
    // Predicated region
    $region26: #{frankenstein_forward.1} parent=1 // pred_check
      _
    $region27: #{frankenstein_forward.1} parent=1 // pred_check_branch
      %31 = sbr.rel (0) target = $region29
    $region28: #{frankenstein_forward.1} parent=1 // pred_region
      _
    $region29: #{frankenstein_forward.1} parent=1 // pred_fallthru
      _
    // Predicated region
    $region30: #{frankenstein_forward.1} parent=1 // pred_check
      _
    $region31: #{frankenstein_forward.1} parent=1 // pred_check_branch
      %33 = sbr.rel (0) target = $region33
    $region32: #{frankenstein_forward.1} parent=1 // pred_region
      _
    $region33: #{frankenstein_forward.1} parent=1 // pred_fallthru
      _
    // Predicated region
    $region34: #{frankenstein_forward.1} parent=1 // pred_check
      _
    $region35: #{frankenstein_forward.1} parent=1 // pred_check_branch
      %35 = sbr.rel (0) target = $region37
    $region36: #{frankenstein_forward.1} parent=1 // pred_region
      _
    $region37: #{frankenstein_forward.1} parent=1 // pred_fallthru
      _
    // Predicated region
    $region38: #{frankenstein_forward.1} parent=1 // pred_check
      _
    $region39: #{frankenstein_forward.1} parent=1 // pred_check_branch
      %37 = sbr.rel (0) target = $region41
    $region40: #{frankenstein_forward.1} parent=1 // pred_region
      _
    $region41: #{frankenstein_forward.1} parent=1 // pred_fallthru
      _
    %v38 = vld [vmem:[%s0] sm:$0xf]
    %v39 = vld [vmem:[%s3] sm:$0xff]
    %v41 = vlaneseq
    %v42 = vshrl.u32 %v41, 7
    %v43 = vsub.s32 0, %v42
    %v44 = vrot.slane %v38, %v43
    %v45 = vlaneseq
    %v46 = vshrl.u32 %v45, 7
    %v47 = vsub.s32 1, %v46
    %v48 = vrot.slane %v38, %v47
    %v49 = vlaneseq
    %v50 = vshrl.u32 %v49, 7
    %v51 = vsub.s32 2, %v50
    %v52 = vrot.slane %v38, %v51
    %v53 = vlaneseq
    %v54 = vshrl.u32 %v53, 7
    %v55 = vsub.s32 3, %v54
    %v56 = vrot.slane %v38, %v55
    %61 = vrot.lane.b32.xlu0 %v44, 17
    %v62 = vpop.permute.xlu0 %61
    %63 = vrot.lane.b32.xlu0 %v48, 17
    %v64 = vpop.permute.xlu0 %63
    %65 = vrot.lane.b32.xlu0 %v52, 17
    %v66 = vpop.permute.xlu0 %65
    %67 = vrot.lane.b32.xlu0 %v56, 17
    %v68 = vpop.permute.xlu0 %67
    %v69 = vlaneseq
    %v70 = vand.u32 %v69, 127
    %vm71 = vcmp.lt.s32.totalorder %v70, 17
    %v72 = vsel %vm71, %v66, %v68
    %v73 = vsel %vm71, %v64, %v66
    %v74 = vsel %vm71, %v62, %v64
    %v75 = vsel %vm71, %v68, %v62
    %v76 = vld [vmem:[%s1] sm:$0xf]
    %v78 = vlaneseq
    %v79 = vshrl.u32 %v78, 7
    %v80 = vsub.s32 0, %v79
    %v81 = vrot.slane %v76, %v80
    %v82 = vlaneseq
    %v83 = vshrl.u32 %v82, 7
    %v84 = vsub.s32 1, %v83
    %v85 = vrot.slane %v76, %v84
    %v86 = vlaneseq
    %v87 = vshrl.u32 %v86, 7
    %v88 = vsub.s32 2, %v87
    %v89 = vrot.slane %v76, %v88
    %v90 = vlaneseq
    %v91 = vshrl.u32 %v90, 7
    %v92 = vsub.s32 3, %v91
    %v93 = vrot.slane %v76, %v92
    %v98 = vmul.f32 %v75, %v81
    %v99 = vmul.f32 %v74, %v85
    %v100 = vmul.f32 %v73, %v89
    %v101 = vmul.f32 %v72, %v93
    %v102 = vld [vmem:[%s2] sm:$0xff]
    %104 = vset.pattern.permute.xlu0 0
    %105 = vperm.xlu0 %104, %v102
    %v106 = vpop.permute.xlu0 %105
    %v108 = vlaneseq
    %v109 = vshrl.u32 %v108, 7
    %v110 = vsub.s32 0, %v109
    %v111 = vrot.slane %v98, %v110
    %v112 = vlaneseq
    %v113 = vshrl.u32 %v112, 7
    %v114 = vsub.s32 0, %v113
    %v115 = vrot.slane %v99, %v114
    %v116 = vlaneseq
    %v117 = vshrl.u32 %v116, 7
    %v118 = vsub.s32 0, %v117
    %v119 = vrot.slane %v100, %v118
    %v120 = vlaneseq
    %v121 = vshrl.u32 %v120, 7
    %v122 = vsub.s32 0, %v121
    %v123 = vrot.slane %v101, %v122
    %v124 = vmul.f32 %v106, %v111
    %v125 = vmul.f32 %v106, %v115
    %v126 = vmul.f32 %v106, %v119
    %v127 = vmul.f32 %v106, %v123
    %v128 = vadd.f32 %v124, 0.0
    %v129 = vadd.f32 %v125, 0.0
    %v130 = vadd.f32 %v126, 0.0
    %v131 = vadd.f32 %v127, 0.0
    %132 = vrot.lane.b32.xlu0 %v44, 16
    %v133 = vpop.permute.xlu0 %132
    %134 = vrot.lane.b32.xlu0 %v48, 16
    %v135 = vpop.permute.xlu0 %134
    %136 = vrot.lane.b32.xlu0 %v52, 16
    %v137 = vpop.permute.xlu0 %136
    %138 = vrot.lane.b32.xlu0 %v56, 16
    %v139 = vpop.permute.xlu0 %138
    %vm140 = vcmp.lt.s32.totalorder %v70, 16
    %v141 = vsel %vm140, %v137, %v139
    %v142 = vsel %vm140, %v135, %v137
    %v143 = vsel %vm140, %v133, %v135
    %v144 = vsel %vm140, %v139, %v133
    %s145 = scalar_lea.vmem %s1, 4
    %v146 = vld [vmem:[%s145] sm:$0xf]
    %v148 = vlaneseq
    %v149 = vshrl.u32 %v148, 7
    %v150 = vsub.s32 0, %v149
    %v151 = vrot.slane %v146, %v150
    %v152 = vlaneseq
    %v153 = vshrl.u32 %v152, 7
    %v154 = vsub.s32 1, %v153
    %v155 = vrot.slane %v146, %v154
    %v156 = vlaneseq
    %v157 = vshrl.u32 %v156, 7
    %v158 = vsub.s32 2, %v157
    %v159 = vrot.slane %v146, %v158
    %v160 = vlaneseq
    %v161 = vshrl.u32 %v160, 7
    %v162 = vsub.s32 3, %v161
    %v163 = vrot.slane %v146, %v162
    %v168 = vmul.f32 %v144, %v151
    %v169 = vmul.f32 %v143, %v155
    %v170 = vmul.f32 %v142, %v159
    %v171 = vmul.f32 %v141, %v163
    %s172 = scalar_lea.vmem %s2, 8
    %v173 = vld [vmem:[%s172] sm:$0xff]
    %175 = vset.pattern.permute.xlu0 0
    %176 = vperm.xlu0 %175, %v173
    %v177 = vpop.permute.xlu0 %176
    %v179 = vlaneseq
    %v180 = vshrl.u32 %v179, 7
    %v181 = vsub.s32 0, %v180
    %v182 = vrot.slane %v168, %v181
    %v183 = vlaneseq
    %v184 = vshrl.u32 %v183, 7
    %v185 = vsub.s32 0, %v184
    %v186 = vrot.slane %v169, %v185
    %v187 = vlaneseq
    %v188 = vshrl.u32 %v187, 7
    %v189 = vsub.s32 0, %v188
    %v190 = vrot.slane %v170, %v189
    %v191 = vlaneseq
    %v192 = vshrl.u32 %v191, 7
    %v193 = vsub.s32 0, %v192
    %v194 = vrot.slane %v171, %v193
    %v195 = vmul.f32 %v177, %v182
    %v196 = vmul.f32 %v177, %v186
    %v197 = vmul.f32 %v177, %v190
    %v198 = vmul.f32 %v177, %v194
    %v199 = vadd.f32 %v128, %v195
    %v200 = vadd.f32 %v129, %v196
    %v201 = vadd.f32 %v130, %v197
    %v202 = vadd.f32 %v131, %v198
    %203 = vrot.lane.b32.xlu0 %v44, 15
    %v204 = vpop.permute.xlu0 %203
    %205 = vrot.lane.b32.xlu0 %v48, 15
    %v206 = vpop.permute.xlu0 %205
    %207 = vrot.lane.b32.xlu0 %v52, 15
    %v208 = vpop.permute.xlu0 %207
    %209 = vrot.lane.b32.xlu0 %v56, 15
    %v210 = vpop.permute.xlu0 %209
    %vm211 = vcmp.lt.s32.totalorder %v70, 15
    %v212 = vsel %vm211, %v208, %v210
    %v213 = vsel %vm211, %v206, %v208
    %v214 = vsel %vm211, %v204, %v206
    %v215 = vsel %vm211, %v210, %v204
    %s216 = scalar_lea.vmem %s1, 8
    %v217 = vld [vmem:[%s216] sm:$0xf]
    %v219 = vlaneseq
    %v220 = vshrl.u32 %v219, 7
    %v221 = vsub.s32 0, %v220
    %v222 = vrot.slane %v217, %v221
    %v223 = vlaneseq
    %v224 = vshrl.u32 %v223, 7
    %v225 = vsub.s32 1, %v224
    %v226 = vrot.slane %v217, %v225
    %v227 = vlaneseq
    %v228 = vshrl.u32 %v227, 7
    %v229 = vsub.s32 2, %v228
    %v230 = vrot.slane %v217, %v229
    %v231 = vlaneseq
    %v232 = vshrl.u32 %v231, 7
    %v233 = vsub.s32 3, %v232
    %v234 = vrot.slane %v217, %v233
    %v239 = vmul.f32 %v215, %v222
    %v240 = vmul.f32 %v214, %v226
    %v241 = vmul.f32 %v213, %v230
    %v242 = vmul.f32 %v212, %v234
    %s243 = scalar_lea.vmem %s2, 16
    %v244 = vld [vmem:[%s243] sm:$0xff]
    %246 = vset.pattern.permute.xlu0 0
    %247 = vperm.xlu0 %246, %v244
    %v248 = vpop.permute.xlu0 %247
    %v250 = vlaneseq
    %v251 = vshrl.u32 %v250, 7
    %v252 = vsub.s32 0, %v251
    %v253 = vrot.slane %v239, %v252
    %v254 = vlaneseq
    %v255 = vshrl.u32 %v254, 7
    %v256 = vsub.s32 0, %v255
    %v257 = vrot.slane %v240, %v256
    %v258 = vlaneseq
    %v259 = vshrl.u32 %v258, 7
    %v260 = vsub.s32 0, %v259
    %v261 = vrot.slane %v241, %v260
    %v262 = vlaneseq
    %v263 = vshrl.u32 %v262, 7
    %v264 = vsub.s32 0, %v263
    %v265 = vrot.slane %v242, %v264
    %v266 = vmul.f32 %v248, %v253
    %v267 = vmul.f32 %v248, %v257
    %v268 = vmul.f32 %v248, %v261
    %v269 = vmul.f32 %v248, %v265
    %v270 = vadd.f32 %v199, %v266
    %v271 = vadd.f32 %v200, %v267
    %v272 = vadd.f32 %v201, %v268
    %v273 = vadd.f32 %v202, %v269
    %274 = vrot.lane.b32.xlu0 %v44, 1
    %v275 = vpop.permute.xlu0 %274
    %276 = vrot.lane.b32.xlu0 %v48, 1
    %v277 = vpop.permute.xlu0 %276
    %278 = vrot.lane.b32.xlu0 %v52, 1
    %v279 = vpop.permute.xlu0 %278
    %280 = vrot.lane.b32.xlu0 %v56, 1
    %v281 = vpop.permute.xlu0 %280
    %vm282 = vcmp.lt.s32.totalorder %v70, 1
    %v283 = vsel %vm282, %v279, %v281
    %v284 = vsel %vm282, %v277, %v279
    %v285 = vsel %vm282, %v275, %v277
    %v286 = vsel %vm282, %v281, %v275
    %s287 = scalar_lea.vmem %s1, 12
    %v288 = vld [vmem:[%s287] sm:$0xf]
    %v290 = vlaneseq
    %v291 = vshrl.u32 %v290, 7
    %v292 = vsub.s32 0, %v291
    %v293 = vrot.slane %v288, %v292
    %v294 = vlaneseq
    %v295 = vshrl.u32 %v294, 7
    %v296 = vsub.s32 1, %v295
    %v297 = vrot.slane %v288, %v296
    %v298 = vlaneseq
    %v299 = vshrl.u32 %v298, 7
    %v300 = vsub.s32 2, %v299
    %v301 = vrot.slane %v288, %v300
    %v302 = vlaneseq
    %v303 = vshrl.u32 %v302, 7
    %v304 = vsub.s32 3, %v303
    %v305 = vrot.slane %v288, %v304
    %v310 = vmul.f32 %v286, %v293
    %v311 = vmul.f32 %v285, %v297
    %v312 = vmul.f32 %v284, %v301
    %v313 = vmul.f32 %v283, %v305
    %s314 = scalar_lea.vmem %s2, 24
    %v315 = vld [vmem:[%s314] sm:$0xff]
    %317 = vset.pattern.permute.xlu0 0
    %318 = vperm.xlu0 %317, %v315
    %v319 = vpop.permute.xlu0 %318
    %v321 = vlaneseq
    %v322 = vshrl.u32 %v321, 7
    %v323 = vsub.s32 0, %v322
    %v324 = vrot.slane %v310, %v323
    %v325 = vlaneseq
    %v326 = vshrl.u32 %v325, 7
    %v327 = vsub.s32 0, %v326
    %v328 = vrot.slane %v311, %v327
    %v329 = vlaneseq
    %v330 = vshrl.u32 %v329, 7
    %v331 = vsub.s32 0, %v330
    %v332 = vrot.slane %v312, %v331
    %v333 = vlaneseq
    %v334 = vshrl.u32 %v333, 7
    %v335 = vsub.s32 0, %v334
    %v336 = vrot.slane %v313, %v335
    %v337 = vmul.f32 %v319, %v324
    %v338 = vmul.f32 %v319, %v328
    %v339 = vmul.f32 %v319, %v332
    %v340 = vmul.f32 %v319, %v336
    %v341 = vadd.f32 %v270, %v337
    %v342 = vadd.f32 %v271, %v338
    %v343 = vadd.f32 %v272, %v339
    %v344 = vadd.f32 %v273, %v340
    %s345 = scalar_lea.vmem %s2, 32
    %v346 = vld [vmem:[%s345] sm:$0xff]
    %348 = vset.pattern.permute.xlu0 0
    %349 = vperm.xlu0 %348, %v346
    %v350 = vpop.permute.xlu0 %349
    %v352 = vmul.f32 %v350, %v44
    %v353 = vmul.f32 %v350, %v48
    %v354 = vmul.f32 %v350, %v52
    %v355 = vmul.f32 %v350, %v56
    %v356 = vadd.f32 %v341, %v352
    %v357 = vadd.f32 %v342, %v353
    %v358 = vadd.f32 %v343, %v354
    %v359 = vadd.f32 %v344, %v355
    %360 = vrot.lane.b32.xlu0 %v44, 127
    %v361 = vpop.permute.xlu0 %360
    %362 = vrot.lane.b32.xlu0 %v48, 127
    %v363 = vpop.permute.xlu0 %362
    %364 = vrot.lane.b32.xlu0 %v52, 127
    %v365 = vpop.permute.xlu0 %364
    %366 = vrot.lane.b32.xlu0 %v56, 127
    %v367 = vpop.permute.xlu0 %366
    %vm368 = vcmp.lt.s32.totalorder %v70, 127
    %v369 = vsel %vm368, %v365, %v367
    %v370 = vsel %vm368, %v363, %v365
    %v371 = vsel %vm368, %v361, %v363
    %v372 = vsel %vm368, %v367, %v361
    %s373 = scalar_lea.vmem %s1, 20
    %v374 = vld [vmem:[%s373] sm:$0xf]
    %v376 = vlaneseq
    %v377 = vshrl.u32 %v376, 7
    %v378 = vsub.s32 0, %v377
    %v379 = vrot.slane %v374, %v378
    %v380 = vlaneseq
    %v381 = vshrl.u32 %v380, 7
    %v382 = vsub.s32 1, %v381
    %v383 = vrot.slane %v374, %v382
    %v384 = vlaneseq
    %v385 = vshrl.u32 %v384, 7
    %v386 = vsub.s32 2, %v385
    %v387 = vrot.slane %v374, %v386
    %v388 = vlaneseq
    %v389 = vshrl.u32 %v388, 7
    %v390 = vsub.s32 3, %v389
    %v391 = vrot.slane %v374, %v390
    %v396 = vmul.f32 %v371, %v379
    %v397 = vmul.f32 %v370, %v383
    %v398 = vmul.f32 %v369, %v387
    %v399 = vmul.f32 %v372, %v391
    %s400 = scalar_lea.vmem %s2, 40
    %v401 = vld [vmem:[%s400] sm:$0xff]
    %403 = vset.pattern.permute.xlu0 0
    %404 = vperm.xlu0 %403, %v401
    %v405 = vpop.permute.xlu0 %404
    %v407 = vlaneseq
    %v408 = vshrl.u32 %v407, 7
    %v409 = vsub.s32 0, %v408
    %v410 = vrot.slane %v396, %v409
    %v411 = vlaneseq
    %v412 = vshrl.u32 %v411, 7
    %v413 = vsub.s32 0, %v412
    %v414 = vrot.slane %v397, %v413
    %v415 = vlaneseq
    %v416 = vshrl.u32 %v415, 7
    %v417 = vsub.s32 0, %v416
    %v418 = vrot.slane %v398, %v417
    %v419 = vlaneseq
    %v420 = vshrl.u32 %v419, 7
    %v421 = vsub.s32 0, %v420
    %v422 = vrot.slane %v399, %v421
    %v423 = vmul.f32 %v405, %v410
    %v424 = vmul.f32 %v405, %v414
    %v425 = vmul.f32 %v405, %v418
    %v426 = vmul.f32 %v405, %v422
    %v427 = vadd.f32 %v356, %v423
    %v428 = vadd.f32 %v357, %v424
    %v429 = vadd.f32 %v358, %v425
    %v430 = vadd.f32 %v359, %v426
    %431 = vrot.lane.b32.xlu0 %v44, 113
    %v432 = vpop.permute.xlu0 %431
    %433 = vrot.lane.b32.xlu0 %v48, 113
    %v434 = vpop.permute.xlu0 %433
    %435 = vrot.lane.b32.xlu0 %v52, 113
    %v436 = vpop.permute.xlu0 %435
    %437 = vrot.lane.b32.xlu0 %v56, 113
    %v438 = vpop.permute.xlu0 %437
    %vm439 = vcmp.lt.s32.totalorder %v70, 113
    %v440 = vsel %vm439, %v436, %v438
    %v441 = vsel %vm439, %v434, %v436
    %v442 = vsel %vm439, %v432, %v434
    %v443 = vsel %vm439, %v438, %v432
    %s444 = scalar_lea.vmem %s1, 24
    %v445 = vld [vmem:[%s444] sm:$0xf]
    %v447 = vlaneseq
    %v448 = vshrl.u32 %v447, 7
    %v449 = vsub.s32 0, %v448
    %v450 = vrot.slane %v445, %v449
    %v451 = vlaneseq
    %v452 = vshrl.u32 %v451, 7
    %v453 = vsub.s32 1, %v452
    %v454 = vrot.slane %v445, %v453
    %v455 = vlaneseq
    %v456 = vshrl.u32 %v455, 7
    %v457 = vsub.s32 2, %v456
    %v458 = vrot.slane %v445, %v457
    %v459 = vlaneseq
    %v460 = vshrl.u32 %v459, 7
    %v461 = vsub.s32 3, %v460
    %v462 = vrot.slane %v445, %v461
    %v467 = vmul.f32 %v442, %v450
    %v468 = vmul.f32 %v441, %v454
    %v469 = vmul.f32 %v440, %v458
    %v470 = vmul.f32 %v443, %v462
    %s471 = scalar_lea.vmem %s2, 48
    %v472 = vld [vmem:[%s471] sm:$0xff]
    %474 = vset.pattern.permute.xlu0 0
    %475 = vperm.xlu0 %474, %v472
    %v476 = vpop.permute.xlu0 %475
    %v478 = vlaneseq
    %v479 = vshrl.u32 %v478, 7
    %v480 = vsub.s32 0, %v479
    %v481 = vrot.slane %v467, %v480
    %v482 = vlaneseq
    %v483 = vshrl.u32 %v482, 7
    %v484 = vsub.s32 0, %v483
    %v485 = vrot.slane %v468, %v484
    %v486 = vlaneseq
    %v487 = vshrl.u32 %v486, 7
    %v488 = vsub.s32 0, %v487
    %v489 = vrot.slane %v469, %v488
    %v490 = vlaneseq
    %v491 = vshrl.u32 %v490, 7
    %v492 = vsub.s32 0, %v491
    %v493 = vrot.slane %v470, %v492
    %v494 = vmul.f32 %v476, %v481
    %v495 = vmul.f32 %v476, %v485
    %v496 = vmul.f32 %v476, %v489
    %v497 = vmul.f32 %v476, %v493
    %v498 = vadd.f32 %v427, %v494
    %v499 = vadd.f32 %v428, %v495
    %v500 = vadd.f32 %v429, %v496
    %v501 = vadd.f32 %v430, %v497
    %502 = vrot.lane.b32.xlu0 %v44, 112
    %v503 = vpop.permute.xlu0 %502
    %504 = vrot.lane.b32.xlu0 %v48, 112
    %v505 = vpop.permute.xlu0 %504
    %506 = vrot.lane.b32.xlu0 %v52, 112
    %v507 = vpop.permute.xlu0 %506
    %508 = vrot.lane.b32.xlu0 %v56, 112
    %v509 = vpop.permute.xlu0 %508
    %vm510 = vcmp.lt.s32.totalorder %v70, 112
    %v511 = vsel %vm510, %v507, %v509
    %v512 = vsel %vm510, %v505, %v507
    %v513 = vsel %vm510, %v503, %v505
    %v514 = vsel %vm510, %v509, %v503
    %s515 = scalar_lea.vmem %s1, 28
    %v516 = vld [vmem:[%s515] sm:$0xf]
    %v518 = vlaneseq
    %v519 = vshrl.u32 %v518, 7
    %v520 = vsub.s32 0, %v519
    %v521 = vrot.slane %v516, %v520
    %v522 = vlaneseq
    %v523 = vshrl.u32 %v522, 7
    %v524 = vsub.s32 1, %v523
    %v525 = vrot.slane %v516, %v524
    %v526 = vlaneseq
    %v527 = vshrl.u32 %v526, 7
    %v528 = vsub.s32 2, %v527
    %v529 = vrot.slane %v516, %v528
    %v530 = vlaneseq
    %v531 = vshrl.u32 %v530, 7
    %v532 = vsub.s32 3, %v531
    %v533 = vrot.slane %v516, %v532
    %v538 = vmul.f32 %v513, %v521
    %v539 = vmul.f32 %v512, %v525
    %v540 = vmul.f32 %v511, %v529
    %v541 = vmul.f32 %v514, %v533
    %s542 = scalar_lea.vmem %s2, 56
    %v543 = vld [vmem:[%s542] sm:$0xff]
    %545 = vset.pattern.permute.xlu0 0
    %546 = vperm.xlu0 %545, %v543
    %v547 = vpop.permute.xlu0 %546
    %v549 = vlaneseq
    %v550 = vshrl.u32 %v549, 7
    %v551 = vsub.s32 0, %v550
    %v552 = vrot.slane %v538, %v551
    %v553 = vlaneseq
    %v554 = vshrl.u32 %v553, 7
    %v555 = vsub.s32 0, %v554
    %v556 = vrot.slane %v539, %v555
    %v557 = vlaneseq
    %v558 = vshrl.u32 %v557, 7
    %v559 = vsub.s32 0, %v558
    %v560 = vrot.slane %v540, %v559
    %v561 = vlaneseq
    %v562 = vshrl.u32 %v561, 7
    %v563 = vsub.s32 0, %v562
    %v564 = vrot.slane %v541, %v563
    %v565 = vmul.f32 %v547, %v552
    %v566 = vmul.f32 %v547, %v556
    %v567 = vmul.f32 %v547, %v560
    %v568 = vmul.f32 %v547, %v564
    %v569 = vadd.f32 %v498, %v565
    %v570 = vadd.f32 %v499, %v566
    %v571 = vadd.f32 %v500, %v567
    %v572 = vadd.f32 %v501, %v568
    %573 = vrot.lane.b32.xlu0 %v44, 111
    %v574 = vpop.permute.xlu0 %573
    %575 = vrot.lane.b32.xlu0 %v48, 111
    %v576 = vpop.permute.xlu0 %575
    %577 = vrot.lane.b32.xlu0 %v52, 111
    %v578 = vpop.permute.xlu0 %577
    %579 = vrot.lane.b32.xlu0 %v56, 111
    %v580 = vpop.permute.xlu0 %579
    %vm581 = vcmp.lt.s32.totalorder %v70, 111
    %v582 = vsel %vm581, %v578, %v580
    %v583 = vsel %vm581, %v576, %v578
    %v584 = vsel %vm581, %v574, %v576
    %v585 = vsel %vm581, %v580, %v574
    %s586 = scalar_lea.vmem %s1, 32
    %v587 = vld [vmem:[%s586] sm:$0xf]
    %v589 = vlaneseq
    %v590 = vshrl.u32 %v589, 7
    %v591 = vsub.s32 0, %v590
    %v592 = vrot.slane %v587, %v591
    %v593 = vlaneseq
    %v594 = vshrl.u32 %v593, 7
    %v595 = vsub.s32 1, %v594
    %v596 = vrot.slane %v587, %v595
    %v597 = vlaneseq
    %v598 = vshrl.u32 %v597, 7
    %v599 = vsub.s32 2, %v598
    %v600 = vrot.slane %v587, %v599
    %v601 = vlaneseq
    %v602 = vshrl.u32 %v601, 7
    %v603 = vsub.s32 3, %v602
    %v604 = vrot.slane %v587, %v603
    %v609 = vmul.f32 %v584, %v592
    %v610 = vmul.f32 %v583, %v596
    %v611 = vmul.f32 %v582, %v600
    %v612 = vmul.f32 %v585, %v604
    %s613 = scalar_lea.vmem %s2, 64
    %v614 = vld [vmem:[%s613] sm:$0xff]
    %616 = vset.pattern.permute.xlu0 0
    %617 = vperm.xlu0 %616, %v614
    %v618 = vpop.permute.xlu0 %617
    %v620 = vlaneseq
    %v621 = vshrl.u32 %v620, 7
    %v622 = vsub.s32 0, %v621
    %v623 = vrot.slane %v609, %v622
    %v624 = vlaneseq
    %v625 = vshrl.u32 %v624, 7
    %v626 = vsub.s32 0, %v625
    %v627 = vrot.slane %v610, %v626
    %v628 = vlaneseq
    %v629 = vshrl.u32 %v628, 7
    %v630 = vsub.s32 0, %v629
    %v631 = vrot.slane %v611, %v630
    %v632 = vlaneseq
    %v633 = vshrl.u32 %v632, 7
    %v634 = vsub.s32 0, %v633
    %v635 = vrot.slane %v612, %v634
    %v636 = vmul.f32 %v618, %v623
    %v637 = vmul.f32 %v618, %v627
    %v638 = vmul.f32 %v618, %v631
    %v639 = vmul.f32 %v618, %v635
    %v640 = vadd.f32 %v569, %v636
    %v641 = vadd.f32 %v570, %v637
    %v642 = vadd.f32 %v571, %v638
    %v643 = vadd.f32 %v572, %v639
    %645 = vset.pattern.permute.xlu0 0
    %646 = vperm.xlu0 %645, %v39
    %v647 = vpop.permute.xlu0 %646
    %v649 = vadd.f32 %v640, %v647
    %v650 = vadd.f32 %v641, %v647
    %v651 = vadd.f32 %v642, %v647
    %v652 = vadd.f32 %v643, %v647
    %v653 = vmax.f32 %v649, 0.0
    %v654 = vmax.f32 %v650, 0.0
    %v655 = vmax.f32 %v651, 0.0
    %v656 = vmax.f32 %v652, 0.0
    %v657 = vld [vmem:[%s5] sm:$0xf]
    %658 = vrot.lane.b32.xlu0 %v653, 17
    %v659 = vpop.permute.xlu0 %658
    %660 = vrot.lane.b32.xlu0 %v654, 17
    %v661 = vpop.permute.xlu0 %660
    %662 = vrot.lane.b32.xlu0 %v655, 17
    %v663 = vpop.permute.xlu0 %662
    %664 = vrot.lane.b32.xlu0 %v656, 17
    %v665 = vpop.permute.xlu0 %664
    %v666 = vsel %vm71, %v663, %v665
    %v667 = vsel %vm71, %v661, %v663
    %v668 = vsel %vm71, %v659, %v661
    %v669 = vsel %vm71, %v665, %v659
    %v670 = vmul.f32 %v669, %v81
    %v671 = vmul.f32 %v668, %v85
    %v672 = vmul.f32 %v667, %v89
    %v673 = vmul.f32 %v666, %v93
    %v674 = vld [vmem:[%s4] sm:$0xf]
    %675 = vrot.lane.b32.xlu0 %v653, 16
    %v676 = vpop.permute.xlu0 %675
    %677 = vrot.lane.b32.xlu0 %v654, 16
    %v678 = vpop.permute.xlu0 %677
    %679 = vrot.lane.b32.xlu0 %v655, 16
    %v680 = vpop.permute.xlu0 %679
    %681 = vrot.lane.b32.xlu0 %v656, 16
    %v682 = vpop.permute.xlu0 %681
    %v683 = vsel %vm140, %v680, %v682
    %v684 = vsel %vm140, %v678, %v680
    %v685 = vsel %vm140, %v676, %v678
    %v686 = vsel %vm140, %v682, %v676
    %v687 = vmul.f32 %v686, %v151
    %v688 = vmul.f32 %v685, %v155
    %v689 = vmul.f32 %v684, %v159
    %v690 = vmul.f32 %v683, %v163
    %s691 = scalar_lea.vmem %s4, 4
    %v692 = vld [vmem:[%s691] sm:$0xf]
    %vm693 = vcmask 64512
    %v695 = vsel %vm693, %v692, 0
    %697 = vmatprep.subr.mxu0 %v688
    %698 = vmatpush1.msra.mxu0 %v687
    %699 = vmatprep.subr.mxu0 0.0
    %700 = vmatpush1.msra.mxu0 0.0
    %701 = vmatprep.subr.mxu0 0.0
    %702 = vmatpush1.msra.mxu0 0.0
    %703 = vmatprep.subr.mxu0 0.0
    %704 = vmatpush1.msra.mxu0 0.0
    %705 = vmatprep.subr.mxu0 0.0
    %706 = vmatpush1.msra.mxu0 0.0
    %707 = vmatprep.subr.mxu0 0.0
    %708 = vmatpush1.msra.mxu0 0.0
    %709 = vmatprep.subr.mxu0 0.0
    %710 = vmatpush1.msra.mxu0 0.0
    %711 = vmatprep.subr.mxu0 0.0
    %712 = vmatpush1.msra.mxu0 0.0
    %713 = vmatprep.subr.mxu0 0.0
    %714 = vmatpush1.msra.mxu0 0.0
    %715 = vmatprep.subr.mxu0 0.0
    %716 = vmatpush1.msra.mxu0 0.0
    %717 = vmatprep.subr.mxu0 0.0
    %718 = vmatpush1.msra.mxu0 0.0
    %719 = vmatprep.subr.mxu0 0.0
    %720 = vmatpush1.msra.mxu0 0.0
    %721 = vmatprep.subr.mxu0 0.0
    %722 = vmatpush1.msra.mxu0 0.0
    %723 = vmatprep.subr.mxu0 0.0
    %724 = vmatpush1.msra.mxu0 0.0
    %725 = vmatprep.subr.mxu0 0.0
    %726 = vmatpush1.msra.mxu0 0.0
    %727 = vmatprep.subr.mxu0 0.0
    %728 = vmatpush1.msra.mxu0 0.0
    %729 = vmatprep.subr.mxu0 0.0
    %730 = vmatpush1.msra.mxu0 0.0
    %731 = vmatprep.subr.mxu0 0.0
    %732 = vmatpush1.msra.mxu0 0.0
    %733 = vmatprep.subr.mxu0 0.0
    %734 = vmatpush1.msra.mxu0 0.0
    %735 = vmatprep.subr.mxu0 0.0
    %736 = vmatpush1.msra.mxu0 0.0
    %737 = vmatprep.subr.mxu0 0.0
    %738 = vmatpush1.msra.mxu0 0.0
    %739 = vmatprep.subr.mxu0 0.0
    %740 = vmatpush1.msra.mxu0 0.0
    %741 = vmatprep.subr.mxu0 0.0
    %742 = vmatpush1.msra.mxu0 0.0
    %743 = vmatprep.subr.mxu0 0.0
    %744 = vmatpush1.msra.mxu0 0.0
    %745 = vmatprep.subr.mxu0 0.0
    %746 = vmatpush1.msra.mxu0 0.0
    %747 = vmatprep.subr.mxu0 0.0
    %748 = vmatpush1.msra.mxu0 0.0
    %749 = vmatprep.subr.mxu0 0.0
    %750 = vmatpush1.msra.mxu0 0.0
    %751 = vmatprep.subr.mxu0 0.0
    %752 = vmatpush1.msra.mxu0 0.0
    %753 = vmatprep.subr.mxu0 0.0
    %754 = vmatpush1.msra.mxu0 0.0
    %755 = vmatprep.subr.mxu0 0.0
    %756 = vmatpush1.msra.mxu0 0.0
    %757 = vmatprep.subr.mxu0 0.0
    %758 = vmatpush1.msra.mxu0 0.0
    %759 = vmatprep.subr.mxu0 0.0
    %760 = vmatpush1.msra.mxu0 0.0
    %761 = vmatprep.mubr.f32.mxu0 0.0
    %762 = vmatmul.mubr.f32.gmra.mrb[0].mxu0 %v695
    %v763 = vpop.f32.mrb[0].mxu0
    %v764 = vadd.f32 0.0, %v763
    %v765 = vpop.f32.mrb[0].mxu0
    %v766 = vadd.f32 0.0, %v765
    %767 = vdwg.mxu0
    %768 = vmatprep.subr.mxu0 %v690
    %769 = vmatpush1.msra.mxu0 %v689
    %770 = vmatprep.subr.mxu0 0.0
    %771 = vmatpush1.msra.mxu0 0.0
    %772 = vmatprep.subr.mxu0 0.0
    %773 = vmatpush1.msra.mxu0 0.0
    %774 = vmatprep.subr.mxu0 0.0
    %775 = vmatpush1.msra.mxu0 0.0
    %776 = vmatprep.subr.mxu0 0.0
    %777 = vmatpush1.msra.mxu0 0.0
    %778 = vmatprep.subr.mxu0 0.0
    %779 = vmatpush1.msra.mxu0 0.0
    %780 = vmatprep.subr.mxu0 0.0
    %781 = vmatpush1.msra.mxu0 0.0
    %782 = vmatprep.subr.mxu0 0.0
    %783 = vmatpush1.msra.mxu0 0.0
    %784 = vmatprep.subr.mxu0 0.0
    %785 = vmatpush1.msra.mxu0 0.0
    %786 = vmatprep.subr.mxu0 0.0
    %787 = vmatpush1.msra.mxu0 0.0
    %788 = vmatprep.subr.mxu0 0.0
    %789 = vmatpush1.msra.mxu0 0.0
    %790 = vmatprep.subr.mxu0 0.0
    %791 = vmatpush1.msra.mxu0 0.0
    %792 = vmatprep.subr.mxu0 0.0
    %793 = vmatpush1.msra.mxu0 0.0
    %794 = vmatprep.subr.mxu0 0.0
    %795 = vmatpush1.msra.mxu0 0.0
    %796 = vmatprep.subr.mxu0 0.0
    %797 = vmatpush1.msra.mxu0 0.0
    %798 = vmatprep.subr.mxu0 0.0
    %799 = vmatpush1.msra.mxu0 0.0
    %800 = vmatprep.subr.mxu0 0.0
    %801 = vmatpush1.msra.mxu0 0.0
    %802 = vmatprep.subr.mxu0 0.0
    %803 = vmatpush1.msra.mxu0 0.0
    %804 = vmatprep.subr.mxu0 0.0
    %805 = vmatpush1.msra.mxu0 0.0
    %806 = vmatprep.subr.mxu0 0.0
    %807 = vmatpush1.msra.mxu0 0.0
    %808 = vmatprep.subr.mxu0 0.0
    %809 = vmatpush1.msra.mxu0 0.0
    %810 = vmatprep.subr.mxu0 0.0
    %811 = vmatpush1.msra.mxu0 0.0
    %812 = vmatprep.subr.mxu0 0.0
    %813 = vmatpush1.msra.mxu0 0.0
    %814 = vmatprep.subr.mxu0 0.0
    %815 = vmatpush1.msra.mxu0 0.0
    %816 = vmatprep.subr.mxu0 0.0
    %817 = vmatpush1.msra.mxu0 0.0
    %818 = vmatprep.subr.mxu0 0.0
    %819 = vmatpush1.msra.mxu0 0.0
    %820 = vmatprep.subr.mxu0 0.0
    %821 = vmatpush1.msra.mxu0 0.0
    %822 = vmatprep.subr.mxu0 0.0
    %823 = vmatpush1.msra.mxu0 0.0
    %824 = vmatprep.subr.mxu0 0.0
    %825 = vmatpush1.msra.mxu0 0.0
    %826 = vmatprep.subr.mxu0 0.0
    %827 = vmatpush1.msra.mxu0 0.0
    %828 = vmatprep.subr.mxu0 0.0
    %829 = vmatpush1.msra.mxu0 0.0
    %830 = vmatprep.subr.mxu0 0.0
    %831 = vmatpush1.msra.mxu0 0.0
    %832 = vmatprep.mubr.f32.mxu0 0.0
    %833 = vmatmul.mubr.f32.gmra.mrb[0].mxu0 %v695
    %v834 = vpop.f32.mrb[0].mxu0
    %v835 = vadd.f32 0.0, %v834
    %v836 = vpop.f32.mrb[0].mxu0
    %v837 = vadd.f32 0.0, %v836
    %838 = vdwg.mxu0
    %v840 = vsel %vm693, %v674, 0
    %842 = vmatprep.subr.mxu0 %v671
    %843 = vmatpush1.msra.mxu0 %v670
    %844 = vmatprep.subr.mxu0 0.0
    %845 = vmatpush1.msra.mxu0 0.0
    %846 = vmatprep.subr.mxu0 0.0
    %847 = vmatpush1.msra.mxu0 0.0
    %848 = vmatprep.subr.mxu0 0.0
    %849 = vmatpush1.msra.mxu0 0.0
    %850 = vmatprep.subr.mxu0 0.0
    %851 = vmatpush1.msra.mxu0 0.0
    %852 = vmatprep.subr.mxu0 0.0
    %853 = vmatpush1.msra.mxu0 0.0
    %854 = vmatprep.subr.mxu0 0.0
    %855 = vmatpush1.msra.mxu0 0.0
    %856 = vmatprep.subr.mxu0 0.0
    %857 = vmatpush1.msra.mxu0 0.0
    %858 = vmatprep.subr.mxu0 0.0
    %859 = vmatpush1.msra.mxu0 0.0
    %860 = vmatprep.subr.mxu0 0.0
    %861 = vmatpush1.msra.mxu0 0.0
    %862 = vmatprep.subr.mxu0 0.0
    %863 = vmatpush1.msra.mxu0 0.0
    %864 = vmatprep.subr.mxu0 0.0
    %865 = vmatpush1.msra.mxu0 0.0
    %866 = vmatprep.subr.mxu0 0.0
    %867 = vmatpush1.msra.mxu0 0.0
    %868 = vmatprep.subr.mxu0 0.0
    %869 = vmatpush1.msra.mxu0 0.0
    %870 = vmatprep.subr.mxu0 0.0
    %871 = vmatpush1.msra.mxu0 0.0
    %872 = vmatprep.subr.mxu0 0.0
    %873 = vmatpush1.msra.mxu0 0.0
    %874 = vmatprep.subr.mxu0 0.0
    %875 = vmatpush1.msra.mxu0 0.0
    %876 = vmatprep.subr.mxu0 0.0
    %877 = vmatpush1.msra.mxu0 0.0
    %878 = vmatprep.subr.mxu0 0.0
    %879 = vmatpush1.msra.mxu0 0.0
    %880 = vmatprep.subr.mxu0 0.0
    %881 = vmatpush1.msra.mxu0 0.0
    %882 = vmatprep.subr.mxu0 0.0
    %883 = vmatpush1.msra.mxu0 0.0
    %884 = vmatprep.subr.mxu0 0.0
    %885 = vmatpush1.msra.mxu0 0.0
    %886 = vmatprep.subr.mxu0 0.0
    %887 = vmatpush1.msra.mxu0 0.0
    %888 = vmatprep.subr.mxu0 0.0
    %889 = vmatpush1.msra.mxu0 0.0
    %890 = vmatprep.subr.mxu0 0.0
    %891 = vmatpush1.msra.mxu0 0.0
    %892 = vmatprep.subr.mxu0 0.0
    %893 = vmatpush1.msra.mxu0 0.0
    %894 = vmatprep.subr.mxu0 0.0
    %895 = vmatpush1.msra.mxu0 0.0
    %896 = vmatprep.subr.mxu0 0.0
    %897 = vmatpush1.msra.mxu0 0.0
    %898 = vmatprep.subr.mxu0 0.0
    %899 = vmatpush1.msra.mxu0 0.0
    %900 = vmatprep.subr.mxu0 0.0
    %901 = vmatpush1.msra.mxu0 0.0
    %902 = vmatprep.subr.mxu0 0.0
    %903 = vmatpush1.msra.mxu0 0.0
    %904 = vmatprep.subr.mxu0 0.0
    %905 = vmatpush1.msra.mxu0 0.0
    %906 = vmatprep.mubr.f32.mxu0 0.0
    %907 = vmatmul.mubr.f32.gmra.mrb[0].mxu0 %v840
    %v908 = vpop.f32.mrb[0].mxu0
    %v909 = vadd.f32 %v764, %v908
    %v910 = vpop.f32.mrb[0].mxu0
    %v911 = vadd.f32 %v766, %v910
    %912 = vdwg.mxu0
    %913 = vmatprep.subr.mxu0 %v673
    %914 = vmatpush1.msra.mxu0 %v672
    %915 = vmatprep.subr.mxu0 0.0
    %916 = vmatpush1.msra.mxu0 0.0
    %917 = vmatprep.subr.mxu0 0.0
    %918 = vmatpush1.msra.mxu0 0.0
    %919 = vmatprep.subr.mxu0 0.0
    %920 = vmatpush1.msra.mxu0 0.0
    %921 = vmatprep.subr.mxu0 0.0
    %922 = vmatpush1.msra.mxu0 0.0
    %923 = vmatprep.subr.mxu0 0.0
    %924 = vmatpush1.msra.mxu0 0.0
    %925 = vmatprep.subr.mxu0 0.0
    %926 = vmatpush1.msra.mxu0 0.0
    %927 = vmatprep.subr.mxu0 0.0
    %928 = vmatpush1.msra.mxu0 0.0
    %929 = vmatprep.subr.mxu0 0.0
    %930 = vmatpush1.msra.mxu0 0.0
    %931 = vmatprep.subr.mxu0 0.0
    %932 = vmatpush1.msra.mxu0 0.0
    %933 = vmatprep.subr.mxu0 0.0
    %934 = vmatpush1.msra.mxu0 0.0
    %935 = vmatprep.subr.mxu0 0.0
    %936 = vmatpush1.msra.mxu0 0.0
    %937 = vmatprep.subr.mxu0 0.0
    %938 = vmatpush1.msra.mxu0 0.0
    %939 = vmatprep.subr.mxu0 0.0
    %940 = vmatpush1.msra.mxu0 0.0
    %941 = vmatprep.subr.mxu0 0.0
    %942 = vmatpush1.msra.mxu0 0.0
    %943 = vmatprep.subr.mxu0 0.0
    %944 = vmatpush1.msra.mxu0 0.0
    %945 = vmatprep.subr.mxu0 0.0
    %946 = vmatpush1.msra.mxu0 0.0
    %947 = vmatprep.subr.mxu0 0.0
    %948 = vmatpush1.msra.mxu0 0.0
    %949 = vmatprep.subr.mxu0 0.0
    %950 = vmatpush1.msra.mxu0 0.0
    %951 = vmatprep.subr.mxu0 0.0
    %952 = vmatpush1.msra.mxu0 0.0
    %953 = vmatprep.subr.mxu0 0.0
    %954 = vmatpush1.msra.mxu0 0.0
    %955 = vmatprep.subr.mxu0 0.0
    %956 = vmatpush1.msra.mxu0 0.0
    %957 = vmatprep.subr.mxu0 0.0
    %958 = vmatpush1.msra.mxu0 0.0
    %959 = vmatprep.subr.mxu0 0.0
    %960 = vmatpush1.msra.mxu0 0.0
    %961 = vmatprep.subr.mxu0 0.0
    %962 = vmatpush1.msra.mxu0 0.0
    %963 = vmatprep.subr.mxu0 0.0
    %964 = vmatpush1.msra.mxu0 0.0
    %965 = vmatprep.subr.mxu0 0.0
    %966 = vmatpush1.msra.mxu0 0.0
    %967 = vmatprep.subr.mxu0 0.0
    %968 = vmatpush1.msra.mxu0 0.0
    %969 = vmatprep.subr.mxu0 0.0
    %970 = vmatpush1.msra.mxu0 0.0
    %971 = vmatprep.subr.mxu0 0.0
    %972 = vmatpush1.msra.mxu0 0.0
    %973 = vmatprep.subr.mxu0 0.0
    %974 = vmatpush1.msra.mxu0 0.0
    %975 = vmatprep.subr.mxu0 0.0
    %976 = vmatpush1.msra.mxu0 0.0
    %977 = vmatprep.mubr.f32.mxu0 0.0
    %978 = vmatmul.mubr.f32.gmra.mrb[0].mxu0 %v840
    %v979 = vpop.f32.mrb[0].mxu0
    %v980 = vadd.f32 %v835, %v979
    %v981 = vpop.f32.mrb[0].mxu0
    %v982 = vadd.f32 %v837, %v981
    %983 = vdwg.mxu0
    %984 = vrot.lane.b32.xlu0 %v653, 15
    %v985 = vpop.permute.xlu0 %984
    %986 = vrot.lane.b32.xlu0 %v654, 15
    %v987 = vpop.permute.xlu0 %986
    %988 = vrot.lane.b32.xlu0 %v655, 15
    %v989 = vpop.permute.xlu0 %988
    %990 = vrot.lane.b32.xlu0 %v656, 15
    %v991 = vpop.permute.xlu0 %990
    %v992 = vsel %vm211, %v989, %v991
    %v993 = vsel %vm211, %v987, %v989
    %v994 = vsel %vm211, %v985, %v987
    %v995 = vsel %vm211, %v991, %v985
    %v996 = vmul.f32 %v995, %v222
    %v997 = vmul.f32 %v994, %v226
    %v998 = vmul.f32 %v993, %v230
    %v999 = vmul.f32 %v992, %v234
    %s1000 = scalar_lea.vmem %s4, 8
    %v1001 = vld [vmem:[%s1000] sm:$0xf]
    %v1003 = vsel %vm693, %v1001, 0
    %1005 = vmatprep.subr.mxu0 %v997
    %1006 = vmatpush1.msra.mxu0 %v996
    %1007 = vmatprep.subr.mxu0 0.0
    %1008 = vmatpush1.msra.mxu0 0.0
    %1009 = vmatprep.subr.mxu0 0.0
    %1010 = vmatpush1.msra.mxu0 0.0
    %1011 = vmatprep.subr.mxu0 0.0
    %1012 = vmatpush1.msra.mxu0 0.0
    %1013 = vmatprep.subr.mxu0 0.0
    %1014 = vmatpush1.msra.mxu0 0.0
    %1015 = vmatprep.subr.mxu0 0.0
    %1016 = vmatpush1.msra.mxu0 0.0
    %1017 = vmatprep.subr.mxu0 0.0
    %1018 = vmatpush1.msra.mxu0 0.0
    %1019 = vmatprep.subr.mxu0 0.0
    %1020 = vmatpush1.msra.mxu0 0.0
    %1021 = vmatprep.subr.mxu0 0.0
    %1022 = vmatpush1.msra.mxu0 0.0
    %1023 = vmatprep.subr.mxu0 0.0
    %1024 = vmatpush1.msra.mxu0 0.0
    %1025 = vmatprep.subr.mxu0 0.0
    %1026 = vmatpush1.msra.mxu0 0.0
    %1027 = vmatprep.subr.mxu0 0.0
    %1028 = vmatpush1.msra.mxu0 0.0
    %1029 = vmatprep.subr.mxu0 0.0
    %1030 = vmatpush1.msra.mxu0 0.0
    %1031 = vmatprep.subr.mxu0 0.0
    %1032 = vmatpush1.msra.mxu0 0.0
    %1033 = vmatprep.subr.mxu0 0.0
    %1034 = vmatpush1.msra.mxu0 0.0
    %1035 = vmatprep.subr.mxu0 0.0
    %1036 = vmatpush1.msra.mxu0 0.0
    %1037 = vmatprep.subr.mxu0 0.0
    %1038 = vmatpush1.msra.mxu0 0.0
    %1039 = vmatprep.subr.mxu0 0.0
    %1040 = vmatpush1.msra.mxu0 0.0
    %1041 = vmatprep.subr.mxu0 0.0
    %1042 = vmatpush1.msra.mxu0 0.0
    %1043 = vmatprep.subr.mxu0 0.0
    %1044 = vmatpush1.msra.mxu0 0.0
    %1045 = vmatprep.subr.mxu0 0.0
    %1046 = vmatpush1.msra.mxu0 0.0
    %1047 = vmatprep.subr.mxu0 0.0
    %1048 = vmatpush1.msra.mxu0 0.0
    %1049 = vmatprep.subr.mxu0 0.0
    %1050 = vmatpush1.msra.mxu0 0.0
    %1051 = vmatprep.subr.mxu0 0.0
    %1052 = vmatpush1.msra.mxu0 0.0
    %1053 = vmatprep.subr.mxu0 0.0
    %1054 = vmatpush1.msra.mxu0 0.0
    %1055 = vmatprep.subr.mxu0 0.0
    %1056 = vmatpush1.msra.mxu0 0.0
    %1057 = vmatprep.subr.mxu0 0.0
    %1058 = vmatpush1.msra.mxu0 0.0
    %1059 = vmatprep.subr.mxu0 0.0
    %1060 = vmatpush1.msra.mxu0 0.0
    %1061 = vmatprep.subr.mxu0 0.0
    %1062 = vmatpush1.msra.mxu0 0.0
    %1063 = vmatprep.subr.mxu0 0.0
    %1064 = vmatpush1.msra.mxu0 0.0
    %1065 = vmatprep.subr.mxu0 0.0
    %1066 = vmatpush1.msra.mxu0 0.0
    %1067 = vmatprep.subr.mxu0 0.0
    %1068 = vmatpush1.msra.mxu0 0.0
    %1069 = vmatprep.mubr.f32.mxu0 0.0
    %1070 = vmatmul.mubr.f32.gmra.mrb[0].mxu0 %v1003
    %v1071 = vpop.f32.mrb[0].mxu0
    %v1072 = vadd.f32 0.0, %v1071
    %v1073 = vpop.f32.mrb[0].mxu0
    %v1074 = vadd.f32 0.0, %v1073
    %1075 = vdwg.mxu0
    %1076 = vmatprep.subr.mxu0 %v999
    %1077 = vmatpush1.msra.mxu0 %v998
    %1078 = vmatprep.subr.mxu0 0.0
    %1079 = vmatpush1.msra.mxu0 0.0
    %1080 = vmatprep.subr.mxu0 0.0
    %1081 = vmatpush1.msra.mxu0 0.0
    %1082 = vmatprep.subr.mxu0 0.0
    %1083 = vmatpush1.msra.mxu0 0.0
    %1084 = vmatprep.subr.mxu0 0.0
    %1085 = vmatpush1.msra.mxu0 0.0
    %1086 = vmatprep.subr.mxu0 0.0
    %1087 = vmatpush1.msra.mxu0 0.0
    %1088 = vmatprep.subr.mxu0 0.0
    %1089 = vmatpush1.msra.mxu0 0.0
    %1090 = vmatprep.subr.mxu0 0.0
    %1091 = vmatpush1.msra.mxu0 0.0
    %1092 = vmatprep.subr.mxu0 0.0
    %1093 = vmatpush1.msra.mxu0 0.0
    %1094 = vmatprep.subr.mxu0 0.0
    %1095 = vmatpush1.msra.mxu0 0.0
    %1096 = vmatprep.subr.mxu0 0.0
    %1097 = vmatpush1.msra.mxu0 0.0
    %1098 = vmatprep.subr.mxu0 0.0
    %1099 = vmatpush1.msra.mxu0 0.0
    %1100 = vmatprep.subr.mxu0 0.0
    %1101 = vmatpush1.msra.mxu0 0.0
    %1102 = vmatprep.subr.mxu0 0.0
    %1103 = vmatpush1.msra.mxu0 0.0
    %1104 = vmatprep.subr.mxu0 0.0
    %1105 = vmatpush1.msra.mxu0 0.0
    %1106 = vmatprep.subr.mxu0 0.0
    %1107 = vmatpush1.msra.mxu0 0.0
    %1108 = vmatprep.subr.mxu0 0.0
    %1109 = vmatpush1.msra.mxu0 0.0
    %1110 = vmatprep.subr.mxu0 0.0
    %1111 = vmatpush1.msra.mxu0 0.0
    %1112 = vmatprep.subr.mxu0 0.0
    %1113 = vmatpush1.msra.mxu0 0.0
    %1114 = vmatprep.subr.mxu0 0.0
    %1115 = vmatpush1.msra.mxu0 0.0
    %1116 = vmatprep.subr.mxu0 0.0
    %1117 = vmatpush1.msra.mxu0 0.0
    %1118 = vmatprep.subr.mxu0 0.0
    %1119 = vmatpush1.msra.mxu0 0.0
    %1120 = vmatprep.subr.mxu0 0.0
    %1121 = vmatpush1.msra.mxu0 0.0
    %1122 = vmatprep.subr.mxu0 0.0
    %1123 = vmatpush1.msra.mxu0 0.0
    %1124 = vmatprep.subr.mxu0 0.0
    %1125 = vmatpush1.msra.mxu0 0.0
    %1126 = vmatprep.subr.mxu0 0.0
    %1127 = vmatpush1.msra.mxu0 0.0
    %1128 = vmatprep.subr.mxu0 0.0
    %1129 = vmatpush1.msra.mxu0 0.0
    %1130 = vmatprep.subr.mxu0 0.0
    %1131 = vmatpush1.msra.mxu0 0.0
    %1132 = vmatprep.subr.mxu0 0.0
    %1133 = vmatpush1.msra.mxu0 0.0
    %1134 = vmatprep.subr.mxu0 0.0
    %1135 = vmatpush1.msra.mxu0 0.0
    %1136 = vmatprep.subr.mxu0 0.0
    %1137 = vmatpush1.msra.mxu0 0.0
    %1138 = vmatprep.subr.mxu0 0.0
    %1139 = vmatpush1.msra.mxu0 0.0
    %1140 = vmatprep.mubr.f32.mxu0 0.0
    %1141 = vmatmul.mubr.f32.gmra.mrb[0].mxu0 %v1003
    %v1142 = vpop.f32.mrb[0].mxu0
    %v1143 = vadd.f32 0.0, %v1142
    %v1144 = vpop.f32.mrb[0].mxu0
    %v1145 = vadd.f32 0.0, %v1144
    %1146 = vdwg.mxu0
    %v1147 = vadd.f32 %v909, %v1072
    %v1148 = vadd.f32 %v911, %v1074
    %v1149 = vadd.f32 %v980, %v1143
    %v1150 = vadd.f32 %v982, %v1145
    %1151 = vrot.lane.b32.xlu0 %v653, 1
    %v1152 = vpop.permute.xlu0 %1151
    %1153 = vrot.lane.b32.xlu0 %v654, 1
    %v1154 = vpop.permute.xlu0 %1153
    %1155 = vrot.lane.b32.xlu0 %v655, 1
    %v1156 = vpop.permute.xlu0 %1155
    %1157 = vrot.lane.b32.xlu0 %v656, 1
    %v1158 = vpop.permute.xlu0 %1157
    %v1159 = vsel %vm282, %v1156, %v1158
    %v1160 = vsel %vm282, %v1154, %v1156
    %v1161 = vsel %vm282, %v1152, %v1154
    %v1162 = vsel %vm282, %v1158, %v1152
    %v1163 = vmul.f32 %v1162, %v293
    %v1164 = vmul.f32 %v1161, %v297
    %v1165 = vmul.f32 %v1160, %v301
    %v1166 = vmul.f32 %v1159, %v305
    %s1167 = scalar_lea.vmem %s4, 12
    %v1168 = vld [vmem:[%s1167] sm:$0xf]
    %v1170 = vsel %vm693, %v1168, 0
    %1172 = vmatprep.subr.mxu0 %v1164
    %1173 = vmatpush1.msra.mxu0 %v1163
    %1174 = vmatprep.subr.mxu0 0.0
    %1175 = vmatpush1.msra.mxu0 0.0
    %1176 = vmatprep.subr.mxu0 0.0
    %1177 = vmatpush1.msra.mxu0 0.0
    %1178 = vmatprep.subr.mxu0 0.0
    %1179 = vmatpush1.msra.mxu0 0.0
    %1180 = vmatprep.subr.mxu0 0.0
    %1181 = vmatpush1.msra.mxu0 0.0
    %1182 = vmatprep.subr.mxu0 0.0
    %1183 = vmatpush1.msra.mxu0 0.0
    %1184 = vmatprep.subr.mxu0 0.0
    %1185 = vmatpush1.msra.mxu0 0.0
    %1186 = vmatprep.subr.mxu0 0.0
    %1187 = vmatpush1.msra.mxu0 0.0
    %1188 = vmatprep.subr.mxu0 0.0
    %1189 = vmatpush1.msra.mxu0 0.0
    %1190 = vmatprep.subr.mxu0 0.0
    %1191 = vmatpush1.msra.mxu0 0.0
    %1192 = vmatprep.subr.mxu0 0.0
    %1193 = vmatpush1.msra.mxu0 0.0
    %1194 = vmatprep.subr.mxu0 0.0
    %1195 = vmatpush1.msra.mxu0 0.0
    %1196 = vmatprep.subr.mxu0 0.0
    %1197 = vmatpush1.msra.mxu0 0.0
    %1198 = vmatprep.subr.mxu0 0.0
    %1199 = vmatpush1.msra.mxu0 0.0
    %1200 = vmatprep.subr.mxu0 0.0
    %1201 = vmatpush1.msra.mxu0 0.0
    %1202 = vmatprep.subr.mxu0 0.0
    %1203 = vmatpush1.msra.mxu0 0.0
    %1204 = vmatprep.subr.mxu0 0.0
    %1205 = vmatpush1.msra.mxu0 0.0
    %1206 = vmatprep.subr.mxu0 0.0
    %1207 = vmatpush1.msra.mxu0 0.0
    %1208 = vmatprep.subr.mxu0 0.0
    %1209 = vmatpush1.msra.mxu0 0.0
    %1210 = vmatprep.subr.mxu0 0.0
    %1211 = vmatpush1.msra.mxu0 0.0
    %1212 = vmatprep.subr.mxu0 0.0
    %1213 = vmatpush1.msra.mxu0 0.0
    %1214 = vmatprep.subr.mxu0 0.0
    %1215 = vmatpush1.msra.mxu0 0.0
    %1216 = vmatprep.subr.mxu0 0.0
    %1217 = vmatpush1.msra.mxu0 0.0
    %1218 = vmatprep.subr.mxu0 0.0
    %1219 = vmatpush1.msra.mxu0 0.0
    %1220 = vmatprep.subr.mxu0 0.0
    %1221 = vmatpush1.msra.mxu0 0.0
    %1222 = vmatprep.subr.mxu0 0.0
    %1223 = vmatpush1.msra.mxu0 0.0
    %1224 = vmatprep.subr.mxu0 0.0
    %1225 = vmatpush1.msra.mxu0 0.0
    %1226 = vmatprep.subr.mxu0 0.0
    %1227 = vmatpush1.msra.mxu0 0.0
    %1228 = vmatprep.subr.mxu0 0.0
    %1229 = vmatpush1.msra.mxu0 0.0
    %1230 = vmatprep.subr.mxu0 0.0
    %1231 = vmatpush1.msra.mxu0 0.0
    %1232 = vmatprep.subr.mxu0 0.0
    %1233 = vmatpush1.msra.mxu0 0.0
    %1234 = vmatprep.subr.mxu0 0.0
    %1235 = vmatpush1.msra.mxu0 0.0
    %1236 = vmatprep.mubr.f32.mxu0 0.0
    %1237 = vmatmul.mubr.f32.gmra.mrb[0].mxu0 %v1170
    %v1238 = vpop.f32.mrb[0].mxu0
    %v1239 = vadd.f32 0.0, %v1238
    %v1240 = vpop.f32.mrb[0].mxu0
    %v1241 = vadd.f32 0.0, %v1240
    %1242 = vdwg.mxu0
    %1243 = vmatprep.subr.mxu0 %v1166
    %1244 = vmatpush1.msra.mxu0 %v1165
    %1245 = vmatprep.subr.mxu0 0.0
    %1246 = vmatpush1.msra.mxu0 0.0
    %1247 = vmatprep.subr.mxu0 0.0
    %1248 = vmatpush1.msra.mxu0 0.0
    %1249 = vmatprep.subr.mxu0 0.0
    %1250 = vmatpush1.msra.mxu0 0.0
    %1251 = vmatprep.subr.mxu0 0.0
    %1252 = vmatpush1.msra.mxu0 0.0
    %1253 = vmatprep.subr.mxu0 0.0
    %1254 = vmatpush1.msra.mxu0 0.0
    %1255 = vmatprep.subr.mxu0 0.0
    %1256 = vmatpush1.msra.mxu0 0.0
    %1257 = vmatprep.subr.mxu0 0.0
    %1258 = vmatpush1.msra.mxu0 0.0
    %1259 = vmatprep.subr.mxu0 0.0
    %1260 = vmatpush1.msra.mxu0 0.0
    %1261 = vmatprep.subr.mxu0 0.0
    %1262 = vmatpush1.msra.mxu0 0.0
    %1263 = vmatprep.subr.mxu0 0.0
    %1264 = vmatpush1.msra.mxu0 0.0
    %1265 = vmatprep.subr.mxu0 0.0
    %1266 = vmatpush1.msra.mxu0 0.0
    %1267 = vmatprep.subr.mxu0 0.0
    %1268 = vmatpush1.msra.mxu0 0.0
    %1269 = vmatprep.subr.mxu0 0.0
    %1270 = vmatpush1.msra.mxu0 0.0
    %1271 = vmatprep.subr.mxu0 0.0
    %1272 = vmatpush1.msra.mxu0 0.0
    %1273 = vmatprep.subr.mxu0 0.0
    %1274 = vmatpush1.msra.mxu0 0.0
    %1275 = vmatprep.subr.mxu0 0.0
    %1276 = vmatpush1.msra.mxu0 0.0
    %1277 = vmatprep.subr.mxu0 0.0
    %1278 = vmatpush1.msra.mxu0 0.0
    %1279 = vmatprep.subr.mxu0 0.0
    %1280 = vmatpush1.msra.mxu0 0.0
    %1281 = vmatprep.subr.mxu0 0.0
    %1282 = vmatpush1.msra.mxu0 0.0
    %1283 = vmatprep.subr.mxu0 0.0
    %1284 = vmatpush1.msra.mxu0 0.0
    %1285 = vmatprep.subr.mxu0 0.0
    %1286 = vmatpush1.msra.mxu0 0.0
    %1287 = vmatprep.subr.mxu0 0.0
    %1288 = vmatpush1.msra.mxu0 0.0
    %1289 = vmatprep.subr.mxu0 0.0
    %1290 = vmatpush1.msra.mxu0 0.0
    %1291 = vmatprep.subr.mxu0 0.0
    %1292 = vmatpush1.msra.mxu0 0.0
    %1293 = vmatprep.subr.mxu0 0.0
    %1294 = vmatpush1.msra.mxu0 0.0
    %1295 = vmatprep.subr.mxu0 0.0
    %1296 = vmatpush1.msra.mxu0 0.0
    %1297 = vmatprep.subr.mxu0 0.0
    %1298 = vmatpush1.msra.mxu0 0.0
    %1299 = vmatprep.subr.mxu0 0.0
    %1300 = vmatpush1.msra.mxu0 0.0
    %1301 = vmatprep.subr.mxu0 0.0
    %1302 = vmatpush1.msra.mxu0 0.0
    %1303 = vmatprep.subr.mxu0 0.0
    %1304 = vmatpush1.msra.mxu0 0.0
    %1305 = vmatprep.subr.mxu0 0.0
    %1306 = vmatpush1.msra.mxu0 0.0
    %1307 = vmatprep.mubr.f32.mxu0 0.0
    %1308 = vmatmul.mubr.f32.gmra.mrb[0].mxu0 %v1170
    %v1309 = vpop.f32.mrb[0].mxu0
    %v1310 = vadd.f32 0.0, %v1309
    %v1311 = vpop.f32.mrb[0].mxu0
    %v1312 = vadd.f32 0.0, %v1311
    %1313 = vdwg.mxu0
    %v1314 = vadd.f32 %v1147, %v1239
    %v1315 = vadd.f32 %v1148, %v1241
    %v1316 = vadd.f32 %v1149, %v1310
    %v1317 = vadd.f32 %v1150, %v1312
    %s1318 = scalar_lea.vmem %s4, 16
    %v1319 = vld [vmem:[%s1318] sm:$0xf]
    %v1321 = vsel %vm693, %v1319, 0
    %1323 = vmatprep.subr.mxu0 %v654
    %1324 = vmatpush1.msra.mxu0 %v653
    %1325 = vmatprep.subr.mxu0 0.0
    %1326 = vmatpush1.msra.mxu0 0.0
    %1327 = vmatprep.subr.mxu0 0.0
    %1328 = vmatpush1.msra.mxu0 0.0
    %1329 = vmatprep.subr.mxu0 0.0
    %1330 = vmatpush1.msra.mxu0 0.0
    %1331 = vmatprep.subr.mxu0 0.0
    %1332 = vmatpush1.msra.mxu0 0.0
    %1333 = vmatprep.subr.mxu0 0.0
    %1334 = vmatpush1.msra.mxu0 0.0
    %1335 = vmatprep.subr.mxu0 0.0
    %1336 = vmatpush1.msra.mxu0 0.0
    %1337 = vmatprep.subr.mxu0 0.0
    %1338 = vmatpush1.msra.mxu0 0.0
    %1339 = vmatprep.subr.mxu0 0.0
    %1340 = vmatpush1.msra.mxu0 0.0
    %1341 = vmatprep.subr.mxu0 0.0
    %1342 = vmatpush1.msra.mxu0 0.0
    %1343 = vmatprep.subr.mxu0 0.0
    %1344 = vmatpush1.msra.mxu0 0.0
    %1345 = vmatprep.subr.mxu0 0.0
    %1346 = vmatpush1.msra.mxu0 0.0
    %1347 = vmatprep.subr.mxu0 0.0
    %1348 = vmatpush1.msra.mxu0 0.0
    %1349 = vmatprep.subr.mxu0 0.0
    %1350 = vmatpush1.msra.mxu0 0.0
    %1351 = vmatprep.subr.mxu0 0.0
    %1352 = vmatpush1.msra.mxu0 0.0
    %1353 = vmatprep.subr.mxu0 0.0
    %1354 = vmatpush1.msra.mxu0 0.0
    %1355 = vmatprep.subr.mxu0 0.0
    %1356 = vmatpush1.msra.mxu0 0.0
    %1357 = vmatprep.subr.mxu0 0.0
    %1358 = vmatpush1.msra.mxu0 0.0
    %1359 = vmatprep.subr.mxu0 0.0
    %1360 = vmatpush1.msra.mxu0 0.0
    %1361 = vmatprep.subr.mxu0 0.0
    %1362 = vmatpush1.msra.mxu0 0.0
    %1363 = vmatprep.subr.mxu0 0.0
    %1364 = vmatpush1.msra.mxu0 0.0
    %1365 = vmatprep.subr.mxu0 0.0
    %1366 = vmatpush1.msra.mxu0 0.0
    %1367 = vmatprep.subr.mxu0 0.0
    %1368 = vmatpush1.msra.mxu0 0.0
    %1369 = vmatprep.subr.mxu0 0.0
    %1370 = vmatpush1.msra.mxu0 0.0
    %1371 = vmatprep.subr.mxu0 0.0
    %1372 = vmatpush1.msra.mxu0 0.0
    %1373 = vmatprep.subr.mxu0 0.0
    %1374 = vmatpush1.msra.mxu0 0.0
    %1375 = vmatprep.subr.mxu0 0.0
    %1376 = vmatpush1.msra.mxu0 0.0
    %1377 = vmatprep.subr.mxu0 0.0
    %1378 = vmatpush1.msra.mxu0 0.0
    %1379 = vmatprep.subr.mxu0 0.0
    %1380 = vmatpush1.msra.mxu0 0.0
    %1381 = vmatprep.subr.mxu0 0.0
    %1382 = vmatpush1.msra.mxu0 0.0
    %1383 = vmatprep.subr.mxu0 0.0
    %1384 = vmatpush1.msra.mxu0 0.0
    %1385 = vmatprep.subr.mxu0 0.0
    %1386 = vmatpush1.msra.mxu0 0.0
    %1387 = vmatprep.mubr.f32.mxu0 0.0
    %1388 = vmatmul.mubr.f32.gmra.mrb[0].mxu0 %v1321
    %v1389 = vpop.f32.mrb[0].mxu0
    %v1390 = vadd.f32 0.0, %v1389
    %v1391 = vpop.f32.mrb[0].mxu0
    %v1392 = vadd.f32 0.0, %v1391
    %1393 = vdwg.mxu0
    %1394 = vmatprep.subr.mxu0 %v656
    %1395 = vmatpush1.msra.mxu0 %v655
    %1396 = vmatprep.subr.mxu0 0.0
    %1397 = vmatpush1.msra.mxu0 0.0
    %1398 = vmatprep.subr.mxu0 0.0
    %1399 = vmatpush1.msra.mxu0 0.0
    %1400 = vmatprep.subr.mxu0 0.0
    %1401 = vmatpush1.msra.mxu0 0.0
    %1402 = vmatprep.subr.mxu0 0.0
    %1403 = vmatpush1.msra.mxu0 0.0
    %1404 = vmatprep.subr.mxu0 0.0
    %1405 = vmatpush1.msra.mxu0 0.0
    %1406 = vmatprep.subr.mxu0 0.0
    %1407 = vmatpush1.msra.mxu0 0.0
    %1408 = vmatprep.subr.mxu0 0.0
    %1409 = vmatpush1.msra.mxu0 0.0
    %1410 = vmatprep.subr.mxu0 0.0
    %1411 = vmatpush1.msra.mxu0 0.0
    %1412 = vmatprep.subr.mxu0 0.0
    %1413 = vmatpush1.msra.mxu0 0.0
    %1414 = vmatprep.subr.mxu0 0.0
    %1415 = vmatpush1.msra.mxu0 0.0
    %1416 = vmatprep.subr.mxu0 0.0
    %1417 = vmatpush1.msra.mxu0 0.0
    %1418 = vmatprep.subr.mxu0 0.0
    %1419 = vmatpush1.msra.mxu0 0.0
    %1420 = vmatprep.subr.mxu0 0.0
    %1421 = vmatpush1.msra.mxu0 0.0
    %1422 = vmatprep.subr.mxu0 0.0
    %1423 = vmatpush1.msra.mxu0 0.0
    %1424 = vmatprep.subr.mxu0 0.0
    %1425 = vmatpush1.msra.mxu0 0.0
    %1426 = vmatprep.subr.mxu0 0.0
    %1427 = vmatpush1.msra.mxu0 0.0
    %1428 = vmatprep.subr.mxu0 0.0
    %1429 = vmatpush1.msra.mxu0 0.0
    %1430 = vmatprep.subr.mxu0 0.0
    %1431 = vmatpush1.msra.mxu0 0.0
    %1432 = vmatprep.subr.mxu0 0.0
    %1433 = vmatpush1.msra.mxu0 0.0
    %1434 = vmatprep.subr.mxu0 0.0
    %1435 = vmatpush1.msra.mxu0 0.0
    %1436 = vmatprep.subr.mxu0 0.0
    %1437 = vmatpush1.msra.mxu0 0.0
    %1438 = vmatprep.subr.mxu0 0.0
    %1439 = vmatpush1.msra.mxu0 0.0
    %1440 = vmatprep.subr.mxu0 0.0
    %1441 = vmatpush1.msra.mxu0 0.0
    %1442 = vmatprep.subr.mxu0 0.0
    %1443 = vmatpush1.msra.mxu0 0.0
    %1444 = vmatprep.subr.mxu0 0.0
    %1445 = vmatpush1.msra.mxu0 0.0
    %1446 = vmatprep.subr.mxu0 0.0
    %1447 = vmatpush1.msra.mxu0 0.0
    %1448 = vmatprep.subr.mxu0 0.0
    %1449 = vmatpush1.msra.mxu0 0.0
    %1450 = vmatprep.subr.mxu0 0.0
    %1451 = vmatpush1.msra.mxu0 0.0
    %1452 = vmatprep.subr.mxu0 0.0
    %1453 = vmatpush1.msra.mxu0 0.0
    %1454 = vmatprep.subr.mxu0 0.0
    %1455 = vmatpush1.msra.mxu0 0.0
    %1456 = vmatprep.subr.mxu0 0.0
    %1457 = vmatpush1.msra.mxu0 0.0
    %1458 = vmatprep.mubr.f32.mxu0 0.0
    %1459 = vmatmul.mubr.f32.gmra.mrb[0].mxu0 %v1321
    %v1460 = vpop.f32.mrb[0].mxu0
    %v1461 = vadd.f32 0.0, %v1460
    %v1462 = vpop.f32.mrb[0].mxu0
    %v1463 = vadd.f32 0.0, %v1462
    %1464 = vdwg.mxu0
    %v1465 = vadd.f32 %v1314, %v1390
    %v1466 = vadd.f32 %v1315, %v1392
    %v1467 = vadd.f32 %v1316, %v1461
    %v1468 = vadd.f32 %v1317, %v1463
    %1469 = vrot.lane.b32.xlu0 %v653, 127
    %v1470 = vpop.permute.xlu0 %1469
    %1471 = vrot.lane.b32.xlu0 %v654, 127
    %v1472 = vpop.permute.xlu0 %1471
    %1473 = vrot.lane.b32.xlu0 %v655, 127
    %v1474 = vpop.permute.xlu0 %1473
    %1475 = vrot.lane.b32.xlu0 %v656, 127
    %v1476 = vpop.permute.xlu0 %1475
    %v1477 = vsel %vm368, %v1474, %v1476
    %v1478 = vsel %vm368, %v1472, %v1474
    %v1479 = vsel %vm368, %v1470, %v1472
    %v1480 = vsel %vm368, %v1476, %v1470
    %v1481 = vmul.f32 %v1479, %v379
    %v1482 = vmul.f32 %v1478, %v383
    %v1483 = vmul.f32 %v1477, %v387
    %v1484 = vmul.f32 %v1480, %v391
    %s1485 = scalar_lea.vmem %s4, 20
    %v1486 = vld [vmem:[%s1485] sm:$0xf]
    %v1488 = vsel %vm693, %v1486, 0
    %1490 = vmatprep.subr.mxu0 %v1482
    %1491 = vmatpush1.msra.mxu0 %v1481
    %1492 = vmatprep.subr.mxu0 0.0
    %1493 = vmatpush1.msra.mxu0 0.0
    %1494 = vmatprep.subr.mxu0 0.0
    %1495 = vmatpush1.msra.mxu0 0.0
    %1496 = vmatprep.subr.mxu0 0.0
    %1497 = vmatpush1.msra.mxu0 0.0
    %1498 = vmatprep.subr.mxu0 0.0
    %1499 = vmatpush1.msra.mxu0 0.0
    %1500 = vmatprep.subr.mxu0 0.0
    %1501 = vmatpush1.msra.mxu0 0.0
    %1502 = vmatprep.subr.mxu0 0.0
    %1503 = vmatpush1.msra.mxu0 0.0
    %1504 = vmatprep.subr.mxu0 0.0
    %1505 = vmatpush1.msra.mxu0 0.0
    %1506 = vmatprep.subr.mxu0 0.0
    %1507 = vmatpush1.msra.mxu0 0.0
    %1508 = vmatprep.subr.mxu0 0.0
    %1509 = vmatpush1.msra.mxu0 0.0
    %1510 = vmatprep.subr.mxu0 0.0
    %1511 = vmatpush1.msra.mxu0 0.0
    %1512 = vmatprep.subr.mxu0 0.0
    %1513 = vmatpush1.msra.mxu0 0.0
    %1514 = vmatprep.subr.mxu0 0.0
    %1515 = vmatpush1.msra.mxu0 0.0
    %1516 = vmatprep.subr.mxu0 0.0
    %1517 = vmatpush1.msra.mxu0 0.0
    %1518 = vmatprep.subr.mxu0 0.0
    %1519 = vmatpush1.msra.mxu0 0.0
    %1520 = vmatprep.subr.mxu0 0.0
    %1521 = vmatpush1.msra.mxu0 0.0
    %1522 = vmatprep.subr.mxu0 0.0
    %1523 = vmatpush1.msra.mxu0 0.0
    %1524 = vmatprep.subr.mxu0 0.0
    %1525 = vmatpush1.msra.mxu0 0.0
    %1526 = vmatprep.subr.mxu0 0.0
    %1527 = vmatpush1.msra.mxu0 0.0
    %1528 = vmatprep.subr.mxu0 0.0
    %1529 = vmatpush1.msra.mxu0 0.0
    %1530 = vmatprep.subr.mxu0 0.0
    %1531 = vmatpush1.msra.mxu0 0.0
    %1532 = vmatprep.subr.mxu0 0.0
    %1533 = vmatpush1.msra.mxu0 0.0
    %1534 = vmatprep.subr.mxu0 0.0
    %1535 = vmatpush1.msra.mxu0 0.0
    %1536 = vmatprep.subr.mxu0 0.0
    %1537 = vmatpush1.msra.mxu0 0.0
    %1538 = vmatprep.subr.mxu0 0.0
    %1539 = vmatpush1.msra.mxu0 0.0
    %1540 = vmatprep.subr.mxu0 0.0
    %1541 = vmatpush1.msra.mxu0 0.0
    %1542 = vmatprep.subr.mxu0 0.0
    %1543 = vmatpush1.msra.mxu0 0.0
    %1544 = vmatprep.subr.mxu0 0.0
    %1545 = vmatpush1.msra.mxu0 0.0
    %1546 = vmatprep.subr.mxu0 0.0
    %1547 = vmatpush1.msra.mxu0 0.0
    %1548 = vmatprep.subr.mxu0 0.0
    %1549 = vmatpush1.msra.mxu0 0.0
    %1550 = vmatprep.subr.mxu0 0.0
    %1551 = vmatpush1.msra.mxu0 0.0
    %1552 = vmatprep.subr.mxu0 0.0
    %1553 = vmatpush1.msra.mxu0 0.0
    %1554 = vmatprep.mubr.f32.mxu0 0.0
    %1555 = vmatmul.mubr.f32.gmra.mrb[0].mxu0 %v1488
    %v1556 = vpop.f32.mrb[0].mxu0
    %v1557 = vadd.f32 0.0, %v1556
    %v1558 = vpop.f32.mrb[0].mxu0
    %v1559 = vadd.f32 0.0, %v1558
    %1560 = vdwg.mxu0
    %1561 = vmatprep.subr.mxu0 %v1484
    %1562 = vmatpush1.msra.mxu0 %v1483
    %1563 = vmatprep.subr.mxu0 0.0
    %1564 = vmatpush1.msra.mxu0 0.0
    %1565 = vmatprep.subr.mxu0 0.0
    %1566 = vmatpush1.msra.mxu0 0.0
    %1567 = vmatprep.subr.mxu0 0.0
    %1568 = vmatpush1.msra.mxu0 0.0
    %1569 = vmatprep.subr.mxu0 0.0
    %1570 = vmatpush1.msra.mxu0 0.0
    %1571 = vmatprep.subr.mxu0 0.0
    %1572 = vmatpush1.msra.mxu0 0.0
    %1573 = vmatprep.subr.mxu0 0.0
    %1574 = vmatpush1.msra.mxu0 0.0
    %1575 = vmatprep.subr.mxu0 0.0
    %1576 = vmatpush1.msra.mxu0 0.0
    %1577 = vmatprep.subr.mxu0 0.0
    %1578 = vmatpush1.msra.mxu0 0.0
    %1579 = vmatprep.subr.mxu0 0.0
    %1580 = vmatpush1.msra.mxu0 0.0
    %1581 = vmatprep.subr.mxu0 0.0
    %1582 = vmatpush1.msra.mxu0 0.0
    %1583 = vmatprep.subr.mxu0 0.0
    %1584 = vmatpush1.msra.mxu0 0.0
    %1585 = vmatprep.subr.mxu0 0.0
    %1586 = vmatpush1.msra.mxu0 0.0
    %1587 = vmatprep.subr.mxu0 0.0
    %1588 = vmatpush1.msra.mxu0 0.0
    %1589 = vmatprep.subr.mxu0 0.0
    %1590 = vmatpush1.msra.mxu0 0.0
    %1591 = vmatprep.subr.mxu0 0.0
    %1592 = vmatpush1.msra.mxu0 0.0
    %1593 = vmatprep.subr.mxu0 0.0
    %1594 = vmatpush1.msra.mxu0 0.0
    %1595 = vmatprep.subr.mxu0 0.0
    %1596 = vmatpush1.msra.mxu0 0.0
    %1597 = vmatprep.subr.mxu0 0.0
    %1598 = vmatpush1.msra.mxu0 0.0
    %1599 = vmatprep.subr.mxu0 0.0
    %1600 = vmatpush1.msra.mxu0 0.0
    %1601 = vmatprep.subr.mxu0 0.0
    %1602 = vmatpush1.msra.mxu0 0.0
    %1603 = vmatprep.subr.mxu0 0.0
    %1604 = vmatpush1.msra.mxu0 0.0
    %1605 = vmatprep.subr.mxu0 0.0
    %1606 = vmatpush1.msra.mxu0 0.0
    %1607 = vmatprep.subr.mxu0 0.0
    %1608 = vmatpush1.msra.mxu0 0.0
    %1609 = vmatprep.subr.mxu0 0.0
    %1610 = vmatpush1.msra.mxu0 0.0
    %1611 = vmatprep.subr.mxu0 0.0
    %1612 = vmatpush1.msra.mxu0 0.0
    %1613 = vmatprep.subr.mxu0 0.0
    %1614 = vmatpush1.msra.mxu0 0.0
    %1615 = vmatprep.subr.mxu0 0.0
    %1616 = vmatpush1.msra.mxu0 0.0
    %1617 = vmatprep.subr.mxu0 0.0
    %1618 = vmatpush1.msra.mxu0 0.0
    %1619 = vmatprep.subr.mxu0 0.0
    %1620 = vmatpush1.msra.mxu0 0.0
    %1621 = vmatprep.subr.mxu0 0.0
    %1622 = vmatpush1.msra.mxu0 0.0
    %1623 = vmatprep.subr.mxu0 0.0
    %1624 = vmatpush1.msra.mxu0 0.0
    %1625 = vmatprep.mubr.f32.mxu0 0.0
    %1626 = vmatmul.mubr.f32.gmra.mrb[0].mxu0 %v1488
    %v1627 = vpop.f32.mrb[0].mxu0
    %v1628 = vadd.f32 0.0, %v1627
    %v1629 = vpop.f32.mrb[0].mxu0
    %v1630 = vadd.f32 0.0, %v1629
    %1631 = vdwg.mxu0
    %v1632 = vadd.f32 %v1465, %v1557
    %v1633 = vadd.f32 %v1466, %v1559
    %v1634 = vadd.f32 %v1467, %v1628
    %v1635 = vadd.f32 %v1468, %v1630
    %1636 = vrot.lane.b32.xlu0 %v653, 113
    %v1637 = vpop.permute.xlu0 %1636
    %1638 = vrot.lane.b32.xlu0 %v654, 113
    %v1639 = vpop.permute.xlu0 %1638
    %1640 = vrot.lane.b32.xlu0 %v655, 113
    %v1641 = vpop.permute.xlu0 %1640
    %1642 = vrot.lane.b32.xlu0 %v656, 113
    %v1643 = vpop.permute.xlu0 %1642
    %v1644 = vsel %vm439, %v1641, %v1643
    %v1645 = vsel %vm439, %v1639, %v1641
    %v1646 = vsel %vm439, %v1637, %v1639
    %v1647 = vsel %vm439, %v1643, %v1637
    %v1648 = vmul.f32 %v1646, %v450
    %v1649 = vmul.f32 %v1645, %v454
    %v1650 = vmul.f32 %v1644, %v458
    %v1651 = vmul.f32 %v1647, %v462
    %s1652 = scalar_lea.vmem %s4, 24
    %v1653 = vld [vmem:[%s1652] sm:$0xf]
    %v1655 = vsel %vm693, %v1653, 0
    %1657 = vmatprep.subr.mxu0 %v1649
    %1658 = vmatpush1.msra.mxu0 %v1648
    %1659 = vmatprep.subr.mxu0 0.0
    %1660 = vmatpush1.msra.mxu0 0.0
    %1661 = vmatprep.subr.mxu0 0.0
    %1662 = vmatpush1.msra.mxu0 0.0
    %1663 = vmatprep.subr.mxu0 0.0
    %1664 = vmatpush1.msra.mxu0 0.0
    %1665 = vmatprep.subr.mxu0 0.0
    %1666 = vmatpush1.msra.mxu0 0.0
    %1667 = vmatprep.subr.mxu0 0.0
    %1668 = vmatpush1.msra.mxu0 0.0
    %1669 = vmatprep.subr.mxu0 0.0
    %1670 = vmatpush1.msra.mxu0 0.0
    %1671 = vmatprep.subr.mxu0 0.0
    %1672 = vmatpush1.msra.mxu0 0.0
    %1673 = vmatprep.subr.mxu0 0.0
    %1674 = vmatpush1.msra.mxu0 0.0
    %1675 = vmatprep.subr.mxu0 0.0
    %1676 = vmatpush1.msra.mxu0 0.0
    %1677 = vmatprep.subr.mxu0 0.0
    %1678 = vmatpush1.msra.mxu0 0.0
    %1679 = vmatprep.subr.mxu0 0.0
    %1680 = vmatpush1.msra.mxu0 0.0
    %1681 = vmatprep.subr.mxu0 0.0
    %1682 = vmatpush1.msra.mxu0 0.0
    %1683 = vmatprep.subr.mxu0 0.0
    %1684 = vmatpush1.msra.mxu0 0.0
    %1685 = vmatprep.subr.mxu0 0.0
    %1686 = vmatpush1.msra.mxu0 0.0
    %1687 = vmatprep.subr.mxu0 0.0
    %1688 = vmatpush1.msra.mxu0 0.0
    %1689 = vmatprep.subr.mxu0 0.0
    %1690 = vmatpush1.msra.mxu0 0.0
    %1691 = vmatprep.subr.mxu0 0.0
    %1692 = vmatpush1.msra.mxu0 0.0
    %1693 = vmatprep.subr.mxu0 0.0
    %1694 = vmatpush1.msra.mxu0 0.0
    %1695 = vmatprep.subr.mxu0 0.0
    %1696 = vmatpush1.msra.mxu0 0.0
    %1697 = vmatprep.subr.mxu0 0.0
    %1698 = vmatpush1.msra.mxu0 0.0
    %1699 = vmatprep.subr.mxu0 0.0
    %1700 = vmatpush1.msra.mxu0 0.0
    %1701 = vmatprep.subr.mxu0 0.0
    %1702 = vmatpush1.msra.mxu0 0.0
    %1703 = vmatprep.subr.mxu0 0.0
    %1704 = vmatpush1.msra.mxu0 0.0
    %1705 = vmatprep.subr.mxu0 0.0
    %1706 = vmatpush1.msra.mxu0 0.0
    %1707 = vmatprep.subr.mxu0 0.0
    %1708 = vmatpush1.msra.mxu0 0.0
    %1709 = vmatprep.subr.mxu0 0.0
    %1710 = vmatpush1.msra.mxu0 0.0
    %1711 = vmatprep.subr.mxu0 0.0
    %1712 = vmatpush1.msra.mxu0 0.0
    %1713 = vmatprep.subr.mxu0 0.0
    %1714 = vmatpush1.msra.mxu0 0.0
    %1715 = vmatprep.subr.mxu0 0.0
    %1716 = vmatpush1.msra.mxu0 0.0
    %1717 = vmatprep.subr.mxu0 0.0
    %1718 = vmatpush1.msra.mxu0 0.0
    %1719 = vmatprep.subr.mxu0 0.0
    %1720 = vmatpush1.msra.mxu0 0.0
    %1721 = vmatprep.mubr.f32.mxu0 0.0
    %1722 = vmatmul.mubr.f32.gmra.mrb[0].mxu0 %v1655
    %v1723 = vpop.f32.mrb[0].mxu0
    %v1724 = vadd.f32 0.0, %v1723
    %v1725 = vpop.f32.mrb[0].mxu0
    %v1726 = vadd.f32 0.0, %v1725
    %1727 = vdwg.mxu0
    %1728 = vmatprep.subr.mxu0 %v1651
    %1729 = vmatpush1.msra.mxu0 %v1650
    %1730 = vmatprep.subr.mxu0 0.0
    %1731 = vmatpush1.msra.mxu0 0.0
    %1732 = vmatprep.subr.mxu0 0.0
    %1733 = vmatpush1.msra.mxu0 0.0
    %1734 = vmatprep.subr.mxu0 0.0
    %1735 = vmatpush1.msra.mxu0 0.0
    %1736 = vmatprep.subr.mxu0 0.0
    %1737 = vmatpush1.msra.mxu0 0.0
    %1738 = vmatprep.subr.mxu0 0.0
    %1739 = vmatpush1.msra.mxu0 0.0
    %1740 = vmatprep.subr.mxu0 0.0
    %1741 = vmatpush1.msra.mxu0 0.0
    %1742 = vmatprep.subr.mxu0 0.0
    %1743 = vmatpush1.msra.mxu0 0.0
    %1744 = vmatprep.subr.mxu0 0.0
    %1745 = vmatpush1.msra.mxu0 0.0
    %1746 = vmatprep.subr.mxu0 0.0
    %1747 = vmatpush1.msra.mxu0 0.0
    %1748 = vmatprep.subr.mxu0 0.0
    %1749 = vmatpush1.msra.mxu0 0.0
    %1750 = vmatprep.subr.mxu0 0.0
    %1751 = vmatpush1.msra.mxu0 0.0
    %1752 = vmatprep.subr.mxu0 0.0
    %1753 = vmatpush1.msra.mxu0 0.0
    %1754 = vmatprep.subr.mxu0 0.0
    %1755 = vmatpush1.msra.mxu0 0.0
    %1756 = vmatprep.subr.mxu0 0.0
    %1757 = vmatpush1.msra.mxu0 0.0
    %1758 = vmatprep.subr.mxu0 0.0
    %1759 = vmatpush1.msra.mxu0 0.0
    %1760 = vmatprep.subr.mxu0 0.0
    %1761 = vmatpush1.msra.mxu0 0.0
    %1762 = vmatprep.subr.mxu0 0.0
    %1763 = vmatpush1.msra.mxu0 0.0
    %1764 = vmatprep.subr.mxu0 0.0
    %1765 = vmatpush1.msra.mxu0 0.0
    %1766 = vmatprep.subr.mxu0 0.0
    %1767 = vmatpush1.msra.mxu0 0.0
    %1768 = vmatprep.subr.mxu0 0.0
    %1769 = vmatpush1.msra.mxu0 0.0
    %1770 = vmatprep.subr.mxu0 0.0
    %1771 = vmatpush1.msra.mxu0 0.0
    %1772 = vmatprep.subr.mxu0 0.0
    %1773 = vmatpush1.msra.mxu0 0.0
    %1774 = vmatprep.subr.mxu0 0.0
    %1775 = vmatpush1.msra.mxu0 0.0
    %1776 = vmatprep.subr.mxu0 0.0
    %1777 = vmatpush1.msra.mxu0 0.0
    %1778 = vmatprep.subr.mxu0 0.0
    %1779 = vmatpush1.msra.mxu0 0.0
    %1780 = vmatprep.subr.mxu0 0.0
    %1781 = vmatpush1.msra.mxu0 0.0
    %1782 = vmatprep.subr.mxu0 0.0
    %1783 = vmatpush1.msra.mxu0 0.0
    %1784 = vmatprep.subr.mxu0 0.0
    %1785 = vmatpush1.msra.mxu0 0.0
    %1786 = vmatprep.subr.mxu0 0.0
    %1787 = vmatpush1.msra.mxu0 0.0
    %1788 = vmatprep.subr.mxu0 0.0
    %1789 = vmatpush1.msra.mxu0 0.0
    %1790 = vmatprep.subr.mxu0 0.0
    %1791 = vmatpush1.msra.mxu0 0.0
    %1792 = vmatprep.mubr.f32.mxu0 0.0
    %1793 = vmatmul.mubr.f32.gmra.mrb[0].mxu0 %v1655
    %v1794 = vpop.f32.mrb[0].mxu0
    %v1795 = vadd.f32 0.0, %v1794
    %v1796 = vpop.f32.mrb[0].mxu0
    %v1797 = vadd.f32 0.0, %v1796
    %1798 = vdwg.mxu0
    %v1799 = vadd.f32 %v1632, %v1724
    %v1800 = vadd.f32 %v1633, %v1726
    %v1801 = vadd.f32 %v1634, %v1795
    %v1802 = vadd.f32 %v1635, %v1797
    %1803 = vrot.lane.b32.xlu0 %v653, 112
    %v1804 = vpop.permute.xlu0 %1803
    %1805 = vrot.lane.b32.xlu0 %v654, 112
    %v1806 = vpop.permute.xlu0 %1805
    %1807 = vrot.lane.b32.xlu0 %v655, 112
    %v1808 = vpop.permute.xlu0 %1807
    %1809 = vrot.lane.b32.xlu0 %v656, 112
    %v1810 = vpop.permute.xlu0 %1809
    %v1811 = vsel %vm510, %v1808, %v1810
    %v1812 = vsel %vm510, %v1806, %v1808
    %v1813 = vsel %vm510, %v1804, %v1806
    %v1814 = vsel %vm510, %v1810, %v1804
    %v1815 = vmul.f32 %v1813, %v521
    %v1816 = vmul.f32 %v1812, %v525
    %v1817 = vmul.f32 %v1811, %v529
    %v1818 = vmul.f32 %v1814, %v533
    %s1819 = scalar_lea.vmem %s4, 28
    %v1820 = vld [vmem:[%s1819] sm:$0xf]
    %v1822 = vsel %vm693, %v1820, 0
    %1824 = vmatprep.subr.mxu0 %v1816
    %1825 = vmatpush1.msra.mxu0 %v1815
    %1826 = vmatprep.subr.mxu0 0.0
    %1827 = vmatpush1.msra.mxu0 0.0
    %1828 = vmatprep.subr.mxu0 0.0
    %1829 = vmatpush1.msra.mxu0 0.0
    %1830 = vmatprep.subr.mxu0 0.0
    %1831 = vmatpush1.msra.mxu0 0.0
    %1832 = vmatprep.subr.mxu0 0.0
    %1833 = vmatpush1.msra.mxu0 0.0
    %1834 = vmatprep.subr.mxu0 0.0
    %1835 = vmatpush1.msra.mxu0 0.0
    %1836 = vmatprep.subr.mxu0 0.0
    %1837 = vmatpush1.msra.mxu0 0.0
    %1838 = vmatprep.subr.mxu0 0.0
    %1839 = vmatpush1.msra.mxu0 0.0
    %1840 = vmatprep.subr.mxu0 0.0
    %1841 = vmatpush1.msra.mxu0 0.0
    %1842 = vmatprep.subr.mxu0 0.0
    %1843 = vmatpush1.msra.mxu0 0.0
    %1844 = vmatprep.subr.mxu0 0.0
    %1845 = vmatpush1.msra.mxu0 0.0
    %1846 = vmatprep.subr.mxu0 0.0
    %1847 = vmatpush1.msra.mxu0 0.0
    %1848 = vmatprep.subr.mxu0 0.0
    %1849 = vmatpush1.msra.mxu0 0.0
    %1850 = vmatprep.subr.mxu0 0.0
    %1851 = vmatpush1.msra.mxu0 0.0
    %1852 = vmatprep.subr.mxu0 0.0
    %1853 = vmatpush1.msra.mxu0 0.0
    %1854 = vmatprep.subr.mxu0 0.0
    %1855 = vmatpush1.msra.mxu0 0.0
    %1856 = vmatprep.subr.mxu0 0.0
    %1857 = vmatpush1.msra.mxu0 0.0
    %1858 = vmatprep.subr.mxu0 0.0
    %1859 = vmatpush1.msra.mxu0 0.0
    %1860 = vmatprep.subr.mxu0 0.0
    %1861 = vmatpush1.msra.mxu0 0.0
    %1862 = vmatprep.subr.mxu0 0.0
    %1863 = vmatpush1.msra.mxu0 0.0
    %1864 = vmatprep.subr.mxu0 0.0
    %1865 = vmatpush1.msra.mxu0 0.0
    %1866 = vmatprep.subr.mxu0 0.0
    %1867 = vmatpush1.msra.mxu0 0.0
    %1868 = vmatprep.subr.mxu0 0.0
    %1869 = vmatpush1.msra.mxu0 0.0
    %1870 = vmatprep.subr.mxu0 0.0
    %1871 = vmatpush1.msra.mxu0 0.0
    %1872 = vmatprep.subr.mxu0 0.0
    %1873 = vmatpush1.msra.mxu0 0.0
    %1874 = vmatprep.subr.mxu0 0.0
    %1875 = vmatpush1.msra.mxu0 0.0
    %1876 = vmatprep.subr.mxu0 0.0
    %1877 = vmatpush1.msra.mxu0 0.0
    %1878 = vmatprep.subr.mxu0 0.0
    %1879 = vmatpush1.msra.mxu0 0.0
    %1880 = vmatprep.subr.mxu0 0.0
    %1881 = vmatpush1.msra.mxu0 0.0
    %1882 = vmatprep.subr.mxu0 0.0
    %1883 = vmatpush1.msra.mxu0 0.0
    %1884 = vmatprep.subr.mxu0 0.0
    %1885 = vmatpush1.msra.mxu0 0.0
    %1886 = vmatprep.subr.mxu0 0.0
    %1887 = vmatpush1.msra.mxu0 0.0
    %1888 = vmatprep.mubr.f32.mxu0 0.0
    %1889 = vmatmul.mubr.f32.gmra.mrb[0].mxu0 %v1822
    %v1890 = vpop.f32.mrb[0].mxu0
    %v1891 = vadd.f32 0.0, %v1890
    %v1892 = vpop.f32.mrb[0].mxu0
    %v1893 = vadd.f32 0.0, %v1892
    %1894 = vdwg.mxu0
    %1895 = vmatprep.subr.mxu0 %v1818
    %1896 = vmatpush1.msra.mxu0 %v1817
    %1897 = vmatprep.subr.mxu0 0.0
    %1898 = vmatpush1.msra.mxu0 0.0
    %1899 = vmatprep.subr.mxu0 0.0
    %1900 = vmatpush1.msra.mxu0 0.0
    %1901 = vmatprep.subr.mxu0 0.0
    %1902 = vmatpush1.msra.mxu0 0.0
    %1903 = vmatprep.subr.mxu0 0.0
    %1904 = vmatpush1.msra.mxu0 0.0
    %1905 = vmatprep.subr.mxu0 0.0
    %1906 = vmatpush1.msra.mxu0 0.0
    %1907 = vmatprep.subr.mxu0 0.0
    %1908 = vmatpush1.msra.mxu0 0.0
    %1909 = vmatprep.subr.mxu0 0.0
    %1910 = vmatpush1.msra.mxu0 0.0
    %1911 = vmatprep.subr.mxu0 0.0
    %1912 = vmatpush1.msra.mxu0 0.0
    %1913 = vmatprep.subr.mxu0 0.0
    %1914 = vmatpush1.msra.mxu0 0.0
    %1915 = vmatprep.subr.mxu0 0.0
    %1916 = vmatpush1.msra.mxu0 0.0
    %1917 = vmatprep.subr.mxu0 0.0
    %1918 = vmatpush1.msra.mxu0 0.0
    %1919 = vmatprep.subr.mxu0 0.0
    %1920 = vmatpush1.msra.mxu0 0.0
    %1921 = vmatprep.subr.mxu0 0.0
    %1922 = vmatpush1.msra.mxu0 0.0
    %1923 = vmatprep.subr.mxu0 0.0
    %1924 = vmatpush1.msra.mxu0 0.0
    %1925 = vmatprep.subr.mxu0 0.0
    %1926 = vmatpush1.msra.mxu0 0.0
    %1927 = vmatprep.subr.mxu0 0.0
    %1928 = vmatpush1.msra.mxu0 0.0
    %1929 = vmatprep.subr.mxu0 0.0
    %1930 = vmatpush1.msra.mxu0 0.0
    %1931 = vmatprep.subr.mxu0 0.0
    %1932 = vmatpush1.msra.mxu0 0.0
    %1933 = vmatprep.subr.mxu0 0.0
    %1934 = vmatpush1.msra.mxu0 0.0
    %1935 = vmatprep.subr.mxu0 0.0
    %1936 = vmatpush1.msra.mxu0 0.0
    %1937 = vmatprep.subr.mxu0 0.0
    %1938 = vmatpush1.msra.mxu0 0.0
    %1939 = vmatprep.subr.mxu0 0.0
    %1940 = vmatpush1.msra.mxu0 0.0
    %1941 = vmatprep.subr.mxu0 0.0
    %1942 = vmatpush1.msra.mxu0 0.0
    %1943 = vmatprep.subr.mxu0 0.0
    %1944 = vmatpush1.msra.mxu0 0.0
    %1945 = vmatprep.subr.mxu0 0.0
    %1946 = vmatpush1.msra.mxu0 0.0
    %1947 = vmatprep.subr.mxu0 0.0
    %1948 = vmatpush1.msra.mxu0 0.0
    %1949 = vmatprep.subr.mxu0 0.0
    %1950 = vmatpush1.msra.mxu0 0.0
    %1951 = vmatprep.subr.mxu0 0.0
    %1952 = vmatpush1.msra.mxu0 0.0
    %1953 = vmatprep.subr.mxu0 0.0
    %1954 = vmatpush1.msra.mxu0 0.0
    %1955 = vmatprep.subr.mxu0 0.0
    %1956 = vmatpush1.msra.mxu0 0.0
    %1957 = vmatprep.subr.mxu0 0.0
    %1958 = vmatpush1.msra.mxu0 0.0
    %1959 = vmatprep.mubr.f32.mxu0 0.0
    %1960 = vmatmul.mubr.f32.gmra.mrb[0].mxu0 %v1822
    %v1961 = vpop.f32.mrb[0].mxu0
    %v1962 = vadd.f32 0.0, %v1961
    %v1963 = vpop.f32.mrb[0].mxu0
    %v1964 = vadd.f32 0.0, %v1963
    %1965 = vdwg.mxu0
    %v1966 = vadd.f32 %v1799, %v1891
    %v1967 = vadd.f32 %v1800, %v1893
    %v1968 = vadd.f32 %v1801, %v1962
    %v1969 = vadd.f32 %v1802, %v1964
    %1970 = vrot.lane.b32.xlu0 %v653, 111
    %v1971 = vpop.permute.xlu0 %1970
    %1972 = vrot.lane.b32.xlu0 %v654, 111
    %v1973 = vpop.permute.xlu0 %1972
    %1974 = vrot.lane.b32.xlu0 %v655, 111
    %v1975 = vpop.permute.xlu0 %1974
    %1976 = vrot.lane.b32.xlu0 %v656, 111
    %v1977 = vpop.permute.xlu0 %1976
    %v1978 = vsel %vm581, %v1975, %v1977
    %v1979 = vsel %vm581, %v1973, %v1975
    %v1980 = vsel %vm581, %v1971, %v1973
    %v1981 = vsel %vm581, %v1977, %v1971
    %v1982 = vmul.f32 %v1980, %v592
    %v1983 = vmul.f32 %v1979, %v596
    %v1984 = vmul.f32 %v1978, %v600
    %v1985 = vmul.f32 %v1981, %v604
    %s1986 = scalar_lea.vmem %s4, 32
    %v1987 = vld [vmem:[%s1986] sm:$0xf]
    %v1989 = vsel %vm693, %v1987, 0
    %1991 = vmatprep.subr.mxu0 %v1983
    %1992 = vmatpush1.msra.mxu0 %v1982
    %1993 = vmatprep.subr.mxu0 0.0
    %1994 = vmatpush1.msra.mxu0 0.0
    %1995 = vmatprep.subr.mxu0 0.0
    %1996 = vmatpush1.msra.mxu0 0.0
    %1997 = vmatprep.subr.mxu0 0.0
    %1998 = vmatpush1.msra.mxu0 0.0
    %1999 = vmatprep.subr.mxu0 0.0
    %2000 = vmatpush1.msra.mxu0 0.0
    %2001 = vmatprep.subr.mxu0 0.0
    %2002 = vmatpush1.msra.mxu0 0.0
    %2003 = vmatprep.subr.mxu0 0.0
    %2004 = vmatpush1.msra.mxu0 0.0
    %2005 = vmatprep.subr.mxu0 0.0
    %2006 = vmatpush1.msra.mxu0 0.0
    %2007 = vmatprep.subr.mxu0 0.0
    %2008 = vmatpush1.msra.mxu0 0.0
    %2009 = vmatprep.subr.mxu0 0.0
    %2010 = vmatpush1.msra.mxu0 0.0
    %2011 = vmatprep.subr.mxu0 0.0
    %2012 = vmatpush1.msra.mxu0 0.0
    %2013 = vmatprep.subr.mxu0 0.0
    %2014 = vmatpush1.msra.mxu0 0.0
    %2015 = vmatprep.subr.mxu0 0.0
    %2016 = vmatpush1.msra.mxu0 0.0
    %2017 = vmatprep.subr.mxu0 0.0
    %2018 = vmatpush1.msra.mxu0 0.0
    %2019 = vmatprep.subr.mxu0 0.0
    %2020 = vmatpush1.msra.mxu0 0.0
    %2021 = vmatprep.subr.mxu0 0.0
    %2022 = vmatpush1.msra.mxu0 0.0
    %2023 = vmatprep.subr.mxu0 0.0
    %2024 = vmatpush1.msra.mxu0 0.0
    %2025 = vmatprep.subr.mxu0 0.0
    %2026 = vmatpush1.msra.mxu0 0.0
    %2027 = vmatprep.subr.mxu0 0.0
    %2028 = vmatpush1.msra.mxu0 0.0
    %2029 = vmatprep.subr.mxu0 0.0
    %2030 = vmatpush1.msra.mxu0 0.0
    %2031 = vmatprep.subr.mxu0 0.0
    %2032 = vmatpush1.msra.mxu0 0.0
    %2033 = vmatprep.subr.mxu0 0.0
    %2034 = vmatpush1.msra.mxu0 0.0
    %2035 = vmatprep.subr.mxu0 0.0
    %2036 = vmatpush1.msra.mxu0 0.0
    %2037 = vmatprep.subr.mxu0 0.0
    %2038 = vmatpush1.msra.mxu0 0.0
    %2039 = vmatprep.subr.mxu0 0.0
    %2040 = vmatpush1.msra.mxu0 0.0
    %2041 = vmatprep.subr.mxu0 0.0
    %2042 = vmatpush1.msra.mxu0 0.0
    %2043 = vmatprep.subr.mxu0 0.0
    %2044 = vmatpush1.msra.mxu0 0.0
    %2045 = vmatprep.subr.mxu0 0.0
    %2046 = vmatpush1.msra.mxu0 0.0
    %2047 = vmatprep.subr.mxu0 0.0
    %2048 = vmatpush1.msra.mxu0 0.0
    %2049 = vmatprep.subr.mxu0 0.0
    %2050 = vmatpush1.msra.mxu0 0.0
    %2051 = vmatprep.subr.mxu0 0.0
    %2052 = vmatpush1.msra.mxu0 0.0
    %2053 = vmatprep.subr.mxu0 0.0
    %2054 = vmatpush1.msra.mxu0 0.0
    %2055 = vmatprep.mubr.f32.mxu0 0.0
    %2056 = vmatmul.mubr.f32.gmra.mrb[0].mxu0 %v1989
    %v2057 = vpop.f32.mrb[0].mxu0
    %v2058 = vadd.f32 0.0, %v2057
    %v2059 = vpop.f32.mrb[0].mxu0
    %v2060 = vadd.f32 0.0, %v2059
    %2061 = vdwg.mxu0
    %2062 = vmatprep.subr.mxu0 %v1985
    %2063 = vmatpush1.msra.mxu0 %v1984
    %2064 = vmatprep.subr.mxu0 0.0
    %2065 = vmatpush1.msra.mxu0 0.0
    %2066 = vmatprep.subr.mxu0 0.0
    %2067 = vmatpush1.msra.mxu0 0.0
    %2068 = vmatprep.subr.mxu0 0.0
    %2069 = vmatpush1.msra.mxu0 0.0
    %2070 = vmatprep.subr.mxu0 0.0
    %2071 = vmatpush1.msra.mxu0 0.0
    %2072 = vmatprep.subr.mxu0 0.0
    %2073 = vmatpush1.msra.mxu0 0.0
    %2074 = vmatprep.subr.mxu0 0.0
    %2075 = vmatpush1.msra.mxu0 0.0
    %2076 = vmatprep.subr.mxu0 0.0
    %2077 = vmatpush1.msra.mxu0 0.0
    %2078 = vmatprep.subr.mxu0 0.0
    %2079 = vmatpush1.msra.mxu0 0.0
    %2080 = vmatprep.subr.mxu0 0.0
    %2081 = vmatpush1.msra.mxu0 0.0
    %2082 = vmatprep.subr.mxu0 0.0
    %2083 = vmatpush1.msra.mxu0 0.0
    %2084 = vmatprep.subr.mxu0 0.0
    %2085 = vmatpush1.msra.mxu0 0.0
    %2086 = vmatprep.subr.mxu0 0.0
    %2087 = vmatpush1.msra.mxu0 0.0
    %2088 = vmatprep.subr.mxu0 0.0
    %2089 = vmatpush1.msra.mxu0 0.0
    %2090 = vmatprep.subr.mxu0 0.0
    %2091 = vmatpush1.msra.mxu0 0.0
    %2092 = vmatprep.subr.mxu0 0.0
    %2093 = vmatpush1.msra.mxu0 0.0
    %2094 = vmatprep.subr.mxu0 0.0
    %2095 = vmatpush1.msra.mxu0 0.0
    %2096 = vmatprep.subr.mxu0 0.0
    %2097 = vmatpush1.msra.mxu0 0.0
    %2098 = vmatprep.subr.mxu0 0.0
    %2099 = vmatpush1.msra.mxu0 0.0
    %2100 = vmatprep.subr.mxu0 0.0
    %2101 = vmatpush1.msra.mxu0 0.0
    %2102 = vmatprep.subr.mxu0 0.0
    %2103 = vmatpush1.msra.mxu0 0.0
    %2104 = vmatprep.subr.mxu0 0.0
    %2105 = vmatpush1.msra.mxu0 0.0
    %2106 = vmatprep.subr.mxu0 0.0
    %2107 = vmatpush1.msra.mxu0 0.0
    %2108 = vmatprep.subr.mxu0 0.0
    %2109 = vmatpush1.msra.mxu0 0.0
    %2110 = vmatprep.subr.mxu0 0.0
    %2111 = vmatpush1.msra.mxu0 0.0
    %2112 = vmatprep.subr.mxu0 0.0
    %2113 = vmatpush1.msra.mxu0 0.0
    %2114 = vmatprep.subr.mxu0 0.0
    %2115 = vmatpush1.msra.mxu0 0.0
    %2116 = vmatprep.subr.mxu0 0.0
    %2117 = vmatpush1.msra.mxu0 0.0
    %2118 = vmatprep.subr.mxu0 0.0
    %2119 = vmatpush1.msra.mxu0 0.0
    %2120 = vmatprep.subr.mxu0 0.0
    %2121 = vmatpush1.msra.mxu0 0.0
    %2122 = vmatprep.subr.mxu0 0.0
    %2123 = vmatpush1.msra.mxu0 0.0
    %2124 = vmatprep.subr.mxu0 0.0
    %2125 = vmatpush1.msra.mxu0 0.0
    %2126 = vmatprep.mubr.f32.mxu0 0.0
    %2127 = vmatmul.mubr.f32.gmra.mrb[0].mxu0 %v1989
    %v2128 = vpop.f32.mrb[0].mxu0
    %v2129 = vadd.f32 0.0, %v2128
    %v2130 = vpop.f32.mrb[0].mxu0
    %v2131 = vadd.f32 0.0, %v2130
    %2132 = vdwg.mxu0
    %v2133 = vadd.f32 %v1966, %v2058
    %v2134 = vadd.f32 %v1967, %v2060
    %v2135 = vadd.f32 %v1968, %v2129
    %v2136 = vadd.f32 %v1969, %v2131
    %2138 = vset.pattern.permute.xlu0 0
    %2139 = vperm.xlu0 %2138, %v657
    %v2140 = vpop.permute.xlu0 %2139
    %v2142 = vadd.f32 %v2133, %v2140
    %v2143 = vadd.f32 %v2134, %v2140
    %v2144 = vadd.f32 %v2135, %v2140
    %v2145 = vadd.f32 %v2136, %v2140
    %v2146 = vmax.f32 %v2142, 0.0
    %v2147 = vmax.f32 %v2143, 0.0
    %v2148 = vmax.f32 %v2144, 0.0
    %v2149 = vmax.f32 %v2145, 0.0
    %v2150 = vld [vmem:[%s7] sm:$0xff]
    %2151 = vrot.lane.b32.xlu0 %v2146, 17
    %v2152 = vpop.permute.xlu0 %2151
    %2153 = vrot.lane.b32.xlu0 %v2147, 17
    %v2154 = vpop.permute.xlu0 %2153
    %2155 = vrot.lane.b32.xlu0 %v2148, 17
    %v2156 = vpop.permute.xlu0 %2155
    %2157 = vrot.lane.b32.xlu0 %v2149, 17
    %v2158 = vpop.permute.xlu0 %2157
    %v2159 = vsel %vm71, %v2156, %v2158
    %v2160 = vsel %vm71, %v2154, %v2156
    %v2161 = vsel %vm71, %v2152, %v2154
    %v2162 = vsel %vm71, %v2158, %v2152
    %v2163 = vmul.f32 %v2162, %v81
    %v2164 = vmul.f32 %v2161, %v85
    %v2165 = vmul.f32 %v2160, %v89
    %v2166 = vmul.f32 %v2159, %v93
    %v2167 = vld [vmem:[%s6] sm:$0xff]
    %2168 = vrot.lane.b32.xlu0 %v2146, 16
    %v2169 = vpop.permute.xlu0 %2168
    %2170 = vrot.lane.b32.xlu0 %v2147, 16
    %v2171 = vpop.permute.xlu0 %2170
    %2172 = vrot.lane.b32.xlu0 %v2148, 16
    %v2173 = vpop.permute.xlu0 %2172
    %2174 = vrot.lane.b32.xlu0 %v2149, 16
    %v2175 = vpop.permute.xlu0 %2174
    %v2176 = vsel %vm140, %v2173, %v2175
    %v2177 = vsel %vm140, %v2171, %v2173
    %v2178 = vsel %vm140, %v2169, %v2171
    %v2179 = vsel %vm140, %v2175, %v2169
    %v2180 = vmul.f32 %v2179, %v151
    %v2181 = vmul.f32 %v2178, %v155
    %v2182 = vmul.f32 %v2177, %v159
    %v2183 = vmul.f32 %v2176, %v163
    %s2184 = scalar_lea.vmem %s6, 8
    %v2185 = vld [vmem:[%s2184] sm:$0xff]
    %vm2186 = vcmask 31744
    %v2188 = vsel %vm2186, %v2185, 0
    %vm2190 = vcmask 1043456
    %v2192 = vsel %vm2190, %v2180, 0
    %v2195 = vsel %vm2190, %v2181, 0
    %v2198 = vsel %vm2190, %v2182, 0
    %v2201 = vsel %vm2190, %v2183, 0
    %2203 = vmatprep.subr.mxu0 %v2195
    %2204 = vmatpush1.msra.mxu0 %v2192
    %2205 = vmatprep.subr.mxu0 0.0
    %2206 = vmatpush1.msra.mxu0 0.0
    %2207 = vmatprep.subr.mxu0 0.0
    %2208 = vmatpush1.msra.mxu0 0.0
    %2209 = vmatprep.subr.mxu0 0.0
    %2210 = vmatpush1.msra.mxu0 0.0
    %2211 = vmatprep.subr.mxu0 0.0
    %2212 = vmatpush1.msra.mxu0 0.0
    %2213 = vmatprep.subr.mxu0 0.0
    %2214 = vmatpush1.msra.mxu0 0.0
    %2215 = vmatprep.subr.mxu0 0.0
    %2216 = vmatpush1.msra.mxu0 0.0
    %2217 = vmatprep.subr.mxu0 0.0
    %2218 = vmatpush1.msra.mxu0 0.0
    %2219 = vmatprep.subr.mxu0 0.0
    %2220 = vmatpush1.msra.mxu0 0.0
    %2221 = vmatprep.subr.mxu0 0.0
    %2222 = vmatpush1.msra.mxu0 0.0
    %2223 = vmatprep.subr.mxu0 0.0
    %2224 = vmatpush1.msra.mxu0 0.0
    %2225 = vmatprep.subr.mxu0 0.0
    %2226 = vmatpush1.msra.mxu0 0.0
    %2227 = vmatprep.subr.mxu0 0.0
    %2228 = vmatpush1.msra.mxu0 0.0
    %2229 = vmatprep.subr.mxu0 0.0
    %2230 = vmatpush1.msra.mxu0 0.0
    %2231 = vmatprep.subr.mxu0 0.0
    %2232 = vmatpush1.msra.mxu0 0.0
    %2233 = vmatprep.subr.mxu0 0.0
    %2234 = vmatpush1.msra.mxu0 0.0
    %2235 = vmatprep.subr.mxu0 0.0
    %2236 = vmatpush1.msra.mxu0 0.0
    %2237 = vmatprep.subr.mxu0 0.0
    %2238 = vmatpush1.msra.mxu0 0.0
    %2239 = vmatprep.subr.mxu0 0.0
    %2240 = vmatpush1.msra.mxu0 0.0
    %2241 = vmatprep.subr.mxu0 0.0
    %2242 = vmatpush1.msra.mxu0 0.0
    %2243 = vmatprep.subr.mxu0 0.0
    %2244 = vmatpush1.msra.mxu0 0.0
    %2245 = vmatprep.subr.mxu0 0.0
    %2246 = vmatpush1.msra.mxu0 0.0
    %2247 = vmatprep.subr.mxu0 0.0
    %2248 = vmatpush1.msra.mxu0 0.0
    %2249 = vmatprep.subr.mxu0 0.0
    %2250 = vmatpush1.msra.mxu0 0.0
    %2251 = vmatprep.subr.mxu0 0.0
    %2252 = vmatpush1.msra.mxu0 0.0
    %2253 = vmatprep.subr.mxu0 0.0
    %2254 = vmatpush1.msra.mxu0 0.0
    %2255 = vmatprep.subr.mxu0 0.0
    %2256 = vmatpush1.msra.mxu0 0.0
    %2257 = vmatprep.subr.mxu0 0.0
    %2258 = vmatpush1.msra.mxu0 0.0
    %2259 = vmatprep.subr.mxu0 0.0
    %2260 = vmatpush1.msra.mxu0 0.0
    %2261 = vmatprep.subr.mxu0 0.0
    %2262 = vmatpush1.msra.mxu0 0.0
    %2263 = vmatprep.subr.mxu0 0.0
    %2264 = vmatpush1.msra.mxu0 0.0
    %2265 = vmatprep.subr.mxu0 0.0
    %2266 = vmatpush1.msra.mxu0 0.0
    %2267 = vmatprep.mubr.f32.mxu0 0.0
    %2268 = vmatmul.mubr.f32.gmra.mrb[0].mxu0 %v2188
    %v2269 = vpop.f32.mrb[0].mxu0
    %v2270 = vadd.f32 0.0, %v2269
    %v2271 = vpop.f32.mrb[0].mxu0
    %v2272 = vadd.f32 0.0, %v2271
    %2273 = vdwg.mxu0
    %2274 = vmatprep.subr.mxu0 %v2201
    %2275 = vmatpush1.msra.mxu0 %v2198
    %2276 = vmatprep.subr.mxu0 0.0
    %2277 = vmatpush1.msra.mxu0 0.0
    %2278 = vmatprep.subr.mxu0 0.0
    %2279 = vmatpush1.msra.mxu0 0.0
    %2280 = vmatprep.subr.mxu0 0.0
    %2281 = vmatpush1.msra.mxu0 0.0
    %2282 = vmatprep.subr.mxu0 0.0
    %2283 = vmatpush1.msra.mxu0 0.0
    %2284 = vmatprep.subr.mxu0 0.0
    %2285 = vmatpush1.msra.mxu0 0.0
    %2286 = vmatprep.subr.mxu0 0.0
    %2287 = vmatpush1.msra.mxu0 0.0
    %2288 = vmatprep.subr.mxu0 0.0
    %2289 = vmatpush1.msra.mxu0 0.0
    %2290 = vmatprep.subr.mxu0 0.0
    %2291 = vmatpush1.msra.mxu0 0.0
    %2292 = vmatprep.subr.mxu0 0.0
    %2293 = vmatpush1.msra.mxu0 0.0
    %2294 = vmatprep.subr.mxu0 0.0
    %2295 = vmatpush1.msra.mxu0 0.0
    %2296 = vmatprep.subr.mxu0 0.0
    %2297 = vmatpush1.msra.mxu0 0.0
    %2298 = vmatprep.subr.mxu0 0.0
    %2299 = vmatpush1.msra.mxu0 0.0
    %2300 = vmatprep.subr.mxu0 0.0
    %2301 = vmatpush1.msra.mxu0 0.0
    %2302 = vmatprep.subr.mxu0 0.0
    %2303 = vmatpush1.msra.mxu0 0.0
    %2304 = vmatprep.subr.mxu0 0.0
    %2305 = vmatpush1.msra.mxu0 0.0
    %2306 = vmatprep.subr.mxu0 0.0
    %2307 = vmatpush1.msra.mxu0 0.0
    %2308 = vmatprep.subr.mxu0 0.0
    %2309 = vmatpush1.msra.mxu0 0.0
    %2310 = vmatprep.subr.mxu0 0.0
    %2311 = vmatpush1.msra.mxu0 0.0
    %2312 = vmatprep.subr.mxu0 0.0
    %2313 = vmatpush1.msra.mxu0 0.0
    %2314 = vmatprep.subr.mxu0 0.0
    %2315 = vmatpush1.msra.mxu0 0.0
    %2316 = vmatprep.subr.mxu0 0.0
    %2317 = vmatpush1.msra.mxu0 0.0
    %2318 = vmatprep.subr.mxu0 0.0
    %2319 = vmatpush1.msra.mxu0 0.0
    %2320 = vmatprep.subr.mxu0 0.0
    %2321 = vmatpush1.msra.mxu0 0.0
    %2322 = vmatprep.subr.mxu0 0.0
    %2323 = vmatpush1.msra.mxu0 0.0
    %2324 = vmatprep.subr.mxu0 0.0
    %2325 = vmatpush1.msra.mxu0 0.0
    %2326 = vmatprep.subr.mxu0 0.0
    %2327 = vmatpush1.msra.mxu0 0.0
    %2328 = vmatprep.subr.mxu0 0.0
    %2329 = vmatpush1.msra.mxu0 0.0
    %2330 = vmatprep.subr.mxu0 0.0
    %2331 = vmatpush1.msra.mxu0 0.0
    %2332 = vmatprep.subr.mxu0 0.0
    %2333 = vmatpush1.msra.mxu0 0.0
    %2334 = vmatprep.subr.mxu0 0.0
    %2335 = vmatpush1.msra.mxu0 0.0
    %2336 = vmatprep.subr.mxu0 0.0
    %2337 = vmatpush1.msra.mxu0 0.0
    %2338 = vmatprep.mubr.f32.mxu0 0.0
    %2339 = vmatmul.mubr.f32.gmra.mrb[0].mxu0 %v2188
    %v2340 = vpop.f32.mrb[0].mxu0
    %v2341 = vadd.f32 0.0, %v2340
    %v2342 = vpop.f32.mrb[0].mxu0
    %v2343 = vadd.f32 0.0, %v2342
    %2344 = vdwg.mxu0
    %v2346 = vsel %vm2186, %v2167, 0
    %v2349 = vsel %vm2190, %v2163, 0
    %v2352 = vsel %vm2190, %v2164, 0
    %v2355 = vsel %vm2190, %v2165, 0
    %v2358 = vsel %vm2190, %v2166, 0
    %2360 = vmatprep.subr.mxu0 %v2352
    %2361 = vmatpush1.msra.mxu0 %v2349
    %2362 = vmatprep.subr.mxu0 0.0
    %2363 = vmatpush1.msra.mxu0 0.0
    %2364 = vmatprep.subr.mxu0 0.0
    %2365 = vmatpush1.msra.mxu0 0.0
    %2366 = vmatprep.subr.mxu0 0.0
    %2367 = vmatpush1.msra.mxu0 0.0
    %2368 = vmatprep.subr.mxu0 0.0
    %2369 = vmatpush1.msra.mxu0 0.0
    %2370 = vmatprep.subr.mxu0 0.0
    %2371 = vmatpush1.msra.mxu0 0.0
    %2372 = vmatprep.subr.mxu0 0.0
    %2373 = vmatpush1.msra.mxu0 0.0
    %2374 = vmatprep.subr.mxu0 0.0
    %2375 = vmatpush1.msra.mxu0 0.0
    %2376 = vmatprep.subr.mxu0 0.0
    %2377 = vmatpush1.msra.mxu0 0.0
    %2378 = vmatprep.subr.mxu0 0.0
    %2379 = vmatpush1.msra.mxu0 0.0
    %2380 = vmatprep.subr.mxu0 0.0
    %2381 = vmatpush1.msra.mxu0 0.0
    %2382 = vmatprep.subr.mxu0 0.0
    %2383 = vmatpush1.msra.mxu0 0.0
    %2384 = vmatprep.subr.mxu0 0.0
    %2385 = vmatpush1.msra.mxu0 0.0
    %2386 = vmatprep.subr.mxu0 0.0
    %2387 = vmatpush1.msra.mxu0 0.0
    %2388 = vmatprep.subr.mxu0 0.0
    %2389 = vmatpush1.msra.mxu0 0.0
    %2390 = vmatprep.subr.mxu0 0.0
    %2391 = vmatpush1.msra.mxu0 0.0
    %2392 = vmatprep.subr.mxu0 0.0
    %2393 = vmatpush1.msra.mxu0 0.0
    %2394 = vmatprep.subr.mxu0 0.0
    %2395 = vmatpush1.msra.mxu0 0.0
    %2396 = vmatprep.subr.mxu0 0.0
    %2397 = vmatpush1.msra.mxu0 0.0
    %2398 = vmatprep.subr.mxu0 0.0
    %2399 = vmatpush1.msra.mxu0 0.0
    %2400 = vmatprep.subr.mxu0 0.0
    %2401 = vmatpush1.msra.mxu0 0.0
    %2402 = vmatprep.subr.mxu0 0.0
    %2403 = vmatpush1.msra.mxu0 0.0
    %2404 = vmatprep.subr.mxu0 0.0
    %2405 = vmatpush1.msra.mxu0 0.0
    %2406 = vmatprep.subr.mxu0 0.0
    %2407 = vmatpush1.msra.mxu0 0.0
    %2408 = vmatprep.subr.mxu0 0.0
    %2409 = vmatpush1.msra.mxu0 0.0
    %2410 = vmatprep.subr.mxu0 0.0
    %2411 = vmatpush1.msra.mxu0 0.0
    %2412 = vmatprep.subr.mxu0 0.0
    %2413 = vmatpush1.msra.mxu0 0.0
    %2414 = vmatprep.subr.mxu0 0.0
    %2415 = vmatpush1.msra.mxu0 0.0
    %2416 = vmatprep.subr.mxu0 0.0
    %2417 = vmatpush1.msra.mxu0 0.0
    %2418 = vmatprep.subr.mxu0 0.0
    %2419 = vmatpush1.msra.mxu0 0.0
    %2420 = vmatprep.subr.mxu0 0.0
    %2421 = vmatpush1.msra.mxu0 0.0
    %2422 = vmatprep.subr.mxu0 0.0
    %2423 = vmatpush1.msra.mxu0 0.0
    %2424 = vmatprep.mubr.f32.mxu0 0.0
    %2425 = vmatmul.mubr.f32.gmra.mrb[0].mxu0 %v2346
    %v2426 = vpop.f32.mrb[0].mxu0
    %v2427 = vadd.f32 %v2270, %v2426
    %v2428 = vpop.f32.mrb[0].mxu0
    %v2429 = vadd.f32 %v2272, %v2428
    %2430 = vdwg.mxu0
    %2431 = vmatprep.subr.mxu0 %v2358
    %2432 = vmatpush1.msra.mxu0 %v2355
    %2433 = vmatprep.subr.mxu0 0.0
    %2434 = vmatpush1.msra.mxu0 0.0
    %2435 = vmatprep.subr.mxu0 0.0
    %2436 = vmatpush1.msra.mxu0 0.0
    %2437 = vmatprep.subr.mxu0 0.0
    %2438 = vmatpush1.msra.mxu0 0.0
    %2439 = vmatprep.subr.mxu0 0.0
    %2440 = vmatpush1.msra.mxu0 0.0
    %2441 = vmatprep.subr.mxu0 0.0
    %2442 = vmatpush1.msra.mxu0 0.0
    %2443 = vmatprep.subr.mxu0 0.0
    %2444 = vmatpush1.msra.mxu0 0.0
    %2445 = vmatprep.subr.mxu0 0.0
    %2446 = vmatpush1.msra.mxu0 0.0
    %2447 = vmatprep.subr.mxu0 0.0
    %2448 = vmatpush1.msra.mxu0 0.0
    %2449 = vmatprep.subr.mxu0 0.0
    %2450 = vmatpush1.msra.mxu0 0.0
    %2451 = vmatprep.subr.mxu0 0.0
    %2452 = vmatpush1.msra.mxu0 0.0
    %2453 = vmatprep.subr.mxu0 0.0
    %2454 = vmatpush1.msra.mxu0 0.0
    %2455 = vmatprep.subr.mxu0 0.0
    %2456 = vmatpush1.msra.mxu0 0.0
    %2457 = vmatprep.subr.mxu0 0.0
    %2458 = vmatpush1.msra.mxu0 0.0
    %2459 = vmatprep.subr.mxu0 0.0
    %2460 = vmatpush1.msra.mxu0 0.0
    %2461 = vmatprep.subr.mxu0 0.0
    %2462 = vmatpush1.msra.mxu0 0.0
    %2463 = vmatprep.subr.mxu0 0.0
    %2464 = vmatpush1.msra.mxu0 0.0
    %2465 = vmatprep.subr.mxu0 0.0
    %2466 = vmatpush1.msra.mxu0 0.0
    %2467 = vmatprep.subr.mxu0 0.0
    %2468 = vmatpush1.msra.mxu0 0.0
    %2469 = vmatprep.subr.mxu0 0.0
    %2470 = vmatpush1.msra.mxu0 0.0
    %2471 = vmatprep.subr.mxu0 0.0
    %2472 = vmatpush1.msra.mxu0 0.0
    %2473 = vmatprep.subr.mxu0 0.0
    %2474 = vmatpush1.msra.mxu0 0.0
    %2475 = vmatprep.subr.mxu0 0.0
    %2476 = vmatpush1.msra.mxu0 0.0
    %2477 = vmatprep.subr.mxu0 0.0
    %2478 = vmatpush1.msra.mxu0 0.0
    %2479 = vmatprep.subr.mxu0 0.0
    %2480 = vmatpush1.msra.mxu0 0.0
    %2481 = vmatprep.subr.mxu0 0.0
    %2482 = vmatpush1.msra.mxu0 0.0
    %2483 = vmatprep.subr.mxu0 0.0
    %2484 = vmatpush1.msra.mxu0 0.0
    %2485 = vmatprep.subr.mxu0 0.0
    %2486 = vmatpush1.msra.mxu0 0.0
    %2487 = vmatprep.subr.mxu0 0.0
    %2488 = vmatpush1.msra.mxu0 0.0
    %2489 = vmatprep.subr.mxu0 0.0
    %2490 = vmatpush1.msra.mxu0 0.0
    %2491 = vmatprep.subr.mxu0 0.0
    %2492 = vmatpush1.msra.mxu0 0.0
    %2493 = vmatprep.subr.mxu0 0.0
    %2494 = vmatpush1.msra.mxu0 0.0
    %2495 = vmatprep.mubr.f32.mxu0 0.0
    %2496 = vmatmul.mubr.f32.gmra.mrb[0].mxu0 %v2346
    %v2497 = vpop.f32.mrb[0].mxu0
    %v2498 = vadd.f32 %v2341, %v2497
    %v2499 = vpop.f32.mrb[0].mxu0
    %v2500 = vadd.f32 %v2343, %v2499
    %2501 = vdwg.mxu0
    %2502 = vrot.lane.b32.xlu0 %v2146, 15
    %v2503 = vpop.permute.xlu0 %2502
    %2504 = vrot.lane.b32.xlu0 %v2147, 15
    %v2505 = vpop.permute.xlu0 %2504
    %2506 = vrot.lane.b32.xlu0 %v2148, 15
    %v2507 = vpop.permute.xlu0 %2506
    %2508 = vrot.lane.b32.xlu0 %v2149, 15
    %v2509 = vpop.permute.xlu0 %2508
    %v2510 = vsel %vm211, %v2507, %v2509
    %v2511 = vsel %vm211, %v2505, %v2507
    %v2512 = vsel %vm211, %v2503, %v2505
    %v2513 = vsel %vm211, %v2509, %v2503
    %v2514 = vmul.f32 %v2513, %v222
    %v2515 = vmul.f32 %v2512, %v226
    %v2516 = vmul.f32 %v2511, %v230
    %v2517 = vmul.f32 %v2510, %v234
    %s2518 = scalar_lea.vmem %s6, 16
    %v2519 = vld [vmem:[%s2518] sm:$0xff]
    %v2521 = vsel %vm2186, %v2519, 0
    %v2524 = vsel %vm2190, %v2514, 0
    %v2527 = vsel %vm2190, %v2515, 0
    %v2530 = vsel %vm2190, %v2516, 0
    %v2533 = vsel %vm2190, %v2517, 0
    %2535 = vmatprep.subr.mxu0 %v2527
    %2536 = vmatpush1.msra.mxu0 %v2524
    %2537 = vmatprep.subr.mxu0 0.0
    %2538 = vmatpush1.msra.mxu0 0.0
    %2539 = vmatprep.subr.mxu0 0.0
    %2540 = vmatpush1.msra.mxu0 0.0
    %2541 = vmatprep.subr.mxu0 0.0
    %2542 = vmatpush1.msra.mxu0 0.0
    %2543 = vmatprep.subr.mxu0 0.0
    %2544 = vmatpush1.msra.mxu0 0.0
    %2545 = vmatprep.subr.mxu0 0.0
    %2546 = vmatpush1.msra.mxu0 0.0
    %2547 = vmatprep.subr.mxu0 0.0
    %2548 = vmatpush1.msra.mxu0 0.0
    %2549 = vmatprep.subr.mxu0 0.0
    %2550 = vmatpush1.msra.mxu0 0.0
    %2551 = vmatprep.subr.mxu0 0.0
    %2552 = vmatpush1.msra.mxu0 0.0
    %2553 = vmatprep.subr.mxu0 0.0
    %2554 = vmatpush1.msra.mxu0 0.0
    %2555 = vmatprep.subr.mxu0 0.0
    %2556 = vmatpush1.msra.mxu0 0.0
    %2557 = vmatprep.subr.mxu0 0.0
    %2558 = vmatpush1.msra.mxu0 0.0
    %2559 = vmatprep.subr.mxu0 0.0
    %2560 = vmatpush1.msra.mxu0 0.0
    %2561 = vmatprep.subr.mxu0 0.0
    %2562 = vmatpush1.msra.mxu0 0.0
    %2563 = vmatprep.subr.mxu0 0.0
    %2564 = vmatpush1.msra.mxu0 0.0
    %2565 = vmatprep.subr.mxu0 0.0
    %2566 = vmatpush1.msra.mxu0 0.0
    %2567 = vmatprep.subr.mxu0 0.0
    %2568 = vmatpush1.msra.mxu0 0.0
    %2569 = vmatprep.subr.mxu0 0.0
    %2570 = vmatpush1.msra.mxu0 0.0
    %2571 = vmatprep.subr.mxu0 0.0
    %2572 = vmatpush1.msra.mxu0 0.0
    %2573 = vmatprep.subr.mxu0 0.0
    %2574 = vmatpush1.msra.mxu0 0.0
    %2575 = vmatprep.subr.mxu0 0.0
    %2576 = vmatpush1.msra.mxu0 0.0
    %2577 = vmatprep.subr.mxu0 0.0
    %2578 = vmatpush1.msra.mxu0 0.0
    %2579 = vmatprep.subr.mxu0 0.0
    %2580 = vmatpush1.msra.mxu0 0.0
    %2581 = vmatprep.subr.mxu0 0.0
    %2582 = vmatpush1.msra.mxu0 0.0
    %2583 = vmatprep.subr.mxu0 0.0
    %2584 = vmatpush1.msra.mxu0 0.0
    %2585 = vmatprep.subr.mxu0 0.0
    %2586 = vmatpush1.msra.mxu0 0.0
    %2587 = vmatprep.subr.mxu0 0.0
    %2588 = vmatpush1.msra.mxu0 0.0
    %2589 = vmatprep.subr.mxu0 0.0
    %2590 = vmatpush1.msra.mxu0 0.0
    %2591 = vmatprep.subr.mxu0 0.0
    %2592 = vmatpush1.msra.mxu0 0.0
    %2593 = vmatprep.subr.mxu0 0.0
    %2594 = vmatpush1.msra.mxu0 0.0
    %2595 = vmatprep.subr.mxu0 0.0
    %2596 = vmatpush1.msra.mxu0 0.0
    %2597 = vmatprep.subr.mxu0 0.0
    %2598 = vmatpush1.msra.mxu0 0.0
    %2599 = vmatprep.mubr.f32.mxu0 0.0
    %2600 = vmatmul.mubr.f32.gmra.mrb[0].mxu0 %v2521
    %v2601 = vpop.f32.mrb[0].mxu0
    %v2602 = vadd.f32 0.0, %v2601
    %v2603 = vpop.f32.mrb[0].mxu0
    %v2604 = vadd.f32 0.0, %v2603
    %2605 = vdwg.mxu0
    %2606 = vmatprep.subr.mxu0 %v2533
    %2607 = vmatpush1.msra.mxu0 %v2530
    %2608 = vmatprep.subr.mxu0 0.0
    %2609 = vmatpush1.msra.mxu0 0.0
    %2610 = vmatprep.subr.mxu0 0.0
    %2611 = vmatpush1.msra.mxu0 0.0
    %2612 = vmatprep.subr.mxu0 0.0
    %2613 = vmatpush1.msra.mxu0 0.0
    %2614 = vmatprep.subr.mxu0 0.0
    %2615 = vmatpush1.msra.mxu0 0.0
    %2616 = vmatprep.subr.mxu0 0.0
    %2617 = vmatpush1.msra.mxu0 0.0
    %2618 = vmatprep.subr.mxu0 0.0
    %2619 = vmatpush1.msra.mxu0 0.0
    %2620 = vmatprep.subr.mxu0 0.0
    %2621 = vmatpush1.msra.mxu0 0.0
    %2622 = vmatprep.subr.mxu0 0.0
    %2623 = vmatpush1.msra.mxu0 0.0
    %2624 = vmatprep.subr.mxu0 0.0
    %2625 = vmatpush1.msra.mxu0 0.0
    %2626 = vmatprep.subr.mxu0 0.0
    %2627 = vmatpush1.msra.mxu0 0.0
    %2628 = vmatprep.subr.mxu0 0.0
    %2629 = vmatpush1.msra.mxu0 0.0
    %2630 = vmatprep.subr.mxu0 0.0
    %2631 = vmatpush1.msra.mxu0 0.0
    %2632 = vmatprep.subr.mxu0 0.0
    %2633 = vmatpush1.msra.mxu0 0.0
    %2634 = vmatprep.subr.mxu0 0.0
    %2635 = vmatpush1.msra.mxu0 0.0
    %2636 = vmatprep.subr.mxu0 0.0
    %2637 = vmatpush1.msra.mxu0 0.0
    %2638 = vmatprep.subr.mxu0 0.0
    %2639 = vmatpush1.msra.mxu0 0.0
    %2640 = vmatprep.subr.mxu0 0.0
    %2641 = vmatpush1.msra.mxu0 0.0
    %2642 = vmatprep.subr.mxu0 0.0
    %2643 = vmatpush1.msra.mxu0 0.0
    %2644 = vmatprep.subr.mxu0 0.0
    %2645 = vmatpush1.msra.mxu0 0.0
    %2646 = vmatprep.subr.mxu0 0.0
    %2647 = vmatpush1.msra.mxu0 0.0
    %2648 = vmatprep.subr.mxu0 0.0
    %2649 = vmatpush1.msra.mxu0 0.0
    %2650 = vmatprep.subr.mxu0 0.0
    %2651 = vmatpush1.msra.mxu0 0.0
    %2652 = vmatprep.subr.mxu0 0.0
    %2653 = vmatpush1.msra.mxu0 0.0
    %2654 = vmatprep.subr.mxu0 0.0
    %2655 = vmatpush1.msra.mxu0 0.0
    %2656 = vmatprep.subr.mxu0 0.0
    %2657 = vmatpush1.msra.mxu0 0.0
    %2658 = vmatprep.subr.mxu0 0.0
    %2659 = vmatpush1.msra.mxu0 0.0
    %2660 = vmatprep.subr.mxu0 0.0
    %2661 = vmatpush1.msra.mxu0 0.0
    %2662 = vmatprep.subr.mxu0 0.0
    %2663 = vmatpush1.msra.mxu0 0.0
    %2664 = vmatprep.subr.mxu0 0.0
    %2665 = vmatpush1.msra.mxu0 0.0
    %2666 = vmatprep.subr.mxu0 0.0
    %2667 = vmatpush1.msra.mxu0 0.0
    %2668 = vmatprep.subr.mxu0 0.0
    %2669 = vmatpush1.msra.mxu0 0.0
    %2670 = vmatprep.mubr.f32.mxu0 0.0
    %2671 = vmatmul.mubr.f32.gmra.mrb[0].mxu0 %v2521
    %v2672 = vpop.f32.mrb[0].mxu0
    %v2673 = vadd.f32 0.0, %v2672
    %v2674 = vpop.f32.mrb[0].mxu0
    %v2675 = vadd.f32 0.0, %v2674
    %2676 = vdwg.mxu0
    %v2677 = vadd.f32 %v2427, %v2602
    %v2678 = vadd.f32 %v2429, %v2604
    %v2679 = vadd.f32 %v2498, %v2673
    %v2680 = vadd.f32 %v2500, %v2675
    %2681 = vrot.lane.b32.xlu0 %v2146, 1
    %v2682 = vpop.permute.xlu0 %2681
    %2683 = vrot.lane.b32.xlu0 %v2147, 1
    %v2684 = vpop.permute.xlu0 %2683
    %2685 = vrot.lane.b32.xlu0 %v2148, 1
    %v2686 = vpop.permute.xlu0 %2685
    %2687 = vrot.lane.b32.xlu0 %v2149, 1
    %v2688 = vpop.permute.xlu0 %2687
    %v2689 = vsel %vm282, %v2686, %v2688
    %v2690 = vsel %vm282, %v2684, %v2686
    %v2691 = vsel %vm282, %v2682, %v2684
    %v2692 = vsel %vm282, %v2688, %v2682
    %v2693 = vmul.f32 %v2692, %v293
    %v2694 = vmul.f32 %v2691, %v297
    %v2695 = vmul.f32 %v2690, %v301
    %v2696 = vmul.f32 %v2689, %v305
    %s2697 = scalar_lea.vmem %s6, 24
    %v2698 = vld [vmem:[%s2697] sm:$0xff]
    %v2700 = vsel %vm2186, %v2698, 0
    %v2703 = vsel %vm2190, %v2693, 0
    %v2706 = vsel %vm2190, %v2694, 0
    %v2709 = vsel %vm2190, %v2695, 0
    %v2712 = vsel %vm2190, %v2696, 0
    %2714 = vmatprep.subr.mxu0 %v2706
    %2715 = vmatpush1.msra.mxu0 %v2703
    %2716 = vmatprep.subr.mxu0 0.0
    %2717 = vmatpush1.msra.mxu0 0.0
    %2718 = vmatprep.subr.mxu0 0.0
    %2719 = vmatpush1.msra.mxu0 0.0
    %2720 = vmatprep.subr.mxu0 0.0
    %2721 = vmatpush1.msra.mxu0 0.0
    %2722 = vmatprep.subr.mxu0 0.0
    %2723 = vmatpush1.msra.mxu0 0.0
    %2724 = vmatprep.subr.mxu0 0.0
    %2725 = vmatpush1.msra.mxu0 0.0
    %2726 = vmatprep.subr.mxu0 0.0
    %2727 = vmatpush1.msra.mxu0 0.0
    %2728 = vmatprep.subr.mxu0 0.0
    %2729 = vmatpush1.msra.mxu0 0.0
    %2730 = vmatprep.subr.mxu0 0.0
    %2731 = vmatpush1.msra.mxu0 0.0
    %2732 = vmatprep.subr.mxu0 0.0
    %2733 = vmatpush1.msra.mxu0 0.0
    %2734 = vmatprep.subr.mxu0 0.0
    %2735 = vmatpush1.msra.mxu0 0.0
    %2736 = vmatprep.subr.mxu0 0.0
    %2737 = vmatpush1.msra.mxu0 0.0
    %2738 = vmatprep.subr.mxu0 0.0
    %2739 = vmatpush1.msra.mxu0 0.0
    %2740 = vmatprep.subr.mxu0 0.0
    %2741 = vmatpush1.msra.mxu0 0.0
    %2742 = vmatprep.subr.mxu0 0.0
    %2743 = vmatpush1.msra.mxu0 0.0
    %2744 = vmatprep.subr.mxu0 0.0
    %2745 = vmatpush1.msra.mxu0 0.0
    %2746 = vmatprep.subr.mxu0 0.0
    %2747 = vmatpush1.msra.mxu0 0.0
    %2748 = vmatprep.subr.mxu0 0.0
    %2749 = vmatpush1.msra.mxu0 0.0
    %2750 = vmatprep.subr.mxu0 0.0
    %2751 = vmatpush1.msra.mxu0 0.0
    %2752 = vmatprep.subr.mxu0 0.0
    %2753 = vmatpush1.msra.mxu0 0.0
    %2754 = vmatprep.subr.mxu0 0.0
    %2755 = vmatpush1.msra.mxu0 0.0
    %2756 = vmatprep.subr.mxu0 0.0
    %2757 = vmatpush1.msra.mxu0 0.0
    %2758 = vmatprep.subr.mxu0 0.0
    %2759 = vmatpush1.msra.mxu0 0.0
    %2760 = vmatprep.subr.mxu0 0.0
    %2761 = vmatpush1.msra.mxu0 0.0
    %2762 = vmatprep.subr.mxu0 0.0
    %2763 = vmatpush1.msra.mxu0 0.0
    %2764 = vmatprep.subr.mxu0 0.0
    %2765 = vmatpush1.msra.mxu0 0.0
    %2766 = vmatprep.subr.mxu0 0.0
    %2767 = vmatpush1.msra.mxu0 0.0
    %2768 = vmatprep.subr.mxu0 0.0
    %2769 = vmatpush1.msra.mxu0 0.0
    %2770 = vmatprep.subr.mxu0 0.0
    %2771 = vmatpush1.msra.mxu0 0.0
    %2772 = vmatprep.subr.mxu0 0.0
    %2773 = vmatpush1.msra.mxu0 0.0
    %2774 = vmatprep.subr.mxu0 0.0
    %2775 = vmatpush1.msra.mxu0 0.0
    %2776 = vmatprep.subr.mxu0 0.0
    %2777 = vmatpush1.msra.mxu0 0.0
    %2778 = vmatprep.mubr.f32.mxu0 0.0
    %2779 = vmatmul.mubr.f32.gmra.mrb[0].mxu0 %v2700
    %v2780 = vpop.f32.mrb[0].mxu0
    %v2781 = vadd.f32 0.0, %v2780
    %v2782 = vpop.f32.mrb[0].mxu0
    %v2783 = vadd.f32 0.0, %v2782
    %2784 = vdwg.mxu0
    %2785 = vmatprep.subr.mxu0 %v2712
    %2786 = vmatpush1.msra.mxu0 %v2709
    %2787 = vmatprep.subr.mxu0 0.0
    %2788 = vmatpush1.msra.mxu0 0.0
    %2789 = vmatprep.subr.mxu0 0.0
    %2790 = vmatpush1.msra.mxu0 0.0
    %2791 = vmatprep.subr.mxu0 0.0
    %2792 = vmatpush1.msra.mxu0 0.0
    %2793 = vmatprep.subr.mxu0 0.0
    %2794 = vmatpush1.msra.mxu0 0.0
    %2795 = vmatprep.subr.mxu0 0.0
    %2796 = vmatpush1.msra.mxu0 0.0
    %2797 = vmatprep.subr.mxu0 0.0
    %2798 = vmatpush1.msra.mxu0 0.0
    %2799 = vmatprep.subr.mxu0 0.0
    %2800 = vmatpush1.msra.mxu0 0.0
    %2801 = vmatprep.subr.mxu0 0.0
    %2802 = vmatpush1.msra.mxu0 0.0
    %2803 = vmatprep.subr.mxu0 0.0
    %2804 = vmatpush1.msra.mxu0 0.0
    %2805 = vmatprep.subr.mxu0 0.0
    %2806 = vmatpush1.msra.mxu0 0.0
    %2807 = vmatprep.subr.mxu0 0.0
    %2808 = vmatpush1.msra.mxu0 0.0
    %2809 = vmatprep.subr.mxu0 0.0
    %2810 = vmatpush1.msra.mxu0 0.0
    %2811 = vmatprep.subr.mxu0 0.0
    %2812 = vmatpush1.msra.mxu0 0.0
    %2813 = vmatprep.subr.mxu0 0.0
    %2814 = vmatpush1.msra.mxu0 0.0
    %2815 = vmatprep.subr.mxu0 0.0
    %2816 = vmatpush1.msra.mxu0 0.0
    %2817 = vmatprep.subr.mxu0 0.0
    %2818 = vmatpush1.msra.mxu0 0.0
    %2819 = vmatprep.subr.mxu0 0.0
    %2820 = vmatpush1.msra.mxu0 0.0
    %2821 = vmatprep.subr.mxu0 0.0
    %2822 = vmatpush1.msra.mxu0 0.0
    %2823 = vmatprep.subr.mxu0 0.0
    %2824 = vmatpush1.msra.mxu0 0.0
    %2825 = vmatprep.subr.mxu0 0.0
    %2826 = vmatpush1.msra.mxu0 0.0
    %2827 = vmatprep.subr.mxu0 0.0
    %2828 = vmatpush1.msra.mxu0 0.0
    %2829 = vmatprep.subr.mxu0 0.0
    %2830 = vmatpush1.msra.mxu0 0.0
    %2831 = vmatprep.subr.mxu0 0.0
    %2832 = vmatpush1.msra.mxu0 0.0
    %2833 = vmatprep.subr.mxu0 0.0
    %2834 = vmatpush1.msra.mxu0 0.0
    %2835 = vmatprep.subr.mxu0 0.0
    %2836 = vmatpush1.msra.mxu0 0.0
    %2837 = vmatprep.subr.mxu0 0.0
    %2838 = vmatpush1.msra.mxu0 0.0
    %2839 = vmatprep.subr.mxu0 0.0
    %2840 = vmatpush1.msra.mxu0 0.0
    %2841 = vmatprep.subr.mxu0 0.0
    %2842 = vmatpush1.msra.mxu0 0.0
    %2843 = vmatprep.subr.mxu0 0.0
    %2844 = vmatpush1.msra.mxu0 0.0
    %2845 = vmatprep.subr.mxu0 0.0
    %2846 = vmatpush1.msra.mxu0 0.0
    %2847 = vmatprep.subr.mxu0 0.0
    %2848 = vmatpush1.msra.mxu0 0.0
    %2849 = vmatprep.mubr.f32.mxu0 0.0
    %2850 = vmatmul.mubr.f32.gmra.mrb[0].mxu0 %v2700
    %v2851 = vpop.f32.mrb[0].mxu0
    %v2852 = vadd.f32 0.0, %v2851
    %v2853 = vpop.f32.mrb[0].mxu0
    %v2854 = vadd.f32 0.0, %v2853
    %2855 = vdwg.mxu0
    %v2856 = vadd.f32 %v2677, %v2781
    %v2857 = vadd.f32 %v2678, %v2783
    %v2858 = vadd.f32 %v2679, %v2852
    %v2859 = vadd.f32 %v2680, %v2854
    %s2860 = scalar_lea.vmem %s6, 32
    %v2861 = vld [vmem:[%s2860] sm:$0xff]
    %v2863 = vsel %vm2186, %v2861, 0
    %v2866 = vsel %vm2190, %v2146, 0
    %v2869 = vsel %vm2190, %v2147, 0
    %v2872 = vsel %vm2190, %v2148, 0
    %v2875 = vsel %vm2190, %v2149, 0
    %2877 = vmatprep.subr.mxu0 %v2869
    %2878 = vmatpush1.msra.mxu0 %v2866
    %2879 = vmatprep.subr.mxu0 0.0
    %2880 = vmatpush1.msra.mxu0 0.0
    %2881 = vmatprep.subr.mxu0 0.0
    %2882 = vmatpush1.msra.mxu0 0.0
    %2883 = vmatprep.subr.mxu0 0.0
    %2884 = vmatpush1.msra.mxu0 0.0
    %2885 = vmatprep.subr.mxu0 0.0
    %2886 = vmatpush1.msra.mxu0 0.0
    %2887 = vmatprep.subr.mxu0 0.0
    %2888 = vmatpush1.msra.mxu0 0.0
    %2889 = vmatprep.subr.mxu0 0.0
    %2890 = vmatpush1.msra.mxu0 0.0
    %2891 = vmatprep.subr.mxu0 0.0
    %2892 = vmatpush1.msra.mxu0 0.0
    %2893 = vmatprep.subr.mxu0 0.0
    %2894 = vmatpush1.msra.mxu0 0.0
    %2895 = vmatprep.subr.mxu0 0.0
    %2896 = vmatpush1.msra.mxu0 0.0
    %2897 = vmatprep.subr.mxu0 0.0
    %2898 = vmatpush1.msra.mxu0 0.0
    %2899 = vmatprep.subr.mxu0 0.0
    %2900 = vmatpush1.msra.mxu0 0.0
    %2901 = vmatprep.subr.mxu0 0.0
    %2902 = vmatpush1.msra.mxu0 0.0
    %2903 = vmatprep.subr.mxu0 0.0
    %2904 = vmatpush1.msra.mxu0 0.0
    %2905 = vmatprep.subr.mxu0 0.0
    %2906 = vmatpush1.msra.mxu0 0.0
    %2907 = vmatprep.subr.mxu0 0.0
    %2908 = vmatpush1.msra.mxu0 0.0
    %2909 = vmatprep.subr.mxu0 0.0
    %2910 = vmatpush1.msra.mxu0 0.0
    %2911 = vmatprep.subr.mxu0 0.0
    %2912 = vmatpush1.msra.mxu0 0.0
    %2913 = vmatprep.subr.mxu0 0.0
    %2914 = vmatpush1.msra.mxu0 0.0
    %2915 = vmatprep.subr.mxu0 0.0
    %2916 = vmatpush1.msra.mxu0 0.0
    %2917 = vmatprep.subr.mxu0 0.0
    %2918 = vmatpush1.msra.mxu0 0.0
    %2919 = vmatprep.subr.mxu0 0.0
    %2920 = vmatpush1.msra.mxu0 0.0
    %2921 = vmatprep.subr.mxu0 0.0
    %2922 = vmatpush1.msra.mxu0 0.0
    %2923 = vmatprep.subr.mxu0 0.0
    %2924 = vmatpush1.msra.mxu0 0.0
    %2925 = vmatprep.subr.mxu0 0.0
    %2926 = vmatpush1.msra.mxu0 0.0
    %2927 = vmatprep.subr.mxu0 0.0
    %2928 = vmatpush1.msra.mxu0 0.0
    %2929 = vmatprep.subr.mxu0 0.0
    %2930 = vmatpush1.msra.mxu0 0.0
    %2931 = vmatprep.subr.mxu0 0.0
    %2932 = vmatpush1.msra.mxu0 0.0
    %2933 = vmatprep.subr.mxu0 0.0
    %2934 = vmatpush1.msra.mxu0 0.0
    %2935 = vmatprep.subr.mxu0 0.0
    %2936 = vmatpush1.msra.mxu0 0.0
    %2937 = vmatprep.subr.mxu0 0.0
    %2938 = vmatpush1.msra.mxu0 0.0
    %2939 = vmatprep.subr.mxu0 0.0
    %2940 = vmatpush1.msra.mxu0 0.0
    %2941 = vmatprep.mubr.f32.mxu0 0.0
    %2942 = vmatmul.mubr.f32.gmra.mrb[0].mxu0 %v2863
    %v2943 = vpop.f32.mrb[0].mxu0
    %v2944 = vadd.f32 0.0, %v2943
    %v2945 = vpop.f32.mrb[0].mxu0
    %v2946 = vadd.f32 0.0, %v2945
    %2947 = vdwg.mxu0
    %2948 = vmatprep.subr.mxu0 %v2875
    %2949 = vmatpush1.msra.mxu0 %v2872
    %2950 = vmatprep.subr.mxu0 0.0
    %2951 = vmatpush1.msra.mxu0 0.0
    %2952 = vmatprep.subr.mxu0 0.0
    %2953 = vmatpush1.msra.mxu0 0.0
    %2954 = vmatprep.subr.mxu0 0.0
    %2955 = vmatpush1.msra.mxu0 0.0
    %2956 = vmatprep.subr.mxu0 0.0
    %2957 = vmatpush1.msra.mxu0 0.0
    %2958 = vmatprep.subr.mxu0 0.0
    %2959 = vmatpush1.msra.mxu0 0.0
    %2960 = vmatprep.subr.mxu0 0.0
    %2961 = vmatpush1.msra.mxu0 0.0
    %2962 = vmatprep.subr.mxu0 0.0
    %2963 = vmatpush1.msra.mxu0 0.0
    %2964 = vmatprep.subr.mxu0 0.0
    %2965 = vmatpush1.msra.mxu0 0.0
    %2966 = vmatprep.subr.mxu0 0.0
    %2967 = vmatpush1.msra.mxu0 0.0
    %2968 = vmatprep.subr.mxu0 0.0
    %2969 = vmatpush1.msra.mxu0 0.0
    %2970 = vmatprep.subr.mxu0 0.0
    %2971 = vmatpush1.msra.mxu0 0.0
    %2972 = vmatprep.subr.mxu0 0.0
    %2973 = vmatpush1.msra.mxu0 0.0
    %2974 = vmatprep.subr.mxu0 0.0
    %2975 = vmatpush1.msra.mxu0 0.0
    %2976 = vmatprep.subr.mxu0 0.0
    %2977 = vmatpush1.msra.mxu0 0.0
    %2978 = vmatprep.subr.mxu0 0.0
    %2979 = vmatpush1.msra.mxu0 0.0
    %2980 = vmatprep.subr.mxu0 0.0
    %2981 = vmatpush1.msra.mxu0 0.0
    %2982 = vmatprep.subr.mxu0 0.0
    %2983 = vmatpush1.msra.mxu0 0.0
    %2984 = vmatprep.subr.mxu0 0.0
    %2985 = vmatpush1.msra.mxu0 0.0
    %2986 = vmatprep.subr.mxu0 0.0
    %2987 = vmatpush1.msra.mxu0 0.0
    %2988 = vmatprep.subr.mxu0 0.0
    %2989 = vmatpush1.msra.mxu0 0.0
    %2990 = vmatprep.subr.mxu0 0.0
    %2991 = vmatpush1.msra.mxu0 0.0
    %2992 = vmatprep.subr.mxu0 0.0
    %2993 = vmatpush1.msra.mxu0 0.0
    %2994 = vmatprep.subr.mxu0 0.0
    %2995 = vmatpush1.msra.mxu0 0.0
    %2996 = vmatprep.subr.mxu0 0.0
    %2997 = vmatpush1.msra.mxu0 0.0
    %2998 = vmatprep.subr.mxu0 0.0
    %2999 = vmatpush1.msra.mxu0 0.0
    %3000 = vmatprep.subr.mxu0 0.0
    %3001 = vmatpush1.msra.mxu0 0.0
    %3002 = vmatprep.subr.mxu0 0.0
    %3003 = vmatpush1.msra.mxu0 0.0
    %3004 = vmatprep.subr.mxu0 0.0
    %3005 = vmatpush1.msra.mxu0 0.0
    %3006 = vmatprep.subr.mxu0 0.0
    %3007 = vmatpush1.msra.mxu0 0.0
    %3008 = vmatprep.subr.mxu0 0.0
    %3009 = vmatpush1.msra.mxu0 0.0
    %3010 = vmatprep.subr.mxu0 0.0
    %3011 = vmatpush1.msra.mxu0 0.0
    %3012 = vmatprep.mubr.f32.mxu0 0.0
    %3013 = vmatmul.mubr.f32.gmra.mrb[0].mxu0 %v2863
    %v3014 = vpop.f32.mrb[0].mxu0
    %v3015 = vadd.f32 0.0, %v3014
    %v3016 = vpop.f32.mrb[0].mxu0
    %v3017 = vadd.f32 0.0, %v3016
    %3018 = vdwg.mxu0
    %v3019 = vadd.f32 %v2856, %v2944
    %v3020 = vadd.f32 %v2857, %v2946
    %v3021 = vadd.f32 %v2858, %v3015
    %v3022 = vadd.f32 %v2859, %v3017
    %3023 = vrot.lane.b32.xlu0 %v2146, 127
    %v3024 = vpop.permute.xlu0 %3023
    %3025 = vrot.lane.b32.xlu0 %v2147, 127
    %v3026 = vpop.permute.xlu0 %3025
    %3027 = vrot.lane.b32.xlu0 %v2148, 127
    %v3028 = vpop.permute.xlu0 %3027
    %3029 = vrot.lane.b32.xlu0 %v2149, 127
    %v3030 = vpop.permute.xlu0 %3029
    %v3031 = vsel %vm368, %v3028, %v3030
    %v3032 = vsel %vm368, %v3026, %v3028
    %v3033 = vsel %vm368, %v3024, %v3026
    %v3034 = vsel %vm368, %v3030, %v3024
    %v3035 = vmul.f32 %v3033, %v379
    %v3036 = vmul.f32 %v3032, %v383
    %v3037 = vmul.f32 %v3031, %v387
    %v3038 = vmul.f32 %v3034, %v391
    %s3039 = scalar_lea.vmem %s6, 40
    %v3040 = vld [vmem:[%s3039] sm:$0xff]
    %v3042 = vsel %vm2186, %v3040, 0
    %v3045 = vsel %vm2190, %v3035, 0
    %v3048 = vsel %vm2190, %v3036, 0
    %v3051 = vsel %vm2190, %v3037, 0
    %v3054 = vsel %vm2190, %v3038, 0
    %3056 = vmatprep.subr.mxu0 %v3048
    %3057 = vmatpush1.msra.mxu0 %v3045
    %3058 = vmatprep.subr.mxu0 0.0
    %3059 = vmatpush1.msra.mxu0 0.0
    %3060 = vmatprep.subr.mxu0 0.0
    %3061 = vmatpush1.msra.mxu0 0.0
    %3062 = vmatprep.subr.mxu0 0.0
    %3063 = vmatpush1.msra.mxu0 0.0
    %3064 = vmatprep.subr.mxu0 0.0
    %3065 = vmatpush1.msra.mxu0 0.0
    %3066 = vmatprep.subr.mxu0 0.0
    %3067 = vmatpush1.msra.mxu0 0.0
    %3068 = vmatprep.subr.mxu0 0.0
    %3069 = vmatpush1.msra.mxu0 0.0
    %3070 = vmatprep.subr.mxu0 0.0
    %3071 = vmatpush1.msra.mxu0 0.0
    %3072 = vmatprep.subr.mxu0 0.0
    %3073 = vmatpush1.msra.mxu0 0.0
    %3074 = vmatprep.subr.mxu0 0.0
    %3075 = vmatpush1.msra.mxu0 0.0
    %3076 = vmatprep.subr.mxu0 0.0
    %3077 = vmatpush1.msra.mxu0 0.0
    %3078 = vmatprep.subr.mxu0 0.0
    %3079 = vmatpush1.msra.mxu0 0.0
    %3080 = vmatprep.subr.mxu0 0.0
    %3081 = vmatpush1.msra.mxu0 0.0
    %3082 = vmatprep.subr.mxu0 0.0
    %3083 = vmatpush1.msra.mxu0 0.0
    %3084 = vmatprep.subr.mxu0 0.0
    %3085 = vmatpush1.msra.mxu0 0.0
    %3086 = vmatprep.subr.mxu0 0.0
    %3087 = vmatpush1.msra.mxu0 0.0
    %3088 = vmatprep.subr.mxu0 0.0
    %3089 = vmatpush1.msra.mxu0 0.0
    %3090 = vmatprep.subr.mxu0 0.0
    %3091 = vmatpush1.msra.mxu0 0.0
    %3092 = vmatprep.subr.mxu0 0.0
    %3093 = vmatpush1.msra.mxu0 0.0
    %3094 = vmatprep.subr.mxu0 0.0
    %3095 = vmatpush1.msra.mxu0 0.0
    %3096 = vmatprep.subr.mxu0 0.0
    %3097 = vmatpush1.msra.mxu0 0.0
    %3098 = vmatprep.subr.mxu0 0.0
    %3099 = vmatpush1.msra.mxu0 0.0
    %3100 = vmatprep.subr.mxu0 0.0
    %3101 = vmatpush1.msra.mxu0 0.0
    %3102 = vmatprep.subr.mxu0 0.0
    %3103 = vmatpush1.msra.mxu0 0.0
    %3104 = vmatprep.subr.mxu0 0.0
    %3105 = vmatpush1.msra.mxu0 0.0
    %3106 = vmatprep.subr.mxu0 0.0
    %3107 = vmatpush1.msra.mxu0 0.0
    %3108 = vmatprep.subr.mxu0 0.0
    %3109 = vmatpush1.msra.mxu0 0.0
    %3110 = vmatprep.subr.mxu0 0.0
    %3111 = vmatpush1.msra.mxu0 0.0
    %3112 = vmatprep.subr.mxu0 0.0
    %3113 = vmatpush1.msra.mxu0 0.0
    %3114 = vmatprep.subr.mxu0 0.0
    %3115 = vmatpush1.msra.mxu0 0.0
    %3116 = vmatprep.subr.mxu0 0.0
    %3117 = vmatpush1.msra.mxu0 0.0
    %3118 = vmatprep.subr.mxu0 0.0
    %3119 = vmatpush1.msra.mxu0 0.0
    %3120 = vmatprep.mubr.f32.mxu0 0.0
    %3121 = vmatmul.mubr.f32.gmra.mrb[0].mxu0 %v3042
    %v3122 = vpop.f32.mrb[0].mxu0
    %v3123 = vadd.f32 0.0, %v3122
    %v3124 = vpop.f32.mrb[0].mxu0
    %v3125 = vadd.f32 0.0, %v3124
    %3126 = vdwg.mxu0
    %3127 = vmatprep.subr.mxu0 %v3054
    %3128 = vmatpush1.msra.mxu0 %v3051
    %3129 = vmatprep.subr.mxu0 0.0
    %3130 = vmatpush1.msra.mxu0 0.0
    %3131 = vmatprep.subr.mxu0 0.0
    %3132 = vmatpush1.msra.mxu0 0.0
    %3133 = vmatprep.subr.mxu0 0.0
    %3134 = vmatpush1.msra.mxu0 0.0
    %3135 = vmatprep.subr.mxu0 0.0
    %3136 = vmatpush1.msra.mxu0 0.0
    %3137 = vmatprep.subr.mxu0 0.0
    %3138 = vmatpush1.msra.mxu0 0.0
    %3139 = vmatprep.subr.mxu0 0.0
    %3140 = vmatpush1.msra.mxu0 0.0
    %3141 = vmatprep.subr.mxu0 0.0
    %3142 = vmatpush1.msra.mxu0 0.0
    %3143 = vmatprep.subr.mxu0 0.0
    %3144 = vmatpush1.msra.mxu0 0.0
    %3145 = vmatprep.subr.mxu0 0.0
    %3146 = vmatpush1.msra.mxu0 0.0
    %3147 = vmatprep.subr.mxu0 0.0
    %3148 = vmatpush1.msra.mxu0 0.0
    %3149 = vmatprep.subr.mxu0 0.0
    %3150 = vmatpush1.msra.mxu0 0.0
    %3151 = vmatprep.subr.mxu0 0.0
    %3152 = vmatpush1.msra.mxu0 0.0
    %3153 = vmatprep.subr.mxu0 0.0
    %3154 = vmatpush1.msra.mxu0 0.0
    %3155 = vmatprep.subr.mxu0 0.0
    %3156 = vmatpush1.msra.mxu0 0.0
    %3157 = vmatprep.subr.mxu0 0.0
    %3158 = vmatpush1.msra.mxu0 0.0
    %3159 = vmatprep.subr.mxu0 0.0
    %3160 = vmatpush1.msra.mxu0 0.0
    %3161 = vmatprep.subr.mxu0 0.0
    %3162 = vmatpush1.msra.mxu0 0.0
    %3163 = vmatprep.subr.mxu0 0.0
    %3164 = vmatpush1.msra.mxu0 0.0
    %3165 = vmatprep.subr.mxu0 0.0
    %3166 = vmatpush1.msra.mxu0 0.0
    %3167 = vmatprep.subr.mxu0 0.0
    %3168 = vmatpush1.msra.mxu0 0.0
    %3169 = vmatprep.subr.mxu0 0.0
    %3170 = vmatpush1.msra.mxu0 0.0
    %3171 = vmatprep.subr.mxu0 0.0
    %3172 = vmatpush1.msra.mxu0 0.0
    %3173 = vmatprep.subr.mxu0 0.0
    %3174 = vmatpush1.msra.mxu0 0.0
    %3175 = vmatprep.subr.mxu0 0.0
    %3176 = vmatpush1.msra.mxu0 0.0
    %3177 = vmatprep.subr.mxu0 0.0
    %3178 = vmatpush1.msra.mxu0 0.0
    %3179 = vmatprep.subr.mxu0 0.0
    %3180 = vmatpush1.msra.mxu0 0.0
    %3181 = vmatprep.subr.mxu0 0.0
    %3182 = vmatpush1.msra.mxu0 0.0
    %3183 = vmatprep.subr.mxu0 0.0
    %3184 = vmatpush1.msra.mxu0 0.0
    %3185 = vmatprep.subr.mxu0 0.0
    %3186 = vmatpush1.msra.mxu0 0.0
    %3187 = vmatprep.subr.mxu0 0.0
    %3188 = vmatpush1.msra.mxu0 0.0
    %3189 = vmatprep.subr.mxu0 0.0
    %3190 = vmatpush1.msra.mxu0 0.0
    %3191 = vmatprep.mubr.f32.mxu0 0.0
    %3192 = vmatmul.mubr.f32.gmra.mrb[0].mxu0 %v3042
    %v3193 = vpop.f32.mrb[0].mxu0
    %v3194 = vadd.f32 0.0, %v3193
    %v3195 = vpop.f32.mrb[0].mxu0
    %v3196 = vadd.f32 0.0, %v3195
    %3197 = vdwg.mxu0
    %v3198 = vadd.f32 %v3019, %v3123
    %v3199 = vadd.f32 %v3020, %v3125
    %v3200 = vadd.f32 %v3021, %v3194
    %v3201 = vadd.f32 %v3022, %v3196
    %3202 = vrot.lane.b32.xlu0 %v2146, 113
    %v3203 = vpop.permute.xlu0 %3202
    %3204 = vrot.lane.b32.xlu0 %v2147, 113
    %v3205 = vpop.permute.xlu0 %3204
    %3206 = vrot.lane.b32.xlu0 %v2148, 113
    %v3207 = vpop.permute.xlu0 %3206
    %3208 = vrot.lane.b32.xlu0 %v2149, 113
    %v3209 = vpop.permute.xlu0 %3208
    %v3210 = vsel %vm439, %v3207, %v3209
    %v3211 = vsel %vm439, %v3205, %v3207
    %v3212 = vsel %vm439, %v3203, %v3205
    %v3213 = vsel %vm439, %v3209, %v3203
    %v3214 = vmul.f32 %v3212, %v450
    %v3215 = vmul.f32 %v3211, %v454
    %v3216 = vmul.f32 %v3210, %v458
    %v3217 = vmul.f32 %v3213, %v462
    %s3218 = scalar_lea.vmem %s6, 48
    %v3219 = vld [vmem:[%s3218] sm:$0xff]
    %v3221 = vsel %vm2186, %v3219, 0
    %v3224 = vsel %vm2190, %v3214, 0
    %v3227 = vsel %vm2190, %v3215, 0
    %v3230 = vsel %vm2190, %v3216, 0
    %v3233 = vsel %vm2190, %v3217, 0
    %3235 = vmatprep.subr.mxu0 %v3227
    %3236 = vmatpush1.msra.mxu0 %v3224
    %3237 = vmatprep.subr.mxu0 0.0
    %3238 = vmatpush1.msra.mxu0 0.0
    %3239 = vmatprep.subr.mxu0 0.0
    %3240 = vmatpush1.msra.mxu0 0.0
    %3241 = vmatprep.subr.mxu0 0.0
    %3242 = vmatpush1.msra.mxu0 0.0
    %3243 = vmatprep.subr.mxu0 0.0
    %3244 = vmatpush1.msra.mxu0 0.0
    %3245 = vmatprep.subr.mxu0 0.0
    %3246 = vmatpush1.msra.mxu0 0.0
    %3247 = vmatprep.subr.mxu0 0.0
    %3248 = vmatpush1.msra.mxu0 0.0
    %3249 = vmatprep.subr.mxu0 0.0
    %3250 = vmatpush1.msra.mxu0 0.0
    %3251 = vmatprep.subr.mxu0 0.0
    %3252 = vmatpush1.msra.mxu0 0.0
    %3253 = vmatprep.subr.mxu0 0.0
    %3254 = vmatpush1.msra.mxu0 0.0
    %3255 = vmatprep.subr.mxu0 0.0
    %3256 = vmatpush1.msra.mxu0 0.0
    %3257 = vmatprep.subr.mxu0 0.0
    %3258 = vmatpush1.msra.mxu0 0.0
    %3259 = vmatprep.subr.mxu0 0.0
    %3260 = vmatpush1.msra.mxu0 0.0
    %3261 = vmatprep.subr.mxu0 0.0
    %3262 = vmatpush1.msra.mxu0 0.0
    %3263 = vmatprep.subr.mxu0 0.0
    %3264 = vmatpush1.msra.mxu0 0.0
    %3265 = vmatprep.subr.mxu0 0.0
    %3266 = vmatpush1.msra.mxu0 0.0
    %3267 = vmatprep.subr.mxu0 0.0
    %3268 = vmatpush1.msra.mxu0 0.0
    %3269 = vmatprep.subr.mxu0 0.0
    %3270 = vmatpush1.msra.mxu0 0.0
    %3271 = vmatprep.subr.mxu0 0.0
    %3272 = vmatpush1.msra.mxu0 0.0
    %3273 = vmatprep.subr.mxu0 0.0
    %3274 = vmatpush1.msra.mxu0 0.0
    %3275 = vmatprep.subr.mxu0 0.0
    %3276 = vmatpush1.msra.mxu0 0.0
    %3277 = vmatprep.subr.mxu0 0.0
    %3278 = vmatpush1.msra.mxu0 0.0
    %3279 = vmatprep.subr.mxu0 0.0
    %3280 = vmatpush1.msra.mxu0 0.0
    %3281 = vmatprep.subr.mxu0 0.0
    %3282 = vmatpush1.msra.mxu0 0.0
    %3283 = vmatprep.subr.mxu0 0.0
    %3284 = vmatpush1.msra.mxu0 0.0
    %3285 = vmatprep.subr.mxu0 0.0
    %3286 = vmatpush1.msra.mxu0 0.0
    %3287 = vmatprep.subr.mxu0 0.0
    %3288 = vmatpush1.msra.mxu0 0.0
    %3289 = vmatprep.subr.mxu0 0.0
    %3290 = vmatpush1.msra.mxu0 0.0
    %3291 = vmatprep.subr.mxu0 0.0
    %3292 = vmatpush1.msra.mxu0 0.0
    %3293 = vmatprep.subr.mxu0 0.0
    %3294 = vmatpush1.msra.mxu0 0.0
    %3295 = vmatprep.subr.mxu0 0.0
    %3296 = vmatpush1.msra.mxu0 0.0
    %3297 = vmatprep.subr.mxu0 0.0
    %3298 = vmatpush1.msra.mxu0 0.0
    %3299 = vmatprep.mubr.f32.mxu0 0.0
    %3300 = vmatmul.mubr.f32.gmra.mrb[0].mxu0 %v3221
    %v3301 = vpop.f32.mrb[0].mxu0
    %v3302 = vadd.f32 0.0, %v3301
    %v3303 = vpop.f32.mrb[0].mxu0
    %v3304 = vadd.f32 0.0, %v3303
    %3305 = vdwg.mxu0
    %3306 = vmatprep.subr.mxu0 %v3233
    %3307 = vmatpush1.msra.mxu0 %v3230
    %3308 = vmatprep.subr.mxu0 0.0
    %3309 = vmatpush1.msra.mxu0 0.0
    %3310 = vmatprep.subr.mxu0 0.0
    %3311 = vmatpush1.msra.mxu0 0.0
    %3312 = vmatprep.subr.mxu0 0.0
    %3313 = vmatpush1.msra.mxu0 0.0
    %3314 = vmatprep.subr.mxu0 0.0
    %3315 = vmatpush1.msra.mxu0 0.0
    %3316 = vmatprep.subr.mxu0 0.0
    %3317 = vmatpush1.msra.mxu0 0.0
    %3318 = vmatprep.subr.mxu0 0.0
    %3319 = vmatpush1.msra.mxu0 0.0
    %3320 = vmatprep.subr.mxu0 0.0
    %3321 = vmatpush1.msra.mxu0 0.0
    %3322 = vmatprep.subr.mxu0 0.0
    %3323 = vmatpush1.msra.mxu0 0.0
    %3324 = vmatprep.subr.mxu0 0.0
    %3325 = vmatpush1.msra.mxu0 0.0
    %3326 = vmatprep.subr.mxu0 0.0
    %3327 = vmatpush1.msra.mxu0 0.0
    %3328 = vmatprep.subr.mxu0 0.0
    %3329 = vmatpush1.msra.mxu0 0.0
    %3330 = vmatprep.subr.mxu0 0.0
    %3331 = vmatpush1.msra.mxu0 0.0
    %3332 = vmatprep.subr.mxu0 0.0
    %3333 = vmatpush1.msra.mxu0 0.0
    %3334 = vmatprep.subr.mxu0 0.0
    %3335 = vmatpush1.msra.mxu0 0.0
    %3336 = vmatprep.subr.mxu0 0.0
    %3337 = vmatpush1.msra.mxu0 0.0
    %3338 = vmatprep.subr.mxu0 0.0
    %3339 = vmatpush1.msra.mxu0 0.0
    %3340 = vmatprep.subr.mxu0 0.0
    %3341 = vmatpush1.msra.mxu0 0.0
    %3342 = vmatprep.subr.mxu0 0.0
    %3343 = vmatpush1.msra.mxu0 0.0
    %3344 = vmatprep.subr.mxu0 0.0
    %3345 = vmatpush1.msra.mxu0 0.0
    %3346 = vmatprep.subr.mxu0 0.0
    %3347 = vmatpush1.msra.mxu0 0.0
    %3348 = vmatprep.subr.mxu0 0.0
    %3349 = vmatpush1.msra.mxu0 0.0
    %3350 = vmatprep.subr.mxu0 0.0
    %3351 = vmatpush1.msra.mxu0 0.0
    %3352 = vmatprep.subr.mxu0 0.0
    %3353 = vmatpush1.msra.mxu0 0.0
    %3354 = vmatprep.subr.mxu0 0.0
    %3355 = vmatpush1.msra.mxu0 0.0
    %3356 = vmatprep.subr.mxu0 0.0
    %3357 = vmatpush1.msra.mxu0 0.0
    %3358 = vmatprep.subr.mxu0 0.0
    %3359 = vmatpush1.msra.mxu0 0.0
    %3360 = vmatprep.subr.mxu0 0.0
    %3361 = vmatpush1.msra.mxu0 0.0
    %3362 = vmatprep.subr.mxu0 0.0
    %3363 = vmatpush1.msra.mxu0 0.0
    %3364 = vmatprep.subr.mxu0 0.0
    %3365 = vmatpush1.msra.mxu0 0.0
    %3366 = vmatprep.subr.mxu0 0.0
    %3367 = vmatpush1.msra.mxu0 0.0
    %3368 = vmatprep.subr.mxu0 0.0
    %3369 = vmatpush1.msra.mxu0 0.0
    %3370 = vmatprep.mubr.f32.mxu0 0.0
    %3371 = vmatmul.mubr.f32.gmra.mrb[0].mxu0 %v3221
    %v3372 = vpop.f32.mrb[0].mxu0
    %v3373 = vadd.f32 0.0, %v3372
    %v3374 = vpop.f32.mrb[0].mxu0
    %v3375 = vadd.f32 0.0, %v3374
    %3376 = vdwg.mxu0
    %v3377 = vadd.f32 %v3198, %v3302
    %v3378 = vadd.f32 %v3199, %v3304
    %v3379 = vadd.f32 %v3200, %v3373
    %v3380 = vadd.f32 %v3201, %v3375
    %3381 = vrot.lane.b32.xlu0 %v2146, 112
    %v3382 = vpop.permute.xlu0 %3381
    %3383 = vrot.lane.b32.xlu0 %v2147, 112
    %v3384 = vpop.permute.xlu0 %3383
    %3385 = vrot.lane.b32.xlu0 %v2148, 112
    %v3386 = vpop.permute.xlu0 %3385
    %3387 = vrot.lane.b32.xlu0 %v2149, 112
    %v3388 = vpop.permute.xlu0 %3387
    %v3389 = vsel %vm510, %v3386, %v3388
    %v3390 = vsel %vm510, %v3384, %v3386
    %v3391 = vsel %vm510, %v3382, %v3384
    %v3392 = vsel %vm510, %v3388, %v3382
    %v3393 = vmul.f32 %v3391, %v521
    %v3394 = vmul.f32 %v3390, %v525
    %v3395 = vmul.f32 %v3389, %v529
    %v3396 = vmul.f32 %v3392, %v533
    %s3397 = scalar_lea.vmem %s6, 56
    %v3398 = vld [vmem:[%s3397] sm:$0xff]
    %v3400 = vsel %vm2186, %v3398, 0
    %v3403 = vsel %vm2190, %v3393, 0
    %v3406 = vsel %vm2190, %v3394, 0
    %v3409 = vsel %vm2190, %v3395, 0
    %v3412 = vsel %vm2190, %v3396, 0
    %3414 = vmatprep.subr.mxu0 %v3406
    %3415 = vmatpush1.msra.mxu0 %v3403
    %3416 = vmatprep.subr.mxu0 0.0
    %3417 = vmatpush1.msra.mxu0 0.0
    %3418 = vmatprep.subr.mxu0 0.0
    %3419 = vmatpush1.msra.mxu0 0.0
    %3420 = vmatprep.subr.mxu0 0.0
    %3421 = vmatpush1.msra.mxu0 0.0
    %3422 = vmatprep.subr.mxu0 0.0
    %3423 = vmatpush1.msra.mxu0 0.0
    %3424 = vmatprep.subr.mxu0 0.0
    %3425 = vmatpush1.msra.mxu0 0.0
    %3426 = vmatprep.subr.mxu0 0.0
    %3427 = vmatpush1.msra.mxu0 0.0
    %3428 = vmatprep.subr.mxu0 0.0
    %3429 = vmatpush1.msra.mxu0 0.0
    %3430 = vmatprep.subr.mxu0 0.0
    %3431 = vmatpush1.msra.mxu0 0.0
    %3432 = vmatprep.subr.mxu0 0.0
    %3433 = vmatpush1.msra.mxu0 0.0
    %3434 = vmatprep.subr.mxu0 0.0
    %3435 = vmatpush1.msra.mxu0 0.0
    %3436 = vmatprep.subr.mxu0 0.0
    %3437 = vmatpush1.msra.mxu0 0.0
    %3438 = vmatprep.subr.mxu0 0.0
    %3439 = vmatpush1.msra.mxu0 0.0
    %3440 = vmatprep.subr.mxu0 0.0
    %3441 = vmatpush1.msra.mxu0 0.0
    %3442 = vmatprep.subr.mxu0 0.0
    %3443 = vmatpush1.msra.mxu0 0.0
    %3444 = vmatprep.subr.mxu0 0.0
    %3445 = vmatpush1.msra.mxu0 0.0
    %3446 = vmatprep.subr.mxu0 0.0
    %3447 = vmatpush1.msra.mxu0 0.0
    %3448 = vmatprep.subr.mxu0 0.0
    %3449 = vmatpush1.msra.mxu0 0.0
    %3450 = vmatprep.subr.mxu0 0.0
    %3451 = vmatpush1.msra.mxu0 0.0
    %3452 = vmatprep.subr.mxu0 0.0
    %3453 = vmatpush1.msra.mxu0 0.0
    %3454 = vmatprep.subr.mxu0 0.0
    %3455 = vmatpush1.msra.mxu0 0.0
    %3456 = vmatprep.subr.mxu0 0.0
    %3457 = vmatpush1.msra.mxu0 0.0
    %3458 = vmatprep.subr.mxu0 0.0
    %3459 = vmatpush1.msra.mxu0 0.0
    %3460 = vmatprep.subr.mxu0 0.0
    %3461 = vmatpush1.msra.mxu0 0.0
    %3462 = vmatprep.subr.mxu0 0.0
    %3463 = vmatpush1.msra.mxu0 0.0
    %3464 = vmatprep.subr.mxu0 0.0
    %3465 = vmatpush1.msra.mxu0 0.0
    %3466 = vmatprep.subr.mxu0 0.0
    %3467 = vmatpush1.msra.mxu0 0.0
    %3468 = vmatprep.subr.mxu0 0.0
    %3469 = vmatpush1.msra.mxu0 0.0
    %3470 = vmatprep.subr.mxu0 0.0
    %3471 = vmatpush1.msra.mxu0 0.0
    %3472 = vmatprep.subr.mxu0 0.0
    %3473 = vmatpush1.msra.mxu0 0.0
    %3474 = vmatprep.subr.mxu0 0.0
    %3475 = vmatpush1.msra.mxu0 0.0
    %3476 = vmatprep.subr.mxu0 0.0
    %3477 = vmatpush1.msra.mxu0 0.0
    %3478 = vmatprep.mubr.f32.mxu0 0.0
    %3479 = vmatmul.mubr.f32.gmra.mrb[0].mxu0 %v3400
    %v3480 = vpop.f32.mrb[0].mxu0
    %v3481 = vadd.f32 0.0, %v3480
    %v3482 = vpop.f32.mrb[0].mxu0
    %v3483 = vadd.f32 0.0, %v3482
    %3484 = vdwg.mxu0
    %3485 = vmatprep.subr.mxu0 %v3412
    %3486 = vmatpush1.msra.mxu0 %v3409
    %3487 = vmatprep.subr.mxu0 0.0
    %3488 = vmatpush1.msra.mxu0 0.0
    %3489 = vmatprep.subr.mxu0 0.0
    %3490 = vmatpush1.msra.mxu0 0.0
    %3491 = vmatprep.subr.mxu0 0.0
    %3492 = vmatpush1.msra.mxu0 0.0
    %3493 = vmatprep.subr.mxu0 0.0
    %3494 = vmatpush1.msra.mxu0 0.0
    %3495 = vmatprep.subr.mxu0 0.0
    %3496 = vmatpush1.msra.mxu0 0.0
    %3497 = vmatprep.subr.mxu0 0.0
    %3498 = vmatpush1.msra.mxu0 0.0
    %3499 = vmatprep.subr.mxu0 0.0
    %3500 = vmatpush1.msra.mxu0 0.0
    %3501 = vmatprep.subr.mxu0 0.0
    %3502 = vmatpush1.msra.mxu0 0.0
    %3503 = vmatprep.subr.mxu0 0.0
    %3504 = vmatpush1.msra.mxu0 0.0
    %3505 = vmatprep.subr.mxu0 0.0
    %3506 = vmatpush1.msra.mxu0 0.0
    %3507 = vmatprep.subr.mxu0 0.0
    %3508 = vmatpush1.msra.mxu0 0.0
    %3509 = vmatprep.subr.mxu0 0.0
    %3510 = vmatpush1.msra.mxu0 0.0
    %3511 = vmatprep.subr.mxu0 0.0
    %3512 = vmatpush1.msra.mxu0 0.0
    %3513 = vmatprep.subr.mxu0 0.0
    %3514 = vmatpush1.msra.mxu0 0.0
    %3515 = vmatprep.subr.mxu0 0.0
    %3516 = vmatpush1.msra.mxu0 0.0
    %3517 = vmatprep.subr.mxu0 0.0
    %3518 = vmatpush1.msra.mxu0 0.0
    %3519 = vmatprep.subr.mxu0 0.0
    %3520 = vmatpush1.msra.mxu0 0.0
    %3521 = vmatprep.subr.mxu0 0.0
    %3522 = vmatpush1.msra.mxu0 0.0
    %3523 = vmatprep.subr.mxu0 0.0
    %3524 = vmatpush1.msra.mxu0 0.0
    %3525 = vmatprep.subr.mxu0 0.0
    %3526 = vmatpush1.msra.mxu0 0.0
    %3527 = vmatprep.subr.mxu0 0.0
    %3528 = vmatpush1.msra.mxu0 0.0
    %3529 = vmatprep.subr.mxu0 0.0
    %3530 = vmatpush1.msra.mxu0 0.0
    %3531 = vmatprep.subr.mxu0 0.0
    %3532 = vmatpush1.msra.mxu0 0.0
    %3533 = vmatprep.subr.mxu0 0.0
    %3534 = vmatpush1.msra.mxu0 0.0
    %3535 = vmatprep.subr.mxu0 0.0
    %3536 = vmatpush1.msra.mxu0 0.0
    %3537 = vmatprep.subr.mxu0 0.0
    %3538 = vmatpush1.msra.mxu0 0.0
    %3539 = vmatprep.subr.mxu0 0.0
    %3540 = vmatpush1.msra.mxu0 0.0
    %3541 = vmatprep.subr.mxu0 0.0
    %3542 = vmatpush1.msra.mxu0 0.0
    %3543 = vmatprep.subr.mxu0 0.0
    %3544 = vmatpush1.msra.mxu0 0.0
    %3545 = vmatprep.subr.mxu0 0.0
    %3546 = vmatpush1.msra.mxu0 0.0
    %3547 = vmatprep.subr.mxu0 0.0
    %3548 = vmatpush1.msra.mxu0 0.0
    %3549 = vmatprep.mubr.f32.mxu0 0.0
    %3550 = vmatmul.mubr.f32.gmra.mrb[0].mxu0 %v3400
    %v3551 = vpop.f32.mrb[0].mxu0
    %v3552 = vadd.f32 0.0, %v3551
    %v3553 = vpop.f32.mrb[0].mxu0
    %v3554 = vadd.f32 0.0, %v3553
    %3555 = vdwg.mxu0
    %v3556 = vadd.f32 %v3377, %v3481
    %v3557 = vadd.f32 %v3378, %v3483
    %v3558 = vadd.f32 %v3379, %v3552
    %v3559 = vadd.f32 %v3380, %v3554
    %3560 = vrot.lane.b32.xlu0 %v2146, 111
    %v3561 = vpop.permute.xlu0 %3560
    %3562 = vrot.lane.b32.xlu0 %v2147, 111
    %v3563 = vpop.permute.xlu0 %3562
    %3564 = vrot.lane.b32.xlu0 %v2148, 111
    %v3565 = vpop.permute.xlu0 %3564
    %3566 = vrot.lane.b32.xlu0 %v2149, 111
    %v3567 = vpop.permute.xlu0 %3566
    %v3568 = vsel %vm581, %v3565, %v3567
    %v3569 = vsel %vm581, %v3563, %v3565
    %v3570 = vsel %vm581, %v3561, %v3563
    %v3571 = vsel %vm581, %v3567, %v3561
    %v3572 = vmul.f32 %v3570, %v592
    %v3573 = vmul.f32 %v3569, %v596
    %v3574 = vmul.f32 %v3568, %v600
    %v3575 = vmul.f32 %v3571, %v604
    %s3576 = scalar_lea.vmem %s6, 64
    %v3577 = vld [vmem:[%s3576] sm:$0xff]
    %v3579 = vsel %vm2186, %v3577, 0
    %v3582 = vsel %vm2190, %v3572, 0
    %v3585 = vsel %vm2190, %v3573, 0
    %v3588 = vsel %vm2190, %v3574, 0
    %v3591 = vsel %vm2190, %v3575, 0
    %3593 = vmatprep.subr.mxu0 %v3585
    %3594 = vmatpush1.msra.mxu0 %v3582
    %3595 = vmatprep.subr.mxu0 0.0
    %3596 = vmatpush1.msra.mxu0 0.0
    %3597 = vmatprep.subr.mxu0 0.0
    %3598 = vmatpush1.msra.mxu0 0.0
    %3599 = vmatprep.subr.mxu0 0.0
    %3600 = vmatpush1.msra.mxu0 0.0
    %3601 = vmatprep.subr.mxu0 0.0
    %3602 = vmatpush1.msra.mxu0 0.0
    %3603 = vmatprep.subr.mxu0 0.0
    %3604 = vmatpush1.msra.mxu0 0.0
    %3605 = vmatprep.subr.mxu0 0.0
    %3606 = vmatpush1.msra.mxu0 0.0
    %3607 = vmatprep.subr.mxu0 0.0
    %3608 = vmatpush1.msra.mxu0 0.0
    %3609 = vmatprep.subr.mxu0 0.0
    %3610 = vmatpush1.msra.mxu0 0.0
    %3611 = vmatprep.subr.mxu0 0.0
    %3612 = vmatpush1.msra.mxu0 0.0
    %3613 = vmatprep.subr.mxu0 0.0
    %3614 = vmatpush1.msra.mxu0 0.0
    %3615 = vmatprep.subr.mxu0 0.0
    %3616 = vmatpush1.msra.mxu0 0.0
    %3617 = vmatprep.subr.mxu0 0.0
    %3618 = vmatpush1.msra.mxu0 0.0
    %3619 = vmatprep.subr.mxu0 0.0
    %3620 = vmatpush1.msra.mxu0 0.0
    %3621 = vmatprep.subr.mxu0 0.0
    %3622 = vmatpush1.msra.mxu0 0.0
    %3623 = vmatprep.subr.mxu0 0.0
    %3624 = vmatpush1.msra.mxu0 0.0
    %3625 = vmatprep.subr.mxu0 0.0
    %3626 = vmatpush1.msra.mxu0 0.0
    %3627 = vmatprep.subr.mxu0 0.0
    %3628 = vmatpush1.msra.mxu0 0.0
    %3629 = vmatprep.subr.mxu0 0.0
    %3630 = vmatpush1.msra.mxu0 0.0
    %3631 = vmatprep.subr.mxu0 0.0
    %3632 = vmatpush1.msra.mxu0 0.0
    %3633 = vmatprep.subr.mxu0 0.0
    %3634 = vmatpush1.msra.mxu0 0.0
    %3635 = vmatprep.subr.mxu0 0.0
    %3636 = vmatpush1.msra.mxu0 0.0
    %3637 = vmatprep.subr.mxu0 0.0
    %3638 = vmatpush1.msra.mxu0 0.0
    %3639 = vmatprep.subr.mxu0 0.0
    %3640 = vmatpush1.msra.mxu0 0.0
    %3641 = vmatprep.subr.mxu0 0.0
    %3642 = vmatpush1.msra.mxu0 0.0
    %3643 = vmatprep.subr.mxu0 0.0
    %3644 = vmatpush1.msra.mxu0 0.0
    %3645 = vmatprep.subr.mxu0 0.0
    %3646 = vmatpush1.msra.mxu0 0.0
    %3647 = vmatprep.subr.mxu0 0.0
    %3648 = vmatpush1.msra.mxu0 0.0
    %3649 = vmatprep.subr.mxu0 0.0
    %3650 = vmatpush1.msra.mxu0 0.0
    %3651 = vmatprep.subr.mxu0 0.0
    %3652 = vmatpush1.msra.mxu0 0.0
    %3653 = vmatprep.subr.mxu0 0.0
    %3654 = vmatpush1.msra.mxu0 0.0
    %3655 = vmatprep.subr.mxu0 0.0
    %3656 = vmatpush1.msra.mxu0 0.0
    %3657 = vmatprep.mubr.f32.mxu0 0.0
    %3658 = vmatmul.mubr.f32.gmra.mrb[0].mxu0 %v3579
    %v3659 = vpop.f32.mrb[0].mxu0
    %v3660 = vadd.f32 0.0, %v3659
    %v3661 = vpop.f32.mrb[0].mxu0
    %v3662 = vadd.f32 0.0, %v3661
    %3663 = vdwg.mxu0
    %3664 = vmatprep.subr.mxu0 %v3591
    %3665 = vmatpush1.msra.mxu0 %v3588
    %3666 = vmatprep.subr.mxu0 0.0
    %3667 = vmatpush1.msra.mxu0 0.0
    %3668 = vmatprep.subr.mxu0 0.0
    %3669 = vmatpush1.msra.mxu0 0.0
    %3670 = vmatprep.subr.mxu0 0.0
    %3671 = vmatpush1.msra.mxu0 0.0
    %3672 = vmatprep.subr.mxu0 0.0
    %3673 = vmatpush1.msra.mxu0 0.0
    %3674 = vmatprep.subr.mxu0 0.0
    %3675 = vmatpush1.msra.mxu0 0.0
    %3676 = vmatprep.subr.mxu0 0.0
    %3677 = vmatpush1.msra.mxu0 0.0
    %3678 = vmatprep.subr.mxu0 0.0
    %3679 = vmatpush1.msra.mxu0 0.0
    %3680 = vmatprep.subr.mxu0 0.0
    %3681 = vmatpush1.msra.mxu0 0.0
    %3682 = vmatprep.subr.mxu0 0.0
    %3683 = vmatpush1.msra.mxu0 0.0
    %3684 = vmatprep.subr.mxu0 0.0
    %3685 = vmatpush1.msra.mxu0 0.0
    %3686 = vmatprep.subr.mxu0 0.0
    %3687 = vmatpush1.msra.mxu0 0.0
    %3688 = vmatprep.subr.mxu0 0.0
    %3689 = vmatpush1.msra.mxu0 0.0
    %3690 = vmatprep.subr.mxu0 0.0
    %3691 = vmatpush1.msra.mxu0 0.0
    %3692 = vmatprep.subr.mxu0 0.0
    %3693 = vmatpush1.msra.mxu0 0.0
    %3694 = vmatprep.subr.mxu0 0.0
    %3695 = vmatpush1.msra.mxu0 0.0
    %3696 = vmatprep.subr.mxu0 0.0
    %3697 = vmatpush1.msra.mxu0 0.0
    %3698 = vmatprep.subr.mxu0 0.0
    %3699 = vmatpush1.msra.mxu0 0.0
    %3700 = vmatprep.subr.mxu0 0.0
    %3701 = vmatpush1.msra.mxu0 0.0
    %3702 = vmatprep.subr.mxu0 0.0
    %3703 = vmatpush1.msra.mxu0 0.0
    %3704 = vmatprep.subr.mxu0 0.0
    %3705 = vmatpush1.msra.mxu0 0.0
    %3706 = vmatprep.subr.mxu0 0.0
    %3707 = vmatpush1.msra.mxu0 0.0
    %3708 = vmatprep.subr.mxu0 0.0
    %3709 = vmatpush1.msra.mxu0 0.0
    %3710 = vmatprep.subr.mxu0 0.0
    %3711 = vmatpush1.msra.mxu0 0.0
    %3712 = vmatprep.subr.mxu0 0.0
    %3713 = vmatpush1.msra.mxu0 0.0
    %3714 = vmatprep.subr.mxu0 0.0
    %3715 = vmatpush1.msra.mxu0 0.0
    %3716 = vmatprep.subr.mxu0 0.0
    %3717 = vmatpush1.msra.mxu0 0.0
    %3718 = vmatprep.subr.mxu0 0.0
    %3719 = vmatpush1.msra.mxu0 0.0
    %3720 = vmatprep.subr.mxu0 0.0
    %3721 = vmatpush1.msra.mxu0 0.0
    %3722 = vmatprep.subr.mxu0 0.0
    %3723 = vmatpush1.msra.mxu0 0.0
    %3724 = vmatprep.subr.mxu0 0.0
    %3725 = vmatpush1.msra.mxu0 0.0
    %3726 = vmatprep.subr.mxu0 0.0
    %3727 = vmatpush1.msra.mxu0 0.0
    %3728 = vmatprep.mubr.f32.mxu0 0.0
    %3729 = vmatmul.mubr.f32.gmra.mrb[0].mxu0 %v3579
    %v3730 = vpop.f32.mrb[0].mxu0
    %v3731 = vadd.f32 0.0, %v3730
    %v3732 = vpop.f32.mrb[0].mxu0
    %v3733 = vadd.f32 0.0, %v3732
    %3734 = vdwg.mxu0
    %v3735 = vadd.f32 %v3556, %v3660
    %v3736 = vadd.f32 %v3557, %v3662
    %v3737 = vadd.f32 %v3558, %v3731
    %v3738 = vadd.f32 %v3559, %v3733
    %3740 = vset.pattern.permute.xlu0 0
    %3741 = vperm.xlu0 %3740, %v2150
    %v3742 = vpop.permute.xlu0 %3741
    %v3744 = vadd.f32 %v3735, %v3742
    %v3745 = vadd.f32 %v3736, %v3742
    %v3746 = vadd.f32 %v3737, %v3742
    %v3747 = vadd.f32 %v3738, %v3742
    %v3748 = vsub.f32 %v3744, %v653
    %v3749 = vsub.f32 %v3745, %v654
    %v3750 = vmul.f32 %v3748, %v3748
    %v3751 = vmul.f32 %v3749, %v3749
    %v3752 = vadd.f32 %v3750, %v3751
    %3753 = vadd.xlane.f32.xlu0 %v3752
    %v3754 = vpop.xlane.xlu0 %3753
    %v3755 = vrot.slane %v3754, 4
    %v3756 = vadd.f32 %v3754, %v3755
    %v3757 = vrot.slane %v3756, 2
    %v3758 = vadd.f32 %v3756, %v3757
    %v3759 = vrot.slane %v3758, 1
    %v3760 = vadd.f32 %v3758, %v3759
    %s3761 = vtos %v3760
    %s3762 = sadd.f32 %s3761, 0.0
    %v3763 = vsub.f32 %v3746, %v653
    %v3764 = vsub.f32 %v3747, %v654
    %v3765 = vmul.f32 %v3763, %v3763
    %v3766 = vmul.f32 %v3764, %v3764
    %v3767 = vadd.f32 %v3765, %v3766
    %3768 = vadd.xlane.f32.xlu0 %v3767
    %v3769 = vpop.xlane.xlu0 %3768
    %v3770 = vrot.slane %v3769, 4
    %v3771 = vadd.f32 %v3769, %v3770
    %v3772 = vrot.slane %v3771, 2
    %v3773 = vadd.f32 %v3771, %v3772
    %v3774 = vrot.slane %v3773, 1
    %v3775 = vadd.f32 %v3773, %v3774
    %s3776 = vtos %v3775
    %s3777 = sadd.f32 %s3762, %s3776
    %v3778 = vrcp.pop 4096.0
    %s3779 = vtos %v3778
    %s3780 = smul.f32 %s3777, %s3779
    %v3781 = vstv %s3780
    %vm3782 = vcmask 0
    %3783 = vst.msk [vmem:[#allocation2] sm:$0x1] %vm3782, %v3781
    %v3784 = vld [vmem:[%s9] sm:$0xf]
    %3785 = vrot.lane.b32.xlu0 %v3744, 17
    %v3786 = vpop.permute.xlu0 %3785
    %3787 = vrot.lane.b32.xlu0 %v3745, 17
    %v3788 = vpop.permute.xlu0 %3787
    %3789 = vrot.lane.b32.xlu0 %v3746, 17
    %v3790 = vpop.permute.xlu0 %3789
    %3791 = vrot.lane.b32.xlu0 %v3747, 17
    %v3792 = vpop.permute.xlu0 %3791
    %v3793 = vsel %vm71, %v3790, %v3792
    %v3794 = vsel %vm71, %v3788, %v3790
    %v3795 = vsel %vm71, %v3786, %v3788
    %v3796 = vsel %vm71, %v3792, %v3786
    %v3797 = vld [vmem:[%s1] sm:$0xf]
    %v3799 = vlaneseq
    %v3800 = vshrl.u32 %v3799, 7
    %v3801 = vsub.s32 0, %v3800
    %v3802 = vrot.slane %v3797, %v3801
    %v3803 = vlaneseq
    %v3804 = vshrl.u32 %v3803, 7
    %v3805 = vsub.s32 1, %v3804
    %v3806 = vrot.slane %v3797, %v3805
    %v3807 = vlaneseq
    %v3808 = vshrl.u32 %v3807, 7
    %v3809 = vsub.s32 2, %v3808
    %v3810 = vrot.slane %v3797, %v3809
    %v3811 = vlaneseq
    %v3812 = vshrl.u32 %v3811, 7
    %v3813 = vsub.s32 3, %v3812
    %v3814 = vrot.slane %v3797, %v3813
    %v3819 = vmul.f32 %v3796, %v3802
    %v3820 = vmul.f32 %v3795, %v3806
    %v3821 = vmul.f32 %v3794, %v3810
    %v3822 = vmul.f32 %v3793, %v3814
    %v3823 = vld [vmem:[%s8] sm:$0xf]
    %3824 = vrot.lane.b32.xlu0 %v3744, 16
    %v3825 = vpop.permute.xlu0 %3824
    %3826 = vrot.lane.b32.xlu0 %v3745, 16
    %v3827 = vpop.permute.xlu0 %3826
    %3828 = vrot.lane.b32.xlu0 %v3746, 16
    %v3829 = vpop.permute.xlu0 %3828
    %3830 = vrot.lane.b32.xlu0 %v3747, 16
    %v3831 = vpop.permute.xlu0 %3830
    %v3832 = vsel %vm140, %v3829, %v3831
    %v3833 = vsel %vm140, %v3827, %v3829
    %v3834 = vsel %vm140, %v3825, %v3827
    %v3835 = vsel %vm140, %v3831, %v3825
    %v3836 = vld [vmem:[%s145] sm:$0xf]
    %v3838 = vlaneseq
    %v3839 = vshrl.u32 %v3838, 7
    %v3840 = vsub.s32 0, %v3839
    %v3841 = vrot.slane %v3836, %v3840
    %v3842 = vlaneseq
    %v3843 = vshrl.u32 %v3842, 7
    %v3844 = vsub.s32 1, %v3843
    %v3845 = vrot.slane %v3836, %v3844
    %v3846 = vlaneseq
    %v3847 = vshrl.u32 %v3846, 7
    %v3848 = vsub.s32 2, %v3847
    %v3849 = vrot.slane %v3836, %v3848
    %v3850 = vlaneseq
    %v3851 = vshrl.u32 %v3850, 7
    %v3852 = vsub.s32 3, %v3851
    %v3853 = vrot.slane %v3836, %v3852
    %v3858 = vmul.f32 %v3835, %v3841
    %v3859 = vmul.f32 %v3834, %v3845
    %v3860 = vmul.f32 %v3833, %v3849
    %v3861 = vmul.f32 %v3832, %v3853
    %s3862 = scalar_lea.vmem %s8, 4
    %v3863 = vld [vmem:[%s3862] sm:$0xf]
    %v3865 = vsel %vm693, %v3863, 0
    %3867 = vmatprep.subr.mxu0 %v3859
    %3868 = vmatpush1.msra.mxu0 %v3858
    %3869 = vmatprep.subr.mxu0 0.0
    %3870 = vmatpush1.msra.mxu0 0.0
    %3871 = vmatprep.subr.mxu0 0.0
    %3872 = vmatpush1.msra.mxu0 0.0
    %3873 = vmatprep.subr.mxu0 0.0
    %3874 = vmatpush1.msra.mxu0 0.0
    %3875 = vmatprep.subr.mxu0 0.0
    %3876 = vmatpush1.msra.mxu0 0.0
    %3877 = vmatprep.subr.mxu0 0.0
    %3878 = vmatpush1.msra.mxu0 0.0
    %3879 = vmatprep.subr.mxu0 0.0
    %3880 = vmatpush1.msra.mxu0 0.0
    %3881 = vmatprep.subr.mxu0 0.0
    %3882 = vmatpush1.msra.mxu0 0.0
    %3883 = vmatprep.subr.mxu0 0.0
    %3884 = vmatpush1.msra.mxu0 0.0
    %3885 = vmatprep.subr.mxu0 0.0
    %3886 = vmatpush1.msra.mxu0 0.0
    %3887 = vmatprep.subr.mxu0 0.0
    %3888 = vmatpush1.msra.mxu0 0.0
    %3889 = vmatprep.subr.mxu0 0.0
    %3890 = vmatpush1.msra.mxu0 0.0
    %3891 = vmatprep.subr.mxu0 0.0
    %3892 = vmatpush1.msra.mxu0 0.0
    %3893 = vmatprep.subr.mxu0 0.0
    %3894 = vmatpush1.msra.mxu0 0.0
    %3895 = vmatprep.subr.mxu0 0.0
    %3896 = vmatpush1.msra.mxu0 0.0
    %3897 = vmatprep.subr.mxu0 0.0
    %3898 = vmatpush1.msra.mxu0 0.0
    %3899 = vmatprep.subr.mxu0 0.0
    %3900 = vmatpush1.msra.mxu0 0.0
    %3901 = vmatprep.subr.mxu0 0.0
    %3902 = vmatpush1.msra.mxu0 0.0
    %3903 = vmatprep.subr.mxu0 0.0
    %3904 = vmatpush1.msra.mxu0 0.0
    %3905 = vmatprep.subr.mxu0 0.0
    %3906 = vmatpush1.msra.mxu0 0.0
    %3907 = vmatprep.subr.mxu0 0.0
    %3908 = vmatpush1.msra.mxu0 0.0
    %3909 = vmatprep.subr.mxu0 0.0
    %3910 = vmatpush1.msra.mxu0 0.0
    %3911 = vmatprep.subr.mxu0 0.0
    %3912 = vmatpush1.msra.mxu0 0.0
    %3913 = vmatprep.subr.mxu0 0.0
    %3914 = vmatpush1.msra.mxu0 0.0
    %3915 = vmatprep.subr.mxu0 0.0
    %3916 = vmatpush1.msra.mxu0 0.0
    %3917 = vmatprep.subr.mxu0 0.0
    %3918 = vmatpush1.msra.mxu0 0.0
    %3919 = vmatprep.subr.mxu0 0.0
    %3920 = vmatpush1.msra.mxu0 0.0
    %3921 = vmatprep.subr.mxu0 0.0
    %3922 = vmatpush1.msra.mxu0 0.0
    %3923 = vmatprep.subr.mxu0 0.0
    %3924 = vmatpush1.msra.mxu0 0.0
    %3925 = vmatprep.subr.mxu0 0.0
    %3926 = vmatpush1.msra.mxu0 0.0
    %3927 = vmatprep.subr.mxu0 0.0
    %3928 = vmatpush1.msra.mxu0 0.0
    %3929 = vmatprep.subr.mxu0 0.0
    %3930 = vmatpush1.msra.mxu0 0.0
    %3931 = vmatprep.mubr.f32.mxu0 0.0
    %3932 = vmatmul.mubr.f32.gmra.mrb[0].mxu0 %v3865
    %v3933 = vpop.f32.mrb[0].mxu0
    %v3934 = vadd.f32 0.0, %v3933
    %v3935 = vpop.f32.mrb[0].mxu0
    %v3936 = vadd.f32 0.0, %v3935
    %3937 = vdwg.mxu0
    %3938 = vmatprep.subr.mxu0 %v3861
    %3939 = vmatpush1.msra.mxu0 %v3860
    %3940 = vmatprep.subr.mxu0 0.0
    %3941 = vmatpush1.msra.mxu0 0.0
    %3942 = vmatprep.subr.mxu0 0.0
    %3943 = vmatpush1.msra.mxu0 0.0
    %3944 = vmatprep.subr.mxu0 0.0
    %3945 = vmatpush1.msra.mxu0 0.0
    %3946 = vmatprep.subr.mxu0 0.0
    %3947 = vmatpush1.msra.mxu0 0.0
    %3948 = vmatprep.subr.mxu0 0.0
    %3949 = vmatpush1.msra.mxu0 0.0
    %3950 = vmatprep.subr.mxu0 0.0
    %3951 = vmatpush1.msra.mxu0 0.0
    %3952 = vmatprep.subr.mxu0 0.0
    %3953 = vmatpush1.msra.mxu0 0.0
    %3954 = vmatprep.subr.mxu0 0.0
    %3955 = vmatpush1.msra.mxu0 0.0
    %3956 = vmatprep.subr.mxu0 0.0
    %3957 = vmatpush1.msra.mxu0 0.0
    %3958 = vmatprep.subr.mxu0 0.0
    %3959 = vmatpush1.msra.mxu0 0.0
    %3960 = vmatprep.subr.mxu0 0.0
    %3961 = vmatpush1.msra.mxu0 0.0
    %3962 = vmatprep.subr.mxu0 0.0
    %3963 = vmatpush1.msra.mxu0 0.0
    %3964 = vmatprep.subr.mxu0 0.0
    %3965 = vmatpush1.msra.mxu0 0.0
    %3966 = vmatprep.subr.mxu0 0.0
    %3967 = vmatpush1.msra.mxu0 0.0
    %3968 = vmatprep.subr.mxu0 0.0
    %3969 = vmatpush1.msra.mxu0 0.0
    %3970 = vmatprep.subr.mxu0 0.0
    %3971 = vmatpush1.msra.mxu0 0.0
    %3972 = vmatprep.subr.mxu0 0.0
    %3973 = vmatpush1.msra.mxu0 0.0
    %3974 = vmatprep.subr.mxu0 0.0
    %3975 = vmatpush1.msra.mxu0 0.0
    %3976 = vmatprep.subr.mxu0 0.0
    %3977 = vmatpush1.msra.mxu0 0.0
    %3978 = vmatprep.subr.mxu0 0.0
    %3979 = vmatpush1.msra.mxu0 0.0
    %3980 = vmatprep.subr.mxu0 0.0
    %3981 = vmatpush1.msra.mxu0 0.0
    %3982 = vmatprep.subr.mxu0 0.0
    %3983 = vmatpush1.msra.mxu0 0.0
    %3984 = vmatprep.subr.mxu0 0.0
    %3985 = vmatpush1.msra.mxu0 0.0
    %3986 = vmatprep.subr.mxu0 0.0
    %3987 = vmatpush1.msra.mxu0 0.0
    %3988 = vmatprep.subr.mxu0 0.0
    %3989 = vmatpush1.msra.mxu0 0.0
    %3990 = vmatprep.subr.mxu0 0.0
    %3991 = vmatpush1.msra.mxu0 0.0
    %3992 = vmatprep.subr.mxu0 0.0
    %3993 = vmatpush1.msra.mxu0 0.0
    %3994 = vmatprep.subr.mxu0 0.0
    %3995 = vmatpush1.msra.mxu0 0.0
    %3996 = vmatprep.subr.mxu0 0.0
    %3997 = vmatpush1.msra.mxu0 0.0
    %3998 = vmatprep.subr.mxu0 0.0
    %3999 = vmatpush1.msra.mxu0 0.0
    %4000 = vmatprep.subr.mxu0 0.0
    %4001 = vmatpush1.msra.mxu0 0.0
    %4002 = vmatprep.mubr.f32.mxu0 0.0
    %4003 = vmatmul.mubr.f32.gmra.mrb[0].mxu0 %v3865
    %v4004 = vpop.f32.mrb[0].mxu0
    %v4005 = vadd.f32 0.0, %v4004
    %v4006 = vpop.f32.mrb[0].mxu0
    %v4007 = vadd.f32 0.0, %v4006
    %4008 = vdwg.mxu0
    %v4010 = vsel %vm693, %v3823, 0
    %4012 = vmatprep.subr.mxu0 %v3820
    %4013 = vmatpush1.msra.mxu0 %v3819
    %4014 = vmatprep.subr.mxu0 0.0
    %4015 = vmatpush1.msra.mxu0 0.0
    %4016 = vmatprep.subr.mxu0 0.0
    %4017 = vmatpush1.msra.mxu0 0.0
    %4018 = vmatprep.subr.mxu0 0.0
    %4019 = vmatpush1.msra.mxu0 0.0
    %4020 = vmatprep.subr.mxu0 0.0
    %4021 = vmatpush1.msra.mxu0 0.0
    %4022 = vmatprep.subr.mxu0 0.0
    %4023 = vmatpush1.msra.mxu0 0.0
    %4024 = vmatprep.subr.mxu0 0.0
    %4025 = vmatpush1.msra.mxu0 0.0
    %4026 = vmatprep.subr.mxu0 0.0
    %4027 = vmatpush1.msra.mxu0 0.0
    %4028 = vmatprep.subr.mxu0 0.0
    %4029 = vmatpush1.msra.mxu0 0.0
    %4030 = vmatprep.subr.mxu0 0.0
    %4031 = vmatpush1.msra.mxu0 0.0
    %4032 = vmatprep.subr.mxu0 0.0
    %4033 = vmatpush1.msra.mxu0 0.0
    %4034 = vmatprep.subr.mxu0 0.0
    %4035 = vmatpush1.msra.mxu0 0.0
    %4036 = vmatprep.subr.mxu0 0.0
    %4037 = vmatpush1.msra.mxu0 0.0
    %4038 = vmatprep.subr.mxu0 0.0
    %4039 = vmatpush1.msra.mxu0 0.0
    %4040 = vmatprep.subr.mxu0 0.0
    %4041 = vmatpush1.msra.mxu0 0.0
    %4042 = vmatprep.subr.mxu0 0.0
    %4043 = vmatpush1.msra.mxu0 0.0
    %4044 = vmatprep.subr.mxu0 0.0
    %4045 = vmatpush1.msra.mxu0 0.0
    %4046 = vmatprep.subr.mxu0 0.0
    %4047 = vmatpush1.msra.mxu0 0.0
    %4048 = vmatprep.subr.mxu0 0.0
    %4049 = vmatpush1.msra.mxu0 0.0
    %4050 = vmatprep.subr.mxu0 0.0
    %4051 = vmatpush1.msra.mxu0 0.0
    %4052 = vmatprep.subr.mxu0 0.0
    %4053 = vmatpush1.msra.mxu0 0.0
    %4054 = vmatprep.subr.mxu0 0.0
    %4055 = vmatpush1.msra.mxu0 0.0
    %4056 = vmatprep.subr.mxu0 0.0
    %4057 = vmatpush1.msra.mxu0 0.0
    %4058 = vmatprep.subr.mxu0 0.0
    %4059 = vmatpush1.msra.mxu0 0.0
    %4060 = vmatprep.subr.mxu0 0.0
    %4061 = vmatpush1.msra.mxu0 0.0
    %4062 = vmatprep.subr.mxu0 0.0
    %4063 = vmatpush1.msra.mxu0 0.0
    %4064 = vmatprep.subr.mxu0 0.0
    %4065 = vmatpush1.msra.mxu0 0.0
    %4066 = vmatprep.subr.mxu0 0.0
    %4067 = vmatpush1.msra.mxu0 0.0
    %4068 = vmatprep.subr.mxu0 0.0
    %4069 = vmatpush1.msra.mxu0 0.0
    %4070 = vmatprep.subr.mxu0 0.0
    %4071 = vmatpush1.msra.mxu0 0.0
    %4072 = vmatprep.subr.mxu0 0.0
    %4073 = vmatpush1.msra.mxu0 0.0
    %4074 = vmatprep.subr.mxu0 0.0
    %4075 = vmatpush1.msra.mxu0 0.0
    %4076 = vmatprep.mubr.f32.mxu0 0.0
    %4077 = vmatmul.mubr.f32.gmra.mrb[0].mxu0 %v4010
    %v4078 = vpop.f32.mrb[0].mxu0
    %v4079 = vadd.f32 %v3934, %v4078
    %v4080 = vpop.f32.mrb[0].mxu0
    %v4081 = vadd.f32 %v3936, %v4080
    %4082 = vdwg.mxu0
    %4083 = vmatprep.subr.mxu0 %v3822
    %4084 = vmatpush1.msra.mxu0 %v3821
    %4085 = vmatprep.subr.mxu0 0.0
    %4086 = vmatpush1.msra.mxu0 0.0
    %4087 = vmatprep.subr.mxu0 0.0
    %4088 = vmatpush1.msra.mxu0 0.0
    %4089 = vmatprep.subr.mxu0 0.0
    %4090 = vmatpush1.msra.mxu0 0.0
    %4091 = vmatprep.subr.mxu0 0.0
    %4092 = vmatpush1.msra.mxu0 0.0
    %4093 = vmatprep.subr.mxu0 0.0
    %4094 = vmatpush1.msra.mxu0 0.0
    %4095 = vmatprep.subr.mxu0 0.0
    %4096 = vmatpush1.msra.mxu0 0.0
    %4097 = vmatprep.subr.mxu0 0.0
    %4098 = vmatpush1.msra.mxu0 0.0
    %4099 = vmatprep.subr.mxu0 0.0
    %4100 = vmatpush1.msra.mxu0 0.0
    %4101 = vmatprep.subr.mxu0 0.0
    %4102 = vmatpush1.msra.mxu0 0.0
    %4103 = vmatprep.subr.mxu0 0.0
    %4104 = vmatpush1.msra.mxu0 0.0
    %4105 = vmatprep.subr.mxu0 0.0
    %4106 = vmatpush1.msra.mxu0 0.0
    %4107 = vmatprep.subr.mxu0 0.0
    %4108 = vmatpush1.msra.mxu0 0.0
    %4109 = vmatprep.subr.mxu0 0.0
    %4110 = vmatpush1.msra.mxu0 0.0
    %4111 = vmatprep.subr.mxu0 0.0
    %4112 = vmatpush1.msra.mxu0 0.0
    %4113 = vmatprep.subr.mxu0 0.0
    %4114 = vmatpush1.msra.mxu0 0.0
    %4115 = vmatprep.subr.mxu0 0.0
    %4116 = vmatpush1.msra.mxu0 0.0
    %4117 = vmatprep.subr.mxu0 0.0
    %4118 = vmatpush1.msra.mxu0 0.0
    %4119 = vmatprep.subr.mxu0 0.0
    %4120 = vmatpush1.msra.mxu0 0.0
    %4121 = vmatprep.subr.mxu0 0.0
    %4122 = vmatpush1.msra.mxu0 0.0
    %4123 = vmatprep.subr.mxu0 0.0
    %4124 = vmatpush1.msra.mxu0 0.0
    %4125 = vmatprep.subr.mxu0 0.0
    %4126 = vmatpush1.msra.mxu0 0.0
    %4127 = vmatprep.subr.mxu0 0.0
    %4128 = vmatpush1.msra.mxu0 0.0
    %4129 = vmatprep.subr.mxu0 0.0
    %4130 = vmatpush1.msra.mxu0 0.0
    %4131 = vmatprep.subr.mxu0 0.0
    %4132 = vmatpush1.msra.mxu0 0.0
    %4133 = vmatprep.subr.mxu0 0.0
    %4134 = vmatpush1.msra.mxu0 0.0
    %4135 = vmatprep.subr.mxu0 0.0
    %4136 = vmatpush1.msra.mxu0 0.0
    %4137 = vmatprep.subr.mxu0 0.0
    %4138 = vmatpush1.msra.mxu0 0.0
    %4139 = vmatprep.subr.mxu0 0.0
    %4140 = vmatpush1.msra.mxu0 0.0
    %4141 = vmatprep.subr.mxu0 0.0
    %4142 = vmatpush1.msra.mxu0 0.0
    %4143 = vmatprep.subr.mxu0 0.0
    %4144 = vmatpush1.msra.mxu0 0.0
    %4145 = vmatprep.subr.mxu0 0.0
    %4146 = vmatpush1.msra.mxu0 0.0
    %4147 = vmatprep.mubr.f32.mxu0 0.0
    %4148 = vmatmul.mubr.f32.gmra.mrb[0].mxu0 %v4010
    %v4149 = vpop.f32.mrb[0].mxu0
    %v4150 = vadd.f32 %v4005, %v4149
    %v4151 = vpop.f32.mrb[0].mxu0
    %v4152 = vadd.f32 %v4007, %v4151
    %4153 = vdwg.mxu0
    %4154 = vrot.lane.b32.xlu0 %v3744, 15
    %v4155 = vpop.permute.xlu0 %4154
    %4156 = vrot.lane.b32.xlu0 %v3745, 15
    %v4157 = vpop.permute.xlu0 %4156
    %4158 = vrot.lane.b32.xlu0 %v3746, 15
    %v4159 = vpop.permute.xlu0 %4158
    %4160 = vrot.lane.b32.xlu0 %v3747, 15
    %v4161 = vpop.permute.xlu0 %4160
    %v4162 = vsel %vm211, %v4159, %v4161
    %v4163 = vsel %vm211, %v4157, %v4159
    %v4164 = vsel %vm211, %v4155, %v4157
    %v4165 = vsel %vm211, %v4161, %v4155
    %v4166 = vld [vmem:[%s216] sm:$0xf]
    %v4168 = vlaneseq
    %v4169 = vshrl.u32 %v4168, 7
    %v4170 = vsub.s32 0, %v4169
    %v4171 = vrot.slane %v4166, %v4170
    %v4172 = vlaneseq
    %v4173 = vshrl.u32 %v4172, 7
    %v4174 = vsub.s32 1, %v4173
    %v4175 = vrot.slane %v4166, %v4174
    %v4176 = vlaneseq
    %v4177 = vshrl.u32 %v4176, 7
    %v4178 = vsub.s32 2, %v4177
    %v4179 = vrot.slane %v4166, %v4178
    %v4180 = vlaneseq
    %v4181 = vshrl.u32 %v4180, 7
    %v4182 = vsub.s32 3, %v4181
    %v4183 = vrot.slane %v4166, %v4182
    %v4188 = vmul.f32 %v4165, %v4171
    %v4189 = vmul.f32 %v4164, %v4175
    %v4190 = vmul.f32 %v4163, %v4179
    %v4191 = vmul.f32 %v4162, %v4183
    %s4192 = scalar_lea.vmem %s8, 8
    %v4193 = vld [vmem:[%s4192] sm:$0xf]
    %v4195 = vsel %vm693, %v4193, 0
    %4197 = vmatprep.subr.mxu0 %v4189
    %4198 = vmatpush1.msra.mxu0 %v4188
    %4199 = vmatprep.subr.mxu0 0.0
    %4200 = vmatpush1.msra.mxu0 0.0
    %4201 = vmatprep.subr.mxu0 0.0
    %4202 = vmatpush1.msra.mxu0 0.0
    %4203 = vmatprep.subr.mxu0 0.0
    %4204 = vmatpush1.msra.mxu0 0.0
    %4205 = vmatprep.subr.mxu0 0.0
    %4206 = vmatpush1.msra.mxu0 0.0
    %4207 = vmatprep.subr.mxu0 0.0
    %4208 = vmatpush1.msra.mxu0 0.0
    %4209 = vmatprep.subr.mxu0 0.0
    %4210 = vmatpush1.msra.mxu0 0.0
    %4211 = vmatprep.subr.mxu0 0.0
    %4212 = vmatpush1.msra.mxu0 0.0
    %4213 = vmatprep.subr.mxu0 0.0
    %4214 = vmatpush1.msra.mxu0 0.0
    %4215 = vmatprep.subr.mxu0 0.0
    %4216 = vmatpush1.msra.mxu0 0.0
    %4217 = vmatprep.subr.mxu0 0.0
    %4218 = vmatpush1.msra.mxu0 0.0
    %4219 = vmatprep.subr.mxu0 0.0
    %4220 = vmatpush1.msra.mxu0 0.0
    %4221 = vmatprep.subr.mxu0 0.0
    %4222 = vmatpush1.msra.mxu0 0.0
    %4223 = vmatprep.subr.mxu0 0.0
    %4224 = vmatpush1.msra.mxu0 0.0
    %4225 = vmatprep.subr.mxu0 0.0
    %4226 = vmatpush1.msra.mxu0 0.0
    %4227 = vmatprep.subr.mxu0 0.0
    %4228 = vmatpush1.msra.mxu0 0.0
    %4229 = vmatprep.subr.mxu0 0.0
    %4230 = vmatpush1.msra.mxu0 0.0
    %4231 = vmatprep.subr.mxu0 0.0
    %4232 = vmatpush1.msra.mxu0 0.0
    %4233 = vmatprep.subr.mxu0 0.0
    %4234 = vmatpush1.msra.mxu0 0.0
    %4235 = vmatprep.subr.mxu0 0.0
    %4236 = vmatpush1.msra.mxu0 0.0
    %4237 = vmatprep.subr.mxu0 0.0
    %4238 = vmatpush1.msra.mxu0 0.0
    %4239 = vmatprep.subr.mxu0 0.0
    %4240 = vmatpush1.msra.mxu0 0.0
    %4241 = vmatprep.subr.mxu0 0.0
    %4242 = vmatpush1.msra.mxu0 0.0
    %4243 = vmatprep.subr.mxu0 0.0
    %4244 = vmatpush1.msra.mxu0 0.0
    %4245 = vmatprep.subr.mxu0 0.0
    %4246 = vmatpush1.msra.mxu0 0.0
    %4247 = vmatprep.subr.mxu0 0.0
    %4248 = vmatpush1.msra.mxu0 0.0
    %4249 = vmatprep.subr.mxu0 0.0
    %4250 = vmatpush1.msra.mxu0 0.0
    %4251 = vmatprep.subr.mxu0 0.0
    %4252 = vmatpush1.msra.mxu0 0.0
    %4253 = vmatprep.subr.mxu0 0.0
    %4254 = vmatpush1.msra.mxu0 0.0
    %4255 = vmatprep.subr.mxu0 0.0
    %4256 = vmatpush1.msra.mxu0 0.0
    %4257 = vmatprep.subr.mxu0 0.0
    %4258 = vmatpush1.msra.mxu0 0.0
    %4259 = vmatprep.subr.mxu0 0.0
    %4260 = vmatpush1.msra.mxu0 0.0
    %4261 = vmatprep.mubr.f32.mxu0 0.0
    %4262 = vmatmul.mubr.f32.gmra.mrb[0].mxu0 %v4195
    %v4263 = vpop.f32.mrb[0].mxu0
    %v4264 = vadd.f32 0.0, %v4263
    %v4265 = vpop.f32.mrb[0].mxu0
    %v4266 = vadd.f32 0.0, %v4265
    %4267 = vdwg.mxu0
    %4268 = vmatprep.subr.mxu0 %v4191
    %4269 = vmatpush1.msra.mxu0 %v4190
    %4270 = vmatprep.subr.mxu0 0.0
    %4271 = vmatpush1.msra.mxu0 0.0
    %4272 = vmatprep.subr.mxu0 0.0
    %4273 = vmatpush1.msra.mxu0 0.0
    %4274 = vmatprep.subr.mxu0 0.0
    %4275 = vmatpush1.msra.mxu0 0.0
    %4276 = vmatprep.subr.mxu0 0.0
    %4277 = vmatpush1.msra.mxu0 0.0
    %4278 = vmatprep.subr.mxu0 0.0
    %4279 = vmatpush1.msra.mxu0 0.0
    %4280 = vmatprep.subr.mxu0 0.0
    %4281 = vmatpush1.msra.mxu0 0.0
    %4282 = vmatprep.subr.mxu0 0.0
    %4283 = vmatpush1.msra.mxu0 0.0
    %4284 = vmatprep.subr.mxu0 0.0
    %4285 = vmatpush1.msra.mxu0 0.0
    %4286 = vmatprep.subr.mxu0 0.0
    %4287 = vmatpush1.msra.mxu0 0.0
    %4288 = vmatprep.subr.mxu0 0.0
    %4289 = vmatpush1.msra.mxu0 0.0
    %4290 = vmatprep.subr.mxu0 0.0
    %4291 = vmatpush1.msra.mxu0 0.0
    %4292 = vmatprep.subr.mxu0 0.0
    %4293 = vmatpush1.msra.mxu0 0.0
    %4294 = vmatprep.subr.mxu0 0.0
    %4295 = vmatpush1.msra.mxu0 0.0
    %4296 = vmatprep.subr.mxu0 0.0
    %4297 = vmatpush1.msra.mxu0 0.0
    %4298 = vmatprep.subr.mxu0 0.0
    %4299 = vmatpush1.msra.mxu0 0.0
    %4300 = vmatprep.subr.mxu0 0.0
    %4301 = vmatpush1.msra.mxu0 0.0
    %4302 = vmatprep.subr.mxu0 0.0
    %4303 = vmatpush1.msra.mxu0 0.0
    %4304 = vmatprep.subr.mxu0 0.0
    %4305 = vmatpush1.msra.mxu0 0.0
    %4306 = vmatprep.subr.mxu0 0.0
    %4307 = vmatpush1.msra.mxu0 0.0
    %4308 = vmatprep.subr.mxu0 0.0
    %4309 = vmatpush1.msra.mxu0 0.0
    %4310 = vmatprep.subr.mxu0 0.0
    %4311 = vmatpush1.msra.mxu0 0.0
    %4312 = vmatprep.subr.mxu0 0.0
    %4313 = vmatpush1.msra.mxu0 0.0
    %4314 = vmatprep.subr.mxu0 0.0
    %4315 = vmatpush1.msra.mxu0 0.0
    %4316 = vmatprep.subr.mxu0 0.0
    %4317 = vmatpush1.msra.mxu0 0.0
    %4318 = vmatprep.subr.mxu0 0.0
    %4319 = vmatpush1.msra.mxu0 0.0
    %4320 = vmatprep.subr.mxu0 0.0
    %4321 = vmatpush1.msra.mxu0 0.0
    %4322 = vmatprep.subr.mxu0 0.0
    %4323 = vmatpush1.msra.mxu0 0.0
    %4324 = vmatprep.subr.mxu0 0.0
    %4325 = vmatpush1.msra.mxu0 0.0
    %4326 = vmatprep.subr.mxu0 0.0
    %4327 = vmatpush1.msra.mxu0 0.0
    %4328 = vmatprep.subr.mxu0 0.0
    %4329 = vmatpush1.msra.mxu0 0.0
    %4330 = vmatprep.subr.mxu0 0.0
    %4331 = vmatpush1.msra.mxu0 0.0
    %4332 = vmatprep.mubr.f32.mxu0 0.0
    %4333 = vmatmul.mubr.f32.gmra.mrb[0].mxu0 %v4195
    %v4334 = vpop.f32.mrb[0].mxu0
    %v4335 = vadd.f32 0.0, %v4334
    %v4336 = vpop.f32.mrb[0].mxu0
    %v4337 = vadd.f32 0.0, %v4336
    %4338 = vdwg.mxu0
    %v4339 = vadd.f32 %v4079, %v4264
    %v4340 = vadd.f32 %v4081, %v4266
    %v4341 = vadd.f32 %v4150, %v4335
    %v4342 = vadd.f32 %v4152, %v4337
    %4343 = vrot.lane.b32.xlu0 %v3744, 1
    %v4344 = vpop.permute.xlu0 %4343
    %4345 = vrot.lane.b32.xlu0 %v3745, 1
    %v4346 = vpop.permute.xlu0 %4345
    %4347 = vrot.lane.b32.xlu0 %v3746, 1
    %v4348 = vpop.permute.xlu0 %4347
    %4349 = vrot.lane.b32.xlu0 %v3747, 1
    %v4350 = vpop.permute.xlu0 %4349
    %v4351 = vsel %vm282, %v4348, %v4350
    %v4352 = vsel %vm282, %v4346, %v4348
    %v4353 = vsel %vm282, %v4344, %v4346
    %v4354 = vsel %vm282, %v4350, %v4344
    %v4355 = vld [vmem:[%s287] sm:$0xf]
    %v4357 = vlaneseq
    %v4358 = vshrl.u32 %v4357, 7
    %v4359 = vsub.s32 0, %v4358
    %v4360 = vrot.slane %v4355, %v4359
    %v4361 = vlaneseq
    %v4362 = vshrl.u32 %v4361, 7
    %v4363 = vsub.s32 1, %v4362
    %v4364 = vrot.slane %v4355, %v4363
    %v4365 = vlaneseq
    %v4366 = vshrl.u32 %v4365, 7
    %v4367 = vsub.s32 2, %v4366
    %v4368 = vrot.slane %v4355, %v4367
    %v4369 = vlaneseq
    %v4370 = vshrl.u32 %v4369, 7
    %v4371 = vsub.s32 3, %v4370
    %v4372 = vrot.slane %v4355, %v4371
    %v4377 = vmul.f32 %v4354, %v4360
    %v4378 = vmul.f32 %v4353, %v4364
    %v4379 = vmul.f32 %v4352, %v4368
    %v4380 = vmul.f32 %v4351, %v4372
    %s4381 = scalar_lea.vmem %s8, 12
    %v4382 = vld [vmem:[%s4381] sm:$0xf]
    %v4384 = vsel %vm693, %v4382, 0
    %4386 = vmatprep.subr.mxu0 %v4378
    %4387 = vmatpush1.msra.mxu0 %v4377
    %4388 = vmatprep.subr.mxu0 0.0
    %4389 = vmatpush1.msra.mxu0 0.0
    %4390 = vmatprep.subr.mxu0 0.0
    %4391 = vmatpush1.msra.mxu0 0.0
    %4392 = vmatprep.subr.mxu0 0.0
    %4393 = vmatpush1.msra.mxu0 0.0
    %4394 = vmatprep.subr.mxu0 0.0
    %4395 = vmatpush1.msra.mxu0 0.0
    %4396 = vmatprep.subr.mxu0 0.0
    %4397 = vmatpush1.msra.mxu0 0.0
    %4398 = vmatprep.subr.mxu0 0.0
    %4399 = vmatpush1.msra.mxu0 0.0
    %4400 = vmatprep.subr.mxu0 0.0
    %4401 = vmatpush1.msra.mxu0 0.0
    %4402 = vmatprep.subr.mxu0 0.0
    %4403 = vmatpush1.msra.mxu0 0.0
    %4404 = vmatprep.subr.mxu0 0.0
    %4405 = vmatpush1.msra.mxu0 0.0
    %4406 = vmatprep.subr.mxu0 0.0
    %4407 = vmatpush1.msra.mxu0 0.0
    %4408 = vmatprep.subr.mxu0 0.0
    %4409 = vmatpush1.msra.mxu0 0.0
    %4410 = vmatprep.subr.mxu0 0.0
    %4411 = vmatpush1.msra.mxu0 0.0
    %4412 = vmatprep.subr.mxu0 0.0
    %4413 = vmatpush1.msra.mxu0 0.0
    %4414 = vmatprep.subr.mxu0 0.0
    %4415 = vmatpush1.msra.mxu0 0.0
    %4416 = vmatprep.subr.mxu0 0.0
    %4417 = vmatpush1.msra.mxu0 0.0
    %4418 = vmatprep.subr.mxu0 0.0
    %4419 = vmatpush1.msra.mxu0 0.0
    %4420 = vmatprep.subr.mxu0 0.0
    %4421 = vmatpush1.msra.mxu0 0.0
    %4422 = vmatprep.subr.mxu0 0.0
    %4423 = vmatpush1.msra.mxu0 0.0
    %4424 = vmatprep.subr.mxu0 0.0
    %4425 = vmatpush1.msra.mxu0 0.0
    %4426 = vmatprep.subr.mxu0 0.0
    %4427 = vmatpush1.msra.mxu0 0.0
    %4428 = vmatprep.subr.mxu0 0.0
    %4429 = vmatpush1.msra.mxu0 0.0
    %4430 = vmatprep.subr.mxu0 0.0
    %4431 = vmatpush1.msra.mxu0 0.0
    %4432 = vmatprep.subr.mxu0 0.0
    %4433 = vmatpush1.msra.mxu0 0.0
    %4434 = vmatprep.subr.mxu0 0.0
    %4435 = vmatpush1.msra.mxu0 0.0
    %4436 = vmatprep.subr.mxu0 0.0
    %4437 = vmatpush1.msra.mxu0 0.0
    %4438 = vmatprep.subr.mxu0 0.0
    %4439 = vmatpush1.msra.mxu0 0.0
    %4440 = vmatprep.subr.mxu0 0.0
    %4441 = vmatpush1.msra.mxu0 0.0
    %4442 = vmatprep.subr.mxu0 0.0
    %4443 = vmatpush1.msra.mxu0 0.0
    %4444 = vmatprep.subr.mxu0 0.0
    %4445 = vmatpush1.msra.mxu0 0.0
    %4446 = vmatprep.subr.mxu0 0.0
    %4447 = vmatpush1.msra.mxu0 0.0
    %4448 = vmatprep.subr.mxu0 0.0
    %4449 = vmatpush1.msra.mxu0 0.0
    %4450 = vmatprep.mubr.f32.mxu0 0.0
    %4451 = vmatmul.mubr.f32.gmra.mrb[0].mxu0 %v4384
    %v4452 = vpop.f32.mrb[0].mxu0
    %v4453 = vadd.f32 0.0, %v4452
    %v4454 = vpop.f32.mrb[0].mxu0
    %v4455 = vadd.f32 0.0, %v4454
    %4456 = vdwg.mxu0
    %4457 = vmatprep.subr.mxu0 %v4380
    %4458 = vmatpush1.msra.mxu0 %v4379
    %4459 = vmatprep.subr.mxu0 0.0
    %4460 = vmatpush1.msra.mxu0 0.0
    %4461 = vmatprep.subr.mxu0 0.0
    %4462 = vmatpush1.msra.mxu0 0.0
    %4463 = vmatprep.subr.mxu0 0.0
    %4464 = vmatpush1.msra.mxu0 0.0
    %4465 = vmatprep.subr.mxu0 0.0
    %4466 = vmatpush1.msra.mxu0 0.0
    %4467 = vmatprep.subr.mxu0 0.0
    %4468 = vmatpush1.msra.mxu0 0.0
    %4469 = vmatprep.subr.mxu0 0.0
    %4470 = vmatpush1.msra.mxu0 0.0
    %4471 = vmatprep.subr.mxu0 0.0
    %4472 = vmatpush1.msra.mxu0 0.0
    %4473 = vmatprep.subr.mxu0 0.0
    %4474 = vmatpush1.msra.mxu0 0.0
    %4475 = vmatprep.subr.mxu0 0.0
    %4476 = vmatpush1.msra.mxu0 0.0
    %4477 = vmatprep.subr.mxu0 0.0
    %4478 = vmatpush1.msra.mxu0 0.0
    %4479 = vmatprep.subr.mxu0 0.0
    %4480 = vmatpush1.msra.mxu0 0.0
    %4481 = vmatprep.subr.mxu0 0.0
    %4482 = vmatpush1.msra.mxu0 0.0
    %4483 = vmatprep.subr.mxu0 0.0
    %4484 = vmatpush1.msra.mxu0 0.0
    %4485 = vmatprep.subr.mxu0 0.0
    %4486 = vmatpush1.msra.mxu0 0.0
    %4487 = vmatprep.subr.mxu0 0.0
    %4488 = vmatpush1.msra.mxu0 0.0
    %4489 = vmatprep.subr.mxu0 0.0
    %4490 = vmatpush1.msra.mxu0 0.0
    %4491 = vmatprep.subr.mxu0 0.0
    %4492 = vmatpush1.msra.mxu0 0.0
    %4493 = vmatprep.subr.mxu0 0.0
    %4494 = vmatpush1.msra.mxu0 0.0
    %4495 = vmatprep.subr.mxu0 0.0
    %4496 = vmatpush1.msra.mxu0 0.0
    %4497 = vmatprep.subr.mxu0 0.0
    %4498 = vmatpush1.msra.mxu0 0.0
    %4499 = vmatprep.subr.mxu0 0.0
    %4500 = vmatpush1.msra.mxu0 0.0
    %4501 = vmatprep.subr.mxu0 0.0
    %4502 = vmatpush1.msra.mxu0 0.0
    %4503 = vmatprep.subr.mxu0 0.0
    %4504 = vmatpush1.msra.mxu0 0.0
    %4505 = vmatprep.subr.mxu0 0.0
    %4506 = vmatpush1.msra.mxu0 0.0
    %4507 = vmatprep.subr.mxu0 0.0
    %4508 = vmatpush1.msra.mxu0 0.0
    %4509 = vmatprep.subr.mxu0 0.0
    %4510 = vmatpush1.msra.mxu0 0.0
    %4511 = vmatprep.subr.mxu0 0.0
    %4512 = vmatpush1.msra.mxu0 0.0
    %4513 = vmatprep.subr.mxu0 0.0
    %4514 = vmatpush1.msra.mxu0 0.0
    %4515 = vmatprep.subr.mxu0 0.0
    %4516 = vmatpush1.msra.mxu0 0.0
    %4517 = vmatprep.subr.mxu0 0.0
    %4518 = vmatpush1.msra.mxu0 0.0
    %4519 = vmatprep.subr.mxu0 0.0
    %4520 = vmatpush1.msra.mxu0 0.0
    %4521 = vmatprep.mubr.f32.mxu0 0.0
    %4522 = vmatmul.mubr.f32.gmra.mrb[0].mxu0 %v4384
    %v4523 = vpop.f32.mrb[0].mxu0
    %v4524 = vadd.f32 0.0, %v4523
    %v4525 = vpop.f32.mrb[0].mxu0
    %v4526 = vadd.f32 0.0, %v4525
    %4527 = vdwg.mxu0
    %v4528 = vadd.f32 %v4339, %v4453
    %v4529 = vadd.f32 %v4340, %v4455
    %v4530 = vadd.f32 %v4341, %v4524
    %v4531 = vadd.f32 %v4342, %v4526
    %s4532 = scalar_lea.vmem %s8, 16
    %v4533 = vld [vmem:[%s4532] sm:$0xf]
    %v4535 = vsel %vm693, %v4533, 0
    %4537 = vmatprep.subr.mxu0 %v3745
    %4538 = vmatpush1.msra.mxu0 %v3744
    %4539 = vmatprep.subr.mxu0 0.0
    %4540 = vmatpush1.msra.mxu0 0.0
    %4541 = vmatprep.subr.mxu0 0.0
    %4542 = vmatpush1.msra.mxu0 0.0
    %4543 = vmatprep.subr.mxu0 0.0
    %4544 = vmatpush1.msra.mxu0 0.0
    %4545 = vmatprep.subr.mxu0 0.0
    %4546 = vmatpush1.msra.mxu0 0.0
    %4547 = vmatprep.subr.mxu0 0.0
    %4548 = vmatpush1.msra.mxu0 0.0
    %4549 = vmatprep.subr.mxu0 0.0
    %4550 = vmatpush1.msra.mxu0 0.0
    %4551 = vmatprep.subr.mxu0 0.0
    %4552 = vmatpush1.msra.mxu0 0.0
    %4553 = vmatprep.subr.mxu0 0.0
    %4554 = vmatpush1.msra.mxu0 0.0
    %4555 = vmatprep.subr.mxu0 0.0
    %4556 = vmatpush1.msra.mxu0 0.0
    %4557 = vmatprep.subr.mxu0 0.0
    %4558 = vmatpush1.msra.mxu0 0.0
    %4559 = vmatprep.subr.mxu0 0.0
    %4560 = vmatpush1.msra.mxu0 0.0
    %4561 = vmatprep.subr.mxu0 0.0
    %4562 = vmatpush1.msra.mxu0 0.0
    %4563 = vmatprep.subr.mxu0 0.0
    %4564 = vmatpush1.msra.mxu0 0.0
    %4565 = vmatprep.subr.mxu0 0.0
    %4566 = vmatpush1.msra.mxu0 0.0
    %4567 = vmatprep.subr.mxu0 0.0
    %4568 = vmatpush1.msra.mxu0 0.0
    %4569 = vmatprep.subr.mxu0 0.0
    %4570 = vmatpush1.msra.mxu0 0.0
    %4571 = vmatprep.subr.mxu0 0.0
    %4572 = vmatpush1.msra.mxu0 0.0
    %4573 = vmatprep.subr.mxu0 0.0
    %4574 = vmatpush1.msra.mxu0 0.0
    %4575 = vmatprep.subr.mxu0 0.0
    %4576 = vmatpush1.msra.mxu0 0.0
    %4577 = vmatprep.subr.mxu0 0.0
    %4578 = vmatpush1.msra.mxu0 0.0
    %4579 = vmatprep.subr.mxu0 0.0
    %4580 = vmatpush1.msra.mxu0 0.0
    %4581 = vmatprep.subr.mxu0 0.0
    %4582 = vmatpush1.msra.mxu0 0.0
    %4583 = vmatprep.subr.mxu0 0.0
    %4584 = vmatpush1.msra.mxu0 0.0
    %4585 = vmatprep.subr.mxu0 0.0
    %4586 = vmatpush1.msra.mxu0 0.0
    %4587 = vmatprep.subr.mxu0 0.0
    %4588 = vmatpush1.msra.mxu0 0.0
    %4589 = vmatprep.subr.mxu0 0.0
    %4590 = vmatpush1.msra.mxu0 0.0
    %4591 = vmatprep.subr.mxu0 0.0
    %4592 = vmatpush1.msra.mxu0 0.0
    %4593 = vmatprep.subr.mxu0 0.0
    %4594 = vmatpush1.msra.mxu0 0.0
    %4595 = vmatprep.subr.mxu0 0.0
    %4596 = vmatpush1.msra.mxu0 0.0
    %4597 = vmatprep.subr.mxu0 0.0
    %4598 = vmatpush1.msra.mxu0 0.0
    %4599 = vmatprep.subr.mxu0 0.0
    %4600 = vmatpush1.msra.mxu0 0.0
    %4601 = vmatprep.mubr.f32.mxu0 0.0
    %4602 = vmatmul.mubr.f32.gmra.mrb[0].mxu0 %v4535
    %v4603 = vpop.f32.mrb[0].mxu0
    %v4604 = vadd.f32 0.0, %v4603
    %v4605 = vpop.f32.mrb[0].mxu0
    %v4606 = vadd.f32 0.0, %v4605
    %4607 = vdwg.mxu0
    %4608 = vmatprep.subr.mxu0 %v3747
    %4609 = vmatpush1.msra.mxu0 %v3746
    %4610 = vmatprep.subr.mxu0 0.0
    %4611 = vmatpush1.msra.mxu0 0.0
    %4612 = vmatprep.subr.mxu0 0.0
    %4613 = vmatpush1.msra.mxu0 0.0
    %4614 = vmatprep.subr.mxu0 0.0
    %4615 = vmatpush1.msra.mxu0 0.0
    %4616 = vmatprep.subr.mxu0 0.0
    %4617 = vmatpush1.msra.mxu0 0.0
    %4618 = vmatprep.subr.mxu0 0.0
    %4619 = vmatpush1.msra.mxu0 0.0
    %4620 = vmatprep.subr.mxu0 0.0
    %4621 = vmatpush1.msra.mxu0 0.0
    %4622 = vmatprep.subr.mxu0 0.0
    %4623 = vmatpush1.msra.mxu0 0.0
    %4624 = vmatprep.subr.mxu0 0.0
    %4625 = vmatpush1.msra.mxu0 0.0
    %4626 = vmatprep.subr.mxu0 0.0
    %4627 = vmatpush1.msra.mxu0 0.0
    %4628 = vmatprep.subr.mxu0 0.0
    %4629 = vmatpush1.msra.mxu0 0.0
    %4630 = vmatprep.subr.mxu0 0.0
    %4631 = vmatpush1.msra.mxu0 0.0
    %4632 = vmatprep.subr.mxu0 0.0
    %4633 = vmatpush1.msra.mxu0 0.0
    %4634 = vmatprep.subr.mxu0 0.0
    %4635 = vmatpush1.msra.mxu0 0.0
    %4636 = vmatprep.subr.mxu0 0.0
    %4637 = vmatpush1.msra.mxu0 0.0
    %4638 = vmatprep.subr.mxu0 0.0
    %4639 = vmatpush1.msra.mxu0 0.0
    %4640 = vmatprep.subr.mxu0 0.0
    %4641 = vmatpush1.msra.mxu0 0.0
    %4642 = vmatprep.subr.mxu0 0.0
    %4643 = vmatpush1.msra.mxu0 0.0
    %4644 = vmatprep.subr.mxu0 0.0
    %4645 = vmatpush1.msra.mxu0 0.0
    %4646 = vmatprep.subr.mxu0 0.0
    %4647 = vmatpush1.msra.mxu0 0.0
    %4648 = vmatprep.subr.mxu0 0.0
    %4649 = vmatpush1.msra.mxu0 0.0
    %4650 = vmatprep.subr.mxu0 0.0
    %4651 = vmatpush1.msra.mxu0 0.0
    %4652 = vmatprep.subr.mxu0 0.0
    %4653 = vmatpush1.msra.mxu0 0.0
    %4654 = vmatprep.subr.mxu0 0.0
    %4655 = vmatpush1.msra.mxu0 0.0
    %4656 = vmatprep.subr.mxu0 0.0
    %4657 = vmatpush1.msra.mxu0 0.0
    %4658 = vmatprep.subr.mxu0 0.0
    %4659 = vmatpush1.msra.mxu0 0.0
    %4660 = vmatprep.subr.mxu0 0.0
    %4661 = vmatpush1.msra.mxu0 0.0
    %4662 = vmatprep.subr.mxu0 0.0
    %4663 = vmatpush1.msra.mxu0 0.0
    %4664 = vmatprep.subr.mxu0 0.0
    %4665 = vmatpush1.msra.mxu0 0.0
    %4666 = vmatprep.subr.mxu0 0.0
    %4667 = vmatpush1.msra.mxu0 0.0
    %4668 = vmatprep.subr.mxu0 0.0
    %4669 = vmatpush1.msra.mxu0 0.0
    %4670 = vmatprep.subr.mxu0 0.0
    %4671 = vmatpush1.msra.mxu0 0.0
    %4672 = vmatprep.mubr.f32.mxu0 0.0
    %4673 = vmatmul.mubr.f32.gmra.mrb[0].mxu0 %v4535
    %v4674 = vpop.f32.mrb[0].mxu0
    %v4675 = vadd.f32 0.0, %v4674
    %v4676 = vpop.f32.mrb[0].mxu0
    %v4677 = vadd.f32 0.0, %v4676
    %4678 = vdwg.mxu0
    %v4679 = vadd.f32 %v4528, %v4604
    %v4680 = vadd.f32 %v4529, %v4606
    %v4681 = vadd.f32 %v4530, %v4675
    %v4682 = vadd.f32 %v4531, %v4677
    %4683 = vrot.lane.b32.xlu0 %v3744, 127
    %v4684 = vpop.permute.xlu0 %4683
    %4685 = vrot.lane.b32.xlu0 %v3745, 127
    %v4686 = vpop.permute.xlu0 %4685
    %4687 = vrot.lane.b32.xlu0 %v3746, 127
    %v4688 = vpop.permute.xlu0 %4687
    %4689 = vrot.lane.b32.xlu0 %v3747, 127
    %v4690 = vpop.permute.xlu0 %4689
    %v4691 = vsel %vm368, %v4688, %v4690
    %v4692 = vsel %vm368, %v4686, %v4688
    %v4693 = vsel %vm368, %v4684, %v4686
    %v4694 = vsel %vm368, %v4690, %v4684
    %v4695 = vld [vmem:[%s373] sm:$0xf]
    %v4697 = vlaneseq
    %v4698 = vshrl.u32 %v4697, 7
    %v4699 = vsub.s32 0, %v4698
    %v4700 = vrot.slane %v4695, %v4699
    %v4701 = vlaneseq
    %v4702 = vshrl.u32 %v4701, 7
    %v4703 = vsub.s32 1, %v4702
    %v4704 = vrot.slane %v4695, %v4703
    %v4705 = vlaneseq
    %v4706 = vshrl.u32 %v4705, 7
    %v4707 = vsub.s32 2, %v4706
    %v4708 = vrot.slane %v4695, %v4707
    %v4709 = vlaneseq
    %v4710 = vshrl.u32 %v4709, 7
    %v4711 = vsub.s32 3, %v4710
    %v4712 = vrot.slane %v4695, %v4711
    %v4717 = vmul.f32 %v4693, %v4700
    %v4718 = vmul.f32 %v4692, %v4704
    %v4719 = vmul.f32 %v4691, %v4708
    %v4720 = vmul.f32 %v4694, %v4712
    %s4721 = scalar_lea.vmem %s8, 20
    %v4722 = vld [vmem:[%s4721] sm:$0xf]
    %v4724 = vsel %vm693, %v4722, 0
    %4726 = vmatprep.subr.mxu0 %v4718
    %4727 = vmatpush1.msra.mxu0 %v4717
    %4728 = vmatprep.subr.mxu0 0.0
    %4729 = vmatpush1.msra.mxu0 0.0
    %4730 = vmatprep.subr.mxu0 0.0
    %4731 = vmatpush1.msra.mxu0 0.0
    %4732 = vmatprep.subr.mxu0 0.0
    %4733 = vmatpush1.msra.mxu0 0.0
    %4734 = vmatprep.subr.mxu0 0.0
    %4735 = vmatpush1.msra.mxu0 0.0
    %4736 = vmatprep.subr.mxu0 0.0
    %4737 = vmatpush1.msra.mxu0 0.0
    %4738 = vmatprep.subr.mxu0 0.0
    %4739 = vmatpush1.msra.mxu0 0.0
    %4740 = vmatprep.subr.mxu0 0.0
    %4741 = vmatpush1.msra.mxu0 0.0
    %4742 = vmatprep.subr.mxu0 0.0
    %4743 = vmatpush1.msra.mxu0 0.0
    %4744 = vmatprep.subr.mxu0 0.0
    %4745 = vmatpush1.msra.mxu0 0.0
    %4746 = vmatprep.subr.mxu0 0.0
    %4747 = vmatpush1.msra.mxu0 0.0
    %4748 = vmatprep.subr.mxu0 0.0
    %4749 = vmatpush1.msra.mxu0 0.0
    %4750 = vmatprep.subr.mxu0 0.0
    %4751 = vmatpush1.msra.mxu0 0.0
    %4752 = vmatprep.subr.mxu0 0.0
    %4753 = vmatpush1.msra.mxu0 0.0
    %4754 = vmatprep.subr.mxu0 0.0
    %4755 = vmatpush1.msra.mxu0 0.0
    %4756 = vmatprep.subr.mxu0 0.0
    %4757 = vmatpush1.msra.mxu0 0.0
    %4758 = vmatprep.subr.mxu0 0.0
    %4759 = vmatpush1.msra.mxu0 0.0
    %4760 = vmatprep.subr.mxu0 0.0
    %4761 = vmatpush1.msra.mxu0 0.0
    %4762 = vmatprep.subr.mxu0 0.0
    %4763 = vmatpush1.msra.mxu0 0.0
    %4764 = vmatprep.subr.mxu0 0.0
    %4765 = vmatpush1.msra.mxu0 0.0
    %4766 = vmatprep.subr.mxu0 0.0
    %4767 = vmatpush1.msra.mxu0 0.0
    %4768 = vmatprep.subr.mxu0 0.0
    %4769 = vmatpush1.msra.mxu0 0.0
    %4770 = vmatprep.subr.mxu0 0.0
    %4771 = vmatpush1.msra.mxu0 0.0
    %4772 = vmatprep.subr.mxu0 0.0
    %4773 = vmatpush1.msra.mxu0 0.0
    %4774 = vmatprep.subr.mxu0 0.0
    %4775 = vmatpush1.msra.mxu0 0.0
    %4776 = vmatprep.subr.mxu0 0.0
    %4777 = vmatpush1.msra.mxu0 0.0
    %4778 = vmatprep.subr.mxu0 0.0
    %4779 = vmatpush1.msra.mxu0 0.0
    %4780 = vmatprep.subr.mxu0 0.0
    %4781 = vmatpush1.msra.mxu0 0.0
    %4782 = vmatprep.subr.mxu0 0.0
    %4783 = vmatpush1.msra.mxu0 0.0
    %4784 = vmatprep.subr.mxu0 0.0
    %4785 = vmatpush1.msra.mxu0 0.0
    %4786 = vmatprep.subr.mxu0 0.0
    %4787 = vmatpush1.msra.mxu0 0.0
    %4788 = vmatprep.subr.mxu0 0.0
    %4789 = vmatpush1.msra.mxu0 0.0
    %4790 = vmatprep.mubr.f32.mxu0 0.0
    %4791 = vmatmul.mubr.f32.gmra.mrb[0].mxu0 %v4724
    %v4792 = vpop.f32.mrb[0].mxu0
    %v4793 = vadd.f32 0.0, %v4792
    %v4794 = vpop.f32.mrb[0].mxu0
    %v4795 = vadd.f32 0.0, %v4794
    %4796 = vdwg.mxu0
    %4797 = vmatprep.subr.mxu0 %v4720
    %4798 = vmatpush1.msra.mxu0 %v4719
    %4799 = vmatprep.subr.mxu0 0.0
    %4800 = vmatpush1.msra.mxu0 0.0
    %4801 = vmatprep.subr.mxu0 0.0
    %4802 = vmatpush1.msra.mxu0 0.0
    %4803 = vmatprep.subr.mxu0 0.0
    %4804 = vmatpush1.msra.mxu0 0.0
    %4805 = vmatprep.subr.mxu0 0.0
    %4806 = vmatpush1.msra.mxu0 0.0
    %4807 = vmatprep.subr.mxu0 0.0
    %4808 = vmatpush1.msra.mxu0 0.0
    %4809 = vmatprep.subr.mxu0 0.0
    %4810 = vmatpush1.msra.mxu0 0.0
    %4811 = vmatprep.subr.mxu0 0.0
    %4812 = vmatpush1.msra.mxu0 0.0
    %4813 = vmatprep.subr.mxu0 0.0
    %4814 = vmatpush1.msra.mxu0 0.0
    %4815 = vmatprep.subr.mxu0 0.0
    %4816 = vmatpush1.msra.mxu0 0.0
    %4817 = vmatprep.subr.mxu0 0.0
    %4818 = vmatpush1.msra.mxu0 0.0
    %4819 = vmatprep.subr.mxu0 0.0
    %4820 = vmatpush1.msra.mxu0 0.0
    %4821 = vmatprep.subr.mxu0 0.0
    %4822 = vmatpush1.msra.mxu0 0.0
    %4823 = vmatprep.subr.mxu0 0.0
    %4824 = vmatpush1.msra.mxu0 0.0
    %4825 = vmatprep.subr.mxu0 0.0
    %4826 = vmatpush1.msra.mxu0 0.0
    %4827 = vmatprep.subr.mxu0 0.0
    %4828 = vmatpush1.msra.mxu0 0.0
    %4829 = vmatprep.subr.mxu0 0.0
    %4830 = vmatpush1.msra.mxu0 0.0
    %4831 = vmatprep.subr.mxu0 0.0
    %4832 = vmatpush1.msra.mxu0 0.0
    %4833 = vmatprep.subr.mxu0 0.0
    %4834 = vmatpush1.msra.mxu0 0.0
    %4835 = vmatprep.subr.mxu0 0.0
    %4836 = vmatpush1.msra.mxu0 0.0
    %4837 = vmatprep.subr.mxu0 0.0
    %4838 = vmatpush1.msra.mxu0 0.0
    %4839 = vmatprep.subr.mxu0 0.0
    %4840 = vmatpush1.msra.mxu0 0.0
    %4841 = vmatprep.subr.mxu0 0.0
    %4842 = vmatpush1.msra.mxu0 0.0
    %4843 = vmatprep.subr.mxu0 0.0
    %4844 = vmatpush1.msra.mxu0 0.0
    %4845 = vmatprep.subr.mxu0 0.0
    %4846 = vmatpush1.msra.mxu0 0.0
    %4847 = vmatprep.subr.mxu0 0.0
    %4848 = vmatpush1.msra.mxu0 0.0
    %4849 = vmatprep.subr.mxu0 0.0
    %4850 = vmatpush1.msra.mxu0 0.0
    %4851 = vmatprep.subr.mxu0 0.0
    %4852 = vmatpush1.msra.mxu0 0.0
    %4853 = vmatprep.subr.mxu0 0.0
    %4854 = vmatpush1.msra.mxu0 0.0
    %4855 = vmatprep.subr.mxu0 0.0
    %4856 = vmatpush1.msra.mxu0 0.0
    %4857 = vmatprep.subr.mxu0 0.0
    %4858 = vmatpush1.msra.mxu0 0.0
    %4859 = vmatprep.subr.mxu0 0.0
    %4860 = vmatpush1.msra.mxu0 0.0
    %4861 = vmatprep.mubr.f32.mxu0 0.0
    %4862 = vmatmul.mubr.f32.gmra.mrb[0].mxu0 %v4724
    %v4863 = vpop.f32.mrb[0].mxu0
    %v4864 = vadd.f32 0.0, %v4863
    %v4865 = vpop.f32.mrb[0].mxu0
    %v4866 = vadd.f32 0.0, %v4865
    %4867 = vdwg.mxu0
    %v4868 = vadd.f32 %v4679, %v4793
    %v4869 = vadd.f32 %v4680, %v4795
    %v4870 = vadd.f32 %v4681, %v4864
    %v4871 = vadd.f32 %v4682, %v4866
    %4872 = vrot.lane.b32.xlu0 %v3744, 113
    %v4873 = vpop.permute.xlu0 %4872
    %4874 = vrot.lane.b32.xlu0 %v3745, 113
    %v4875 = vpop.permute.xlu0 %4874
    %4876 = vrot.lane.b32.xlu0 %v3746, 113
    %v4877 = vpop.permute.xlu0 %4876
    %4878 = vrot.lane.b32.xlu0 %v3747, 113
    %v4879 = vpop.permute.xlu0 %4878
    %v4880 = vsel %vm439, %v4877, %v4879
    %v4881 = vsel %vm439, %v4875, %v4877
    %v4882 = vsel %vm439, %v4873, %v4875
    %v4883 = vsel %vm439, %v4879, %v4873
    %v4884 = vld [vmem:[%s444] sm:$0xf]
    %v4886 = vlaneseq
    %v4887 = vshrl.u32 %v4886, 7
    %v4888 = vsub.s32 0, %v4887
    %v4889 = vrot.slane %v4884, %v4888
    %v4890 = vlaneseq
    %v4891 = vshrl.u32 %v4890, 7
    %v4892 = vsub.s32 1, %v4891
    %v4893 = vrot.slane %v4884, %v4892
    %v4894 = vlaneseq
    %v4895 = vshrl.u32 %v4894, 7
    %v4896 = vsub.s32 2, %v4895
    %v4897 = vrot.slane %v4884, %v4896
    %v4898 = vlaneseq
    %v4899 = vshrl.u32 %v4898, 7
    %v4900 = vsub.s32 3, %v4899
    %v4901 = vrot.slane %v4884, %v4900
    %v4906 = vmul.f32 %v4882, %v4889
    %v4907 = vmul.f32 %v4881, %v4893
    %v4908 = vmul.f32 %v4880, %v4897
    %v4909 = vmul.f32 %v4883, %v4901
    %s4910 = scalar_lea.vmem %s8, 24
    %v4911 = vld [vmem:[%s4910] sm:$0xf]
    %v4913 = vsel %vm693, %v4911, 0
    %4915 = vmatprep.subr.mxu0 %v4907
    %4916 = vmatpush1.msra.mxu0 %v4906
    %4917 = vmatprep.subr.mxu0 0.0
    %4918 = vmatpush1.msra.mxu0 0.0
    %4919 = vmatprep.subr.mxu0 0.0
    %4920 = vmatpush1.msra.mxu0 0.0
    %4921 = vmatprep.subr.mxu0 0.0
    %4922 = vmatpush1.msra.mxu0 0.0
    %4923 = vmatprep.subr.mxu0 0.0
    %4924 = vmatpush1.msra.mxu0 0.0
    %4925 = vmatprep.subr.mxu0 0.0
    %4926 = vmatpush1.msra.mxu0 0.0
    %4927 = vmatprep.subr.mxu0 0.0
    %4928 = vmatpush1.msra.mxu0 0.0
    %4929 = vmatprep.subr.mxu0 0.0
    %4930 = vmatpush1.msra.mxu0 0.0
    %4931 = vmatprep.subr.mxu0 0.0
    %4932 = vmatpush1.msra.mxu0 0.0
    %4933 = vmatprep.subr.mxu0 0.0
    %4934 = vmatpush1.msra.mxu0 0.0
    %4935 = vmatprep.subr.mxu0 0.0
    %4936 = vmatpush1.msra.mxu0 0.0
    %4937 = vmatprep.subr.mxu0 0.0
    %4938 = vmatpush1.msra.mxu0 0.0
    %4939 = vmatprep.subr.mxu0 0.0
    %4940 = vmatpush1.msra.mxu0 0.0
    %4941 = vmatprep.subr.mxu0 0.0
    %4942 = vmatpush1.msra.mxu0 0.0
    %4943 = vmatprep.subr.mxu0 0.0
    %4944 = vmatpush1.msra.mxu0 0.0
    %4945 = vmatprep.subr.mxu0 0.0
    %4946 = vmatpush1.msra.mxu0 0.0
    %4947 = vmatprep.subr.mxu0 0.0
    %4948 = vmatpush1.msra.mxu0 0.0
    %4949 = vmatprep.subr.mxu0 0.0
    %4950 = vmatpush1.msra.mxu0 0.0
    %4951 = vmatprep.subr.mxu0 0.0
    %4952 = vmatpush1.msra.mxu0 0.0
    %4953 = vmatprep.subr.mxu0 0.0
    %4954 = vmatpush1.msra.mxu0 0.0
    %4955 = vmatprep.subr.mxu0 0.0
    %4956 = vmatpush1.msra.mxu0 0.0
    %4957 = vmatprep.subr.mxu0 0.0
    %4958 = vmatpush1.msra.mxu0 0.0
    %4959 = vmatprep.subr.mxu0 0.0
    %4960 = vmatpush1.msra.mxu0 0.0
    %4961 = vmatprep.subr.mxu0 0.0
    %4962 = vmatpush1.msra.mxu0 0.0
    %4963 = vmatprep.subr.mxu0 0.0
    %4964 = vmatpush1.msra.mxu0 0.0
    %4965 = vmatprep.subr.mxu0 0.0
    %4966 = vmatpush1.msra.mxu0 0.0
    %4967 = vmatprep.subr.mxu0 0.0
    %4968 = vmatpush1.msra.mxu0 0.0
    %4969 = vmatprep.subr.mxu0 0.0
    %4970 = vmatpush1.msra.mxu0 0.0
    %4971 = vmatprep.subr.mxu0 0.0
    %4972 = vmatpush1.msra.mxu0 0.0
    %4973 = vmatprep.subr.mxu0 0.0
    %4974 = vmatpush1.msra.mxu0 0.0
    %4975 = vmatprep.subr.mxu0 0.0
    %4976 = vmatpush1.msra.mxu0 0.0
    %4977 = vmatprep.subr.mxu0 0.0
    %4978 = vmatpush1.msra.mxu0 0.0
    %4979 = vmatprep.mubr.f32.mxu0 0.0
    %4980 = vmatmul.mubr.f32.gmra.mrb[0].mxu0 %v4913
    %v4981 = vpop.f32.mrb[0].mxu0
    %v4982 = vadd.f32 0.0, %v4981
    %v4983 = vpop.f32.mrb[0].mxu0
    %v4984 = vadd.f32 0.0, %v4983
    %4985 = vdwg.mxu0
    %4986 = vmatprep.subr.mxu0 %v4909
    %4987 = vmatpush1.msra.mxu0 %v4908
    %4988 = vmatprep.subr.mxu0 0.0
    %4989 = vmatpush1.msra.mxu0 0.0
    %4990 = vmatprep.subr.mxu0 0.0
    %4991 = vmatpush1.msra.mxu0 0.0
    %4992 = vmatprep.subr.mxu0 0.0
    %4993 = vmatpush1.msra.mxu0 0.0
    %4994 = vmatprep.subr.mxu0 0.0
    %4995 = vmatpush1.msra.mxu0 0.0
    %4996 = vmatprep.subr.mxu0 0.0
    %4997 = vmatpush1.msra.mxu0 0.0
    %4998 = vmatprep.subr.mxu0 0.0
    %4999 = vmatpush1.msra.mxu0 0.0
    %5000 = vmatprep.subr.mxu0 0.0
    %5001 = vmatpush1.msra.mxu0 0.0
    %5002 = vmatprep.subr.mxu0 0.0
    %5003 = vmatpush1.msra.mxu0 0.0
    %5004 = vmatprep.subr.mxu0 0.0
    %5005 = vmatpush1.msra.mxu0 0.0
    %5006 = vmatprep.subr.mxu0 0.0
    %5007 = vmatpush1.msra.mxu0 0.0
    %5008 = vmatprep.subr.mxu0 0.0
    %5009 = vmatpush1.msra.mxu0 0.0
    %5010 = vmatprep.subr.mxu0 0.0
    %5011 = vmatpush1.msra.mxu0 0.0
    %5012 = vmatprep.subr.mxu0 0.0
    %5013 = vmatpush1.msra.mxu0 0.0
    %5014 = vmatprep.subr.mxu0 0.0
    %5015 = vmatpush1.msra.mxu0 0.0
    %5016 = vmatprep.subr.mxu0 0.0
    %5017 = vmatpush1.msra.mxu0 0.0
    %5018 = vmatprep.subr.mxu0 0.0
    %5019 = vmatpush1.msra.mxu0 0.0
    %5020 = vmatprep.subr.mxu0 0.0
    %5021 = vmatpush1.msra.mxu0 0.0
    %5022 = vmatprep.subr.mxu0 0.0
    %5023 = vmatpush1.msra.mxu0 0.0
    %5024 = vmatprep.subr.mxu0 0.0
    %5025 = vmatpush1.msra.mxu0 0.0
    %5026 = vmatprep.subr.mxu0 0.0
    %5027 = vmatpush1.msra.mxu0 0.0
    %5028 = vmatprep.subr.mxu0 0.0
    %5029 = vmatpush1.msra.mxu0 0.0
    %5030 = vmatprep.subr.mxu0 0.0
    %5031 = vmatpush1.msra.mxu0 0.0
    %5032 = vmatprep.subr.mxu0 0.0
    %5033 = vmatpush1.msra.mxu0 0.0
    %5034 = vmatprep.subr.mxu0 0.0
    %5035 = vmatpush1.msra.mxu0 0.0
    %5036 = vmatprep.subr.mxu0 0.0
    %5037 = vmatpush1.msra.mxu0 0.0
    %5038 = vmatprep.subr.mxu0 0.0
    %5039 = vmatpush1.msra.mxu0 0.0
    %5040 = vmatprep.subr.mxu0 0.0
    %5041 = vmatpush1.msra.mxu0 0.0
    %5042 = vmatprep.subr.mxu0 0.0
    %5043 = vmatpush1.msra.mxu0 0.0
    %5044 = vmatprep.subr.mxu0 0.0
    %5045 = vmatpush1.msra.mxu0 0.0
    %5046 = vmatprep.subr.mxu0 0.0
    %5047 = vmatpush1.msra.mxu0 0.0
    %5048 = vmatprep.subr.mxu0 0.0
    %5049 = vmatpush1.msra.mxu0 0.0
    %5050 = vmatprep.mubr.f32.mxu0 0.0
    %5051 = vmatmul.mubr.f32.gmra.mrb[0].mxu0 %v4913
    %v5052 = vpop.f32.mrb[0].mxu0
    %v5053 = vadd.f32 0.0, %v5052
    %v5054 = vpop.f32.mrb[0].mxu0
    %v5055 = vadd.f32 0.0, %v5054
    %5056 = vdwg.mxu0
    %v5057 = vadd.f32 %v4868, %v4982
    %v5058 = vadd.f32 %v4869, %v4984
    %v5059 = vadd.f32 %v4870, %v5053
    %v5060 = vadd.f32 %v4871, %v5055
    %5061 = vrot.lane.b32.xlu0 %v3744, 112
    %v5062 = vpop.permute.xlu0 %5061
    %5063 = vrot.lane.b32.xlu0 %v3745, 112
    %v5064 = vpop.permute.xlu0 %5063
    %5065 = vrot.lane.b32.xlu0 %v3746, 112
    %v5066 = vpop.permute.xlu0 %5065
    %5067 = vrot.lane.b32.xlu0 %v3747, 112
    %v5068 = vpop.permute.xlu0 %5067
    %v5069 = vsel %vm510, %v5066, %v5068
    %v5070 = vsel %vm510, %v5064, %v5066
    %v5071 = vsel %vm510, %v5062, %v5064
    %v5072 = vsel %vm510, %v5068, %v5062
    %v5073 = vld [vmem:[%s515] sm:$0xf]
    %v5075 = vlaneseq
    %v5076 = vshrl.u32 %v5075, 7
    %v5077 = vsub.s32 0, %v5076
    %v5078 = vrot.slane %v5073, %v5077
    %v5079 = vlaneseq
    %v5080 = vshrl.u32 %v5079, 7
    %v5081 = vsub.s32 1, %v5080
    %v5082 = vrot.slane %v5073, %v5081
    %v5083 = vlaneseq
    %v5084 = vshrl.u32 %v5083, 7
    %v5085 = vsub.s32 2, %v5084
    %v5086 = vrot.slane %v5073, %v5085
    %v5087 = vlaneseq
    %v5088 = vshrl.u32 %v5087, 7
    %v5089 = vsub.s32 3, %v5088
    %v5090 = vrot.slane %v5073, %v5089
    %v5095 = vmul.f32 %v5071, %v5078
    %v5096 = vmul.f32 %v5070, %v5082
    %v5097 = vmul.f32 %v5069, %v5086
    %v5098 = vmul.f32 %v5072, %v5090
    %s5099 = scalar_lea.vmem %s8, 28
    %v5100 = vld [vmem:[%s5099] sm:$0xf]
    %v5102 = vsel %vm693, %v5100, 0
    %5104 = vmatprep.subr.mxu0 %v5096
    %5105 = vmatpush1.msra.mxu0 %v5095
    %5106 = vmatprep.subr.mxu0 0.0
    %5107 = vmatpush1.msra.mxu0 0.0
    %5108 = vmatprep.subr.mxu0 0.0
    %5109 = vmatpush1.msra.mxu0 0.0
    %5110 = vmatprep.subr.mxu0 0.0
    %5111 = vmatpush1.msra.mxu0 0.0
    %5112 = vmatprep.subr.mxu0 0.0
    %5113 = vmatpush1.msra.mxu0 0.0
    %5114 = vmatprep.subr.mxu0 0.0
    %5115 = vmatpush1.msra.mxu0 0.0
    %5116 = vmatprep.subr.mxu0 0.0
    %5117 = vmatpush1.msra.mxu0 0.0
    %5118 = vmatprep.subr.mxu0 0.0
    %5119 = vmatpush1.msra.mxu0 0.0
    %5120 = vmatprep.subr.mxu0 0.0
    %5121 = vmatpush1.msra.mxu0 0.0
    %5122 = vmatprep.subr.mxu0 0.0
    %5123 = vmatpush1.msra.mxu0 0.0
    %5124 = vmatprep.subr.mxu0 0.0
    %5125 = vmatpush1.msra.mxu0 0.0
    %5126 = vmatprep.subr.mxu0 0.0
    %5127 = vmatpush1.msra.mxu0 0.0
    %5128 = vmatprep.subr.mxu0 0.0
    %5129 = vmatpush1.msra.mxu0 0.0
    %5130 = vmatprep.subr.mxu0 0.0
    %5131 = vmatpush1.msra.mxu0 0.0
    %5132 = vmatprep.subr.mxu0 0.0
    %5133 = vmatpush1.msra.mxu0 0.0
    %5134 = vmatprep.subr.mxu0 0.0
    %5135 = vmatpush1.msra.mxu0 0.0
    %5136 = vmatprep.subr.mxu0 0.0
    %5137 = vmatpush1.msra.mxu0 0.0
    %5138 = vmatprep.subr.mxu0 0.0
    %5139 = vmatpush1.msra.mxu0 0.0
    %5140 = vmatprep.subr.mxu0 0.0
    %5141 = vmatpush1.msra.mxu0 0.0
    %5142 = vmatprep.subr.mxu0 0.0
    %5143 = vmatpush1.msra.mxu0 0.0
    %5144 = vmatprep.subr.mxu0 0.0
    %5145 = vmatpush1.msra.mxu0 0.0
    %5146 = vmatprep.subr.mxu0 0.0
    %5147 = vmatpush1.msra.mxu0 0.0
    %5148 = vmatprep.subr.mxu0 0.0
    %5149 = vmatpush1.msra.mxu0 0.0
    %5150 = vmatprep.subr.mxu0 0.0
    %5151 = vmatpush1.msra.mxu0 0.0
    %5152 = vmatprep.subr.mxu0 0.0
    %5153 = vmatpush1.msra.mxu0 0.0
    %5154 = vmatprep.subr.mxu0 0.0
    %5155 = vmatpush1.msra.mxu0 0.0
    %5156 = vmatprep.subr.mxu0 0.0
    %5157 = vmatpush1.msra.mxu0 0.0
    %5158 = vmatprep.subr.mxu0 0.0
    %5159 = vmatpush1.msra.mxu0 0.0
    %5160 = vmatprep.subr.mxu0 0.0
    %5161 = vmatpush1.msra.mxu0 0.0
    %5162 = vmatprep.subr.mxu0 0.0
    %5163 = vmatpush1.msra.mxu0 0.0
    %5164 = vmatprep.subr.mxu0 0.0
    %5165 = vmatpush1.msra.mxu0 0.0
    %5166 = vmatprep.subr.mxu0 0.0
    %5167 = vmatpush1.msra.mxu0 0.0
    %5168 = vmatprep.mubr.f32.mxu0 0.0
    %5169 = vmatmul.mubr.f32.gmra.mrb[0].mxu0 %v5102
    %v5170 = vpop.f32.mrb[0].mxu0
    %v5171 = vadd.f32 0.0, %v5170
    %v5172 = vpop.f32.mrb[0].mxu0
    %v5173 = vadd.f32 0.0, %v5172
    %5174 = vdwg.mxu0
    %5175 = vmatprep.subr.mxu0 %v5098
    %5176 = vmatpush1.msra.mxu0 %v5097
    %5177 = vmatprep.subr.mxu0 0.0
    %5178 = vmatpush1.msra.mxu0 0.0
    %5179 = vmatprep.subr.mxu0 0.0
    %5180 = vmatpush1.msra.mxu0 0.0
    %5181 = vmatprep.subr.mxu0 0.0
    %5182 = vmatpush1.msra.mxu0 0.0
    %5183 = vmatprep.subr.mxu0 0.0
    %5184 = vmatpush1.msra.mxu0 0.0
    %5185 = vmatprep.subr.mxu0 0.0
    %5186 = vmatpush1.msra.mxu0 0.0
    %5187 = vmatprep.subr.mxu0 0.0
    %5188 = vmatpush1.msra.mxu0 0.0
    %5189 = vmatprep.subr.mxu0 0.0
    %5190 = vmatpush1.msra.mxu0 0.0
    %5191 = vmatprep.subr.mxu0 0.0
    %5192 = vmatpush1.msra.mxu0 0.0
    %5193 = vmatprep.subr.mxu0 0.0
    %5194 = vmatpush1.msra.mxu0 0.0
    %5195 = vmatprep.subr.mxu0 0.0
    %5196 = vmatpush1.msra.mxu0 0.0
    %5197 = vmatprep.subr.mxu0 0.0
    %5198 = vmatpush1.msra.mxu0 0.0
    %5199 = vmatprep.subr.mxu0 0.0
    %5200 = vmatpush1.msra.mxu0 0.0
    %5201 = vmatprep.subr.mxu0 0.0
    %5202 = vmatpush1.msra.mxu0 0.0
    %5203 = vmatprep.subr.mxu0 0.0
    %5204 = vmatpush1.msra.mxu0 0.0
    %5205 = vmatprep.subr.mxu0 0.0
    %5206 = vmatpush1.msra.mxu0 0.0
    %5207 = vmatprep.subr.mxu0 0.0
    %5208 = vmatpush1.msra.mxu0 0.0
    %5209 = vmatprep.subr.mxu0 0.0
    %5210 = vmatpush1.msra.mxu0 0.0
    %5211 = vmatprep.subr.mxu0 0.0
    %5212 = vmatpush1.msra.mxu0 0.0
    %5213 = vmatprep.subr.mxu0 0.0
    %5214 = vmatpush1.msra.mxu0 0.0
    %5215 = vmatprep.subr.mxu0 0.0
    %5216 = vmatpush1.msra.mxu0 0.0
    %5217 = vmatprep.subr.mxu0 0.0
    %5218 = vmatpush1.msra.mxu0 0.0
    %5219 = vmatprep.subr.mxu0 0.0
    %5220 = vmatpush1.msra.mxu0 0.0
    %5221 = vmatprep.subr.mxu0 0.0
    %5222 = vmatpush1.msra.mxu0 0.0
    %5223 = vmatprep.subr.mxu0 0.0
    %5224 = vmatpush1.msra.mxu0 0.0
    %5225 = vmatprep.subr.mxu0 0.0
    %5226 = vmatpush1.msra.mxu0 0.0
    %5227 = vmatprep.subr.mxu0 0.0
    %5228 = vmatpush1.msra.mxu0 0.0
    %5229 = vmatprep.subr.mxu0 0.0
    %5230 = vmatpush1.msra.mxu0 0.0
    %5231 = vmatprep.subr.mxu0 0.0
    %5232 = vmatpush1.msra.mxu0 0.0
    %5233 = vmatprep.subr.mxu0 0.0
    %5234 = vmatpush1.msra.mxu0 0.0
    %5235 = vmatprep.subr.mxu0 0.0
    %5236 = vmatpush1.msra.mxu0 0.0
    %5237 = vmatprep.subr.mxu0 0.0
    %5238 = vmatpush1.msra.mxu0 0.0
    %5239 = vmatprep.mubr.f32.mxu0 0.0
    %5240 = vmatmul.mubr.f32.gmra.mrb[0].mxu0 %v5102
    %v5241 = vpop.f32.mrb[0].mxu0
    %v5242 = vadd.f32 0.0, %v5241
    %v5243 = vpop.f32.mrb[0].mxu0
    %v5244 = vadd.f32 0.0, %v5243
    %5245 = vdwg.mxu0
    %v5246 = vadd.f32 %v5057, %v5171
    %v5247 = vadd.f32 %v5058, %v5173
    %v5248 = vadd.f32 %v5059, %v5242
    %v5249 = vadd.f32 %v5060, %v5244
    %5250 = vrot.lane.b32.xlu0 %v3744, 111
    %v5251 = vpop.permute.xlu0 %5250
    %5252 = vrot.lane.b32.xlu0 %v3745, 111
    %v5253 = vpop.permute.xlu0 %5252
    %5254 = vrot.lane.b32.xlu0 %v3746, 111
    %v5255 = vpop.permute.xlu0 %5254
    %5256 = vrot.lane.b32.xlu0 %v3747, 111
    %v5257 = vpop.permute.xlu0 %5256
    %v5258 = vsel %vm581, %v5255, %v5257
    %v5259 = vsel %vm581, %v5253, %v5255
    %v5260 = vsel %vm581, %v5251, %v5253
    %v5261 = vsel %vm581, %v5257, %v5251
    %v5262 = vld [vmem:[%s586] sm:$0xf]
    %v5264 = vlaneseq
    %v5265 = vshrl.u32 %v5264, 7
    %v5266 = vsub.s32 0, %v5265
    %v5267 = vrot.slane %v5262, %v5266
    %v5268 = vlaneseq
    %v5269 = vshrl.u32 %v5268, 7
    %v5270 = vsub.s32 1, %v5269
    %v5271 = vrot.slane %v5262, %v5270
    %v5272 = vlaneseq
    %v5273 = vshrl.u32 %v5272, 7
    %v5274 = vsub.s32 2, %v5273
    %v5275 = vrot.slane %v5262, %v5274
    %v5276 = vlaneseq
    %v5277 = vshrl.u32 %v5276, 7
    %v5278 = vsub.s32 3, %v5277
    %v5279 = vrot.slane %v5262, %v5278
    %v5284 = vmul.f32 %v5260, %v5267
    %v5285 = vmul.f32 %v5259, %v5271
    %v5286 = vmul.f32 %v5258, %v5275
    %v5287 = vmul.f32 %v5261, %v5279
    %s5288 = scalar_lea.vmem %s8, 32
    %v5289 = vld [vmem:[%s5288] sm:$0xf]
    %v5291 = vsel %vm693, %v5289, 0
    %5293 = vmatprep.subr.mxu0 %v5285
    %5294 = vmatpush1.msra.mxu0 %v5284
    %5295 = vmatprep.subr.mxu0 0.0
    %5296 = vmatpush1.msra.mxu0 0.0
    %5297 = vmatprep.subr.mxu0 0.0
    %5298 = vmatpush1.msra.mxu0 0.0
    %5299 = vmatprep.subr.mxu0 0.0
    %5300 = vmatpush1.msra.mxu0 0.0
    %5301 = vmatprep.subr.mxu0 0.0
    %5302 = vmatpush1.msra.mxu0 0.0
    %5303 = vmatprep.subr.mxu0 0.0
    %5304 = vmatpush1.msra.mxu0 0.0
    %5305 = vmatprep.subr.mxu0 0.0
    %5306 = vmatpush1.msra.mxu0 0.0
    %5307 = vmatprep.subr.mxu0 0.0
    %5308 = vmatpush1.msra.mxu0 0.0
    %5309 = vmatprep.subr.mxu0 0.0
    %5310 = vmatpush1.msra.mxu0 0.0
    %5311 = vmatprep.subr.mxu0 0.0
    %5312 = vmatpush1.msra.mxu0 0.0
    %5313 = vmatprep.subr.mxu0 0.0
    %5314 = vmatpush1.msra.mxu0 0.0
    %5315 = vmatprep.subr.mxu0 0.0
    %5316 = vmatpush1.msra.mxu0 0.0
    %5317 = vmatprep.subr.mxu0 0.0
    %5318 = vmatpush1.msra.mxu0 0.0
    %5319 = vmatprep.subr.mxu0 0.0
    %5320 = vmatpush1.msra.mxu0 0.0
    %5321 = vmatprep.subr.mxu0 0.0
    %5322 = vmatpush1.msra.mxu0 0.0
    %5323 = vmatprep.subr.mxu0 0.0
    %5324 = vmatpush1.msra.mxu0 0.0
    %5325 = vmatprep.subr.mxu0 0.0
    %5326 = vmatpush1.msra.mxu0 0.0
    %5327 = vmatprep.subr.mxu0 0.0
    %5328 = vmatpush1.msra.mxu0 0.0
    %5329 = vmatprep.subr.mxu0 0.0
    %5330 = vmatpush1.msra.mxu0 0.0
    %5331 = vmatprep.subr.mxu0 0.0
    %5332 = vmatpush1.msra.mxu0 0.0
    %5333 = vmatprep.subr.mxu0 0.0
    %5334 = vmatpush1.msra.mxu0 0.0
    %5335 = vmatprep.subr.mxu0 0.0
    %5336 = vmatpush1.msra.mxu0 0.0
    %5337 = vmatprep.subr.mxu0 0.0
    %5338 = vmatpush1.msra.mxu0 0.0
    %5339 = vmatprep.subr.mxu0 0.0
    %5340 = vmatpush1.msra.mxu0 0.0
    %5341 = vmatprep.subr.mxu0 0.0
    %5342 = vmatpush1.msra.mxu0 0.0
    %5343 = vmatprep.subr.mxu0 0.0
    %5344 = vmatpush1.msra.mxu0 0.0
    %5345 = vmatprep.subr.mxu0 0.0
    %5346 = vmatpush1.msra.mxu0 0.0
    %5347 = vmatprep.subr.mxu0 0.0
    %5348 = vmatpush1.msra.mxu0 0.0
    %5349 = vmatprep.subr.mxu0 0.0
    %5350 = vmatpush1.msra.mxu0 0.0
    %5351 = vmatprep.subr.mxu0 0.0
    %5352 = vmatpush1.msra.mxu0 0.0
    %5353 = vmatprep.subr.mxu0 0.0
    %5354 = vmatpush1.msra.mxu0 0.0
    %5355 = vmatprep.subr.mxu0 0.0
    %5356 = vmatpush1.msra.mxu0 0.0
    %5357 = vmatprep.mubr.f32.mxu0 0.0
    %5358 = vmatmul.mubr.f32.gmra.mrb[0].mxu0 %v5291
    %v5359 = vpop.f32.mrb[0].mxu0
    %v5360 = vadd.f32 0.0, %v5359
    %v5361 = vpop.f32.mrb[0].mxu0
    %v5362 = vadd.f32 0.0, %v5361
    %5363 = vdwg.mxu0
    %5364 = vmatprep.subr.mxu0 %v5287
    %5365 = vmatpush1.msra.mxu0 %v5286
    %5366 = vmatprep.subr.mxu0 0.0
    %5367 = vmatpush1.msra.mxu0 0.0
    %5368 = vmatprep.subr.mxu0 0.0
    %5369 = vmatpush1.msra.mxu0 0.0
    %5370 = vmatprep.subr.mxu0 0.0
    %5371 = vmatpush1.msra.mxu0 0.0
    %5372 = vmatprep.subr.mxu0 0.0
    %5373 = vmatpush1.msra.mxu0 0.0
    %5374 = vmatprep.subr.mxu0 0.0
    %5375 = vmatpush1.msra.mxu0 0.0
    %5376 = vmatprep.subr.mxu0 0.0
    %5377 = vmatpush1.msra.mxu0 0.0
    %5378 = vmatprep.subr.mxu0 0.0
    %5379 = vmatpush1.msra.mxu0 0.0
    %5380 = vmatprep.subr.mxu0 0.0
    %5381 = vmatpush1.msra.mxu0 0.0
    %5382 = vmatprep.subr.mxu0 0.0
    %5383 = vmatpush1.msra.mxu0 0.0
    %5384 = vmatprep.subr.mxu0 0.0
    %5385 = vmatpush1.msra.mxu0 0.0
    %5386 = vmatprep.subr.mxu0 0.0
    %5387 = vmatpush1.msra.mxu0 0.0
    %5388 = vmatprep.subr.mxu0 0.0
    %5389 = vmatpush1.msra.mxu0 0.0
    %5390 = vmatprep.subr.mxu0 0.0
    %5391 = vmatpush1.msra.mxu0 0.0
    %5392 = vmatprep.subr.mxu0 0.0
    %5393 = vmatpush1.msra.mxu0 0.0
    %5394 = vmatprep.subr.mxu0 0.0
    %5395 = vmatpush1.msra.mxu0 0.0
    %5396 = vmatprep.subr.mxu0 0.0
    %5397 = vmatpush1.msra.mxu0 0.0
    %5398 = vmatprep.subr.mxu0 0.0
    %5399 = vmatpush1.msra.mxu0 0.0
    %5400 = vmatprep.subr.mxu0 0.0
    %5401 = vmatpush1.msra.mxu0 0.0
    %5402 = vmatprep.subr.mxu0 0.0
    %5403 = vmatpush1.msra.mxu0 0.0
    %5404 = vmatprep.subr.mxu0 0.0
    %5405 = vmatpush1.msra.mxu0 0.0
    %5406 = vmatprep.subr.mxu0 0.0
    %5407 = vmatpush1.msra.mxu0 0.0
    %5408 = vmatprep.subr.mxu0 0.0
    %5409 = vmatpush1.msra.mxu0 0.0
    %5410 = vmatprep.subr.mxu0 0.0
    %5411 = vmatpush1.msra.mxu0 0.0
    %5412 = vmatprep.subr.mxu0 0.0
    %5413 = vmatpush1.msra.mxu0 0.0
    %5414 = vmatprep.subr.mxu0 0.0
    %5415 = vmatpush1.msra.mxu0 0.0
    %5416 = vmatprep.subr.mxu0 0.0
    %5417 = vmatpush1.msra.mxu0 0.0
    %5418 = vmatprep.subr.mxu0 0.0
    %5419 = vmatpush1.msra.mxu0 0.0
    %5420 = vmatprep.subr.mxu0 0.0
    %5421 = vmatpush1.msra.mxu0 0.0
    %5422 = vmatprep.subr.mxu0 0.0
    %5423 = vmatpush1.msra.mxu0 0.0
    %5424 = vmatprep.subr.mxu0 0.0
    %5425 = vmatpush1.msra.mxu0 0.0
    %5426 = vmatprep.subr.mxu0 0.0
    %5427 = vmatpush1.msra.mxu0 0.0
    %5428 = vmatprep.mubr.f32.mxu0 0.0
    %5429 = vmatmul.mubr.f32.gmra.mrb[0].mxu0 %v5291
    %v5430 = vpop.f32.mrb[0].mxu0
    %v5431 = vadd.f32 0.0, %v5430
    %v5432 = vpop.f32.mrb[0].mxu0
    %v5433 = vadd.f32 0.0, %v5432
    %5434 = vdwg.mxu0
    %v5435 = vadd.f32 %v5246, %v5360
    %v5436 = vadd.f32 %v5247, %v5362
    %v5437 = vadd.f32 %v5248, %v5431
    %v5438 = vadd.f32 %v5249, %v5433
    %5440 = vset.pattern.permute.xlu0 0
    %5441 = vperm.xlu0 %5440, %v3784
    %v5442 = vpop.permute.xlu0 %5441
    %v5444 = vadd.f32 %v5435, %v5442
    %v5445 = vadd.f32 %v5436, %v5442
    %v5446 = vadd.f32 %v5437, %v5442
    %v5447 = vadd.f32 %v5438, %v5442
    %v5452 = vcombine.low %v5444, %v5445
    %v5453 = vcombine.low %v5446, %v5447
    %5456 = vst [vmem:[%s10] sm:$0xff] %v5452
    %5457 = vst [vmem:[%s10 + $0x8] sm:$0xff] %v5453
    // Predicated region
    $region42: #{frankenstein_forward.1} parent=1 // pred_check
      _
    $region43: #{frankenstein_forward.1} parent=1 // pred_check_branch
      %5459 = sbr.rel (0) target = $region45
    $region44: #{frankenstein_forward.1} parent=1 // pred_region
      _
    $region45: #{frankenstein_forward.1} parent=1 // pred_fallthru
      _
    // Predicated region
    $region46: #{frankenstein_forward.1} parent=1 // pred_check
      _
    $region47: #{frankenstein_forward.1} parent=1 // pred_check_branch
      %5461 = sbr.rel (0) target = $region49
    $region48: #{frankenstein_forward.1} parent=1 // pred_region
      %s5463 = ssub.s32 16, 16
      %5464 = vsyncadd [#allocation3], %s5463
      %s5466 = sshll.u32 [#allocation2], 4
      %s5467 = int_to_ptr.vmem [resolvable:$true] %s5466
      %5469 = dma.vmem_to_hbm [thread:$0]  %s5467, 16, %s11, [#allocation3]
    $region49: #{frankenstein_forward.1} parent=1 // pred_fallthru
      _
    // Predicated region
    $region50: #{frankenstein_forward.1} parent=1 // pred_check
      _
    $region51: #{frankenstein_forward.1} parent=1 // pred_check_branch
      %5471 = sbr.rel (0) target = $region53
    $region52: #{frankenstein_forward.1} parent=1 // pred_region
      _
    $region53: #{frankenstein_forward.1} parent=1 // pred_fallthru
      _
    // Predicated region
    $region54: #{frankenstein_forward.1} parent=1 // pred_check
      _
    $region55: #{frankenstein_forward.1} parent=1 // pred_check_branch
      %5473 = sbr.rel (0) target = $region57
    $region56: #{frankenstein_forward.1} parent=1 // pred_region
      %5474 = dma.done [#allocation3], 16
    $region57: #{frankenstein_forward.1} parent=1 // pred_fallthru
      _
    %5475 = vsyncpa [#allocation3], 1

</llo_original>
